<compile_context>
chip_gen: v7x
topology: tpu7x:2x2x1
jax: 0.10.0
libtpu: 0.0.40
codegen_flags: <defaults>
</compile_context>

<pallas_src>
import jax
import jax.numpy as jnp
from jax.experimental import pallas as pl
from jax.experimental.pallas import tpu as pltpu

# ---- tiny RoBERTa config (consistent with the module's forward) -------------
B, S, H = 2, 8, 32          # batch, seq_len, hidden_size
NH = 2                      # attention heads
DH = H // NH                # head dim
FF = 64                     # intermediate (FFN) size
LAYERS = 2                  # transformer layers
VOCAB = 64
MAX_POS = 40
PAD_ID = 1                  # RoBERTa padding_idx
TOK = B * S                 # flattened tokens per encoder
LN_EPS = 1e-5
NEG_INF = -1e9


# ========================= fused encoder kernel ===============================

def _encoder_kernel(x_ref, mask_ref, eg_ref, eb_ref,
                    qkvw_ref, qkvb_ref, ow_ref, ob_ref,
                    f1w_ref, f1b_ref, f2w_ref, f2b_ref,
                    g1_ref, b1_ref, g2_ref, b2_ref,
                    out_ref):
    """One full RoBERTa tower (the grid axis selects claim vs doc).

    x:    [TOK, H]    f32  word + position + token-type embedding sum
    mask: [TOK, TOK]  f32  additive attention mask (block-diagonal over the
                           batch, -1e9 on padded keys)
    matmul weights are stacked per layer and stored in bf16; biases and
    LayerNorm params are f32.
    """

    def layernorm(v, g, b):
        mu = jnp.mean(v, axis=-1, keepdims=True)
        c = v - mu
        var = jnp.mean(c * c, axis=-1, keepdims=True)
        return c * jax.lax.rsqrt(var + LN_EPS) * g + b

    def mm(a, b):  # bf16 MXU inputs, f32 accumulation
        return jnp.dot(a.astype(jnp.bfloat16), b.astype(jnp.bfloat16),
                       preferred_element_type=jnp.float32)

    mask = mask_ref[...]
    h = layernorm(x_ref[...], eg_ref[...], eb_ref[...])
    scale = 1.0 / float(DH) ** 0.5

    for l in range(LAYERS):                                  # unrolled (LAYERS=2)
        # --- fused QKV projection: one [TOK,H] x [H,3H] matmul ---------------
        qkv = mm(h, qkvw_ref[l]) + qkvb_ref[l]               # [TOK, 3H] f32
        ow = ow_ref[l]                                       # [H, H] bf16

        # --- per-head attention, output projection folded into the loop ------
        attn = jnp.zeros_like(h)
        for hh in range(NH):                                 # unrolled (NH=2)
            lo = hh * DH
            q = qkv[:, lo:lo + DH]
            k = qkv[:, H + lo:H + lo + DH]
            v = qkv[:, 2 * H + lo:2 * H + lo + DH]
            s = mm(q, k.T) * scale + mask                    # [TOK, TOK] f32
            s = s - jnp.max(s, axis=-1, keepdims=True)
            p = jnp.exp(s)
            # NOTE: a fully-masked row would yield a uniform distribution here
            # (same behaviour as the plain softmax reference).
            p = p * pl.reciprocal(jnp.sum(p, axis=-1, keepdims=True), approx=True)
            ctx = mm(p, v)                                   # [TOK, DH]
            attn = attn + mm(ctx, ow[lo:lo + DH, :])         # [TOK, H]
        attn = attn + ob_ref[l]
        h = layernorm(attn + h, g1_ref[l], b1_ref[l])        # post-LN

        # --- feed-forward -----------------------------------------------------
        ff = mm(h, f1w_ref[l]) + f1b_ref[l]
        # TODO(synk): HF RoBERTa uses erf-GELU; tanh approximation used here.
        ff = jax.nn.gelu(ff, approximate=True)
        ff = mm(ff, f2w_ref[l]) + f2b_ref[l]
        h = layernorm(ff + h, g2_ref[l], b2_ref[l])          # post-LN

    out_ref[...] = h


def _run_encoders(sp, xs, masks):
    """sp: params stacked along a leading encoder axis E; xs: [E,TOK,H] f32;
    masks: [E,TOK,TOK] f32.  Returns last_hidden_state [E, TOK, H]."""
    e_count = xs.shape[0]

    def vspec(shape):
        n = len(shape)

        def index_map(e):
            return (e,) + (0,) * n

        return pl.BlockSpec((None,) + tuple(shape), index_map)

    grid_spec = pltpu.PrefetchScalarGridSpec(
        num_scalar_prefetch=0,
        grid=(e_count,),
        in_specs=[
            vspec((TOK, H)),             # x (embedding sum)
            vspec((TOK, TOK)),           # additive mask
            vspec((1, H)),               # emb_ln gamma
            vspec((1, H)),               # emb_ln beta
            vspec((LAYERS, H, 3 * H)),   # qkv_w (bf16)
            vspec((LAYERS, 1, 3 * H)),   # qkv_b
            vspec((LAYERS, H, H)),       # o_w   (bf16)
            vspec((LAYERS, 1, H)),       # o_b
            vspec((LAYERS, H, FF)),      # fc1_w (bf16)
            vspec((LAYERS, 1, FF)),      # fc1_b
            vspec((LAYERS, FF, H)),      # fc2_w (bf16)
            vspec((LAYERS, 1, H)),       # fc2_b
            vspec((LAYERS, 1, H)),       # ln1 gamma
            vspec((LAYERS, 1, H)),       # ln1 beta
            vspec((LAYERS, 1, H)),       # ln2 gamma
            vspec((LAYERS, 1, H)),       # ln2 beta
        ],
        out_specs=vspec((TOK, H)),
    )
    return pl.pallas_call(
        _encoder_kernel,
        out_shape=jax.ShapeDtypeStruct((e_count, TOK, H), jnp.float32),
        grid_spec=grid_spec,
        compiler_params=pltpu.CompilerParams(
            dimension_semantics=("parallel",)),   # v7x: claim/doc on separate TCs
    )(xs, masks,
      sp["emb_ln_g"], sp["emb_ln_b"],
      sp["qkv_w"], sp["qkv_b"], sp["o_w"], sp["o_b"],
      sp["fc1_w"], sp["fc1_b"], sp["fc2_w"], sp["fc2_b"],
      sp["ln1_g"], sp["ln1_b"], sp["ln2_g"], sp["ln2_b"])


# ============================ plain-JAX glue ==================================

def _one_embedding(word_emb, pos_emb, type_emb, input_ids):
    """word/pos gathers + type-0 broadcast -> [B*S, H] f32 (no LN here)."""
    pad_mask = (input_ids != PAD_ID).astype(jnp.int32)
    position_ids = jnp.cumsum(pad_mask, axis=1) * pad_mask + PAD_ID  # RoBERTa offset
    we = jnp.take(word_emb, input_ids, axis=0)
    pe = jnp.take(pos_emb, position_ids, axis=0)
    te = type_emb[0]                               # token_type_ids are all zero
    return (we + pe + te).reshape(-1, H).astype(jnp.float32)


def _one_additive_mask(attention_mask):
    """[B, S] padding mask -> [TOK, TOK] block-diagonal additive mask."""
    b, s = attention_mask.shape
    key_ok = attention_mask.reshape(b * s) > 0
    batch_ids = jnp.repeat(jnp.arange(b), s)
    same_batch = batch_ids[:, None] == batch_ids[None, :]
    return jnp.where(same_batch & key_ok[None, :], 0.0, NEG_INF).astype(jnp.float32)


@jax.jit
def _encode_stacked(sp, ids, attn_mask):
    """ids/attn_mask: [E, B, S] -> CLS embeddings [E, B, H]."""
    xs = jax.vmap(_one_embedding)(sp["word_emb"], sp["pos_emb"], sp["type_emb"], ids)
    masks = jax.vmap(_one_additive_mask)(attn_mask)
    hidden = _run_encoders(sp, xs, masks)                      # [E, TOK, H]
    e, b, s = ids.shape
    hidden = hidden.reshape(e, b, s, H)
    return hidden[:, :, 0, :]        # [CLS]; dropout(0.1) == identity at inference


# ============================ parameter setup =================================

def init_roberta(key):
    ks = jax.random.split(key, 11)
    rnd = lambda k, shape: 0.02 * jax.random.normal(k, shape, jnp.float32)
    return {
        "word_emb": rnd(ks[0], (VOCAB, H)),
        "pos_emb": rnd(ks[1], (MAX_POS, H)),
        "type_emb": rnd(ks[2], (2, H)),
        "emb_ln_g": jnp.ones((1, H), jnp.float32),
        "emb_ln_b": jnp.zeros((1, H), jnp.float32),
        # matmul weights stored in bf16 (MXU inputs); biases / LN params in f32
        "qkv_w": rnd(ks[3], (LAYERS, H, 3 * H)).astype(jnp.bfloat16),
        "qkv_b": rnd(ks[4], (LAYERS, 1, 3 * H)),
        "o_w": rnd(ks[5], (LAYERS, H, H)).astype(jnp.bfloat16),
        "o_b": rnd(ks[6], (LAYERS, 1, H)),
        "fc1_w": rnd(ks[7], (LAYERS, H, FF)).astype(jnp.bfloat16),
        "fc1_b": rnd(ks[8], (LAYERS, 1, FF)),
        "fc2_w": rnd(ks[9], (LAYERS, FF, H)).astype(jnp.bfloat16),
        "fc2_b": rnd(ks[10], (LAYERS, 1, H)),
        "ln1_g": jnp.ones((LAYERS, 1, H), jnp.float32),
        "ln1_b": jnp.zeros((LAYERS, 1, H), jnp.float32),
        "ln2_g": jnp.ones((LAYERS, 1, H), jnp.float32),
        "ln2_b": jnp.zeros((LAYERS, 1, H), jnp.float32),
    }


# ========================= DualEncoderRoberta.forward =========================

def dual_encoder_forward(params,
                         claim_input_ids=None, claim_attention_mask=None,
                         doc_input_ids=None, doc_attention_mask=None):
    towers, ids_list, mask_list, names = [], [], [], []
    if claim_input_ids is not None and claim_attention_mask is not None:
        towers.append(params["claim"]); ids_list.append(claim_input_ids)
        mask_list.append(claim_attention_mask); names.append("claim")
    if doc_input_ids is not None and doc_attention_mask is not None:
        towers.append(params["doc"]); ids_list.append(doc_input_ids)
        mask_list.append(doc_attention_mask); names.append("doc")

    claim_outputs = doc_outputs = None
    if towers:
        sp = jax.tree_util.tree_map(lambda *xs: jnp.stack(xs, 0), *towers)
        ids = jnp.stack(ids_list, 0)
        am = jnp.stack(mask_list, 0)
        cls = _encode_stacked(sp, ids, am)                    # [E, B, H]
        for i, name in enumerate(names):
            if name == "claim":
                claim_outputs = cls[i]
            else:
                doc_outputs = cls[i]
    return claim_outputs, doc_outputs


# =================================== main =====================================

if __name__ == "__main__":
    key = jax.random.PRNGKey(0)
    k_claim_ids, k_doc_ids, k_claim_p, k_doc_p = jax.random.split(key, 4)

    # TODO(synk): pretrained checkpoint loading replaced by deterministic synthetic weights.
    params = {"claim": init_roberta(k_claim_p), "doc": init_roberta(k_doc_p)}

    claim_ids = jax.random.randint(k_claim_ids, (B, S), 2, VOCAB, dtype=jnp.int32)
    doc_ids = jax.random.randint(k_doc_ids, (B, S), 2, VOCAB, dtype=jnp.int32)

    # second claim example has 2 padded positions
    claim_mask = jnp.array([[1] * S, [1] * (S - 2) + [0, 0]], dtype=jnp.int32)
    claim_ids = jnp.where(claim_mask == 1, claim_ids, PAD_ID)
    doc_mask = jnp.ones((B, S), dtype=jnp.int32)

    claim_out, doc_out = dual_encoder_forward(
        params,
        claim_input_ids=claim_ids, claim_attention_mask=claim_mask,
        doc_input_ids=doc_ids, doc_attention_mask=doc_mask,
    )
    jax.block_until_ready((claim_out, doc_out))

    assert claim_out.shape == (B, H) and claim_out.dtype == jnp.float32
    assert doc_out.shape == (B, H) and doc_out.dtype == jnp.float32
    assert bool(jnp.all(jnp.isfinite(claim_out))) and bool(jnp.all(jnp.isfinite(doc_out)))
    print("KERNEL_OK")
</pallas_src>

<mosaic_0001>
module attributes {stable_mosaic.version = 11 : i64} {
  func.func @_encoder_kernel(%arg0: i32, %arg1: memref<1x16x32xf32, #tpu.memory_space<vmem>>, %arg2: memref<1x16x16xf32, #tpu.memory_space<vmem>>, %arg3: memref<1x1x32xf32, #tpu.memory_space<vmem>>, %arg4: memref<1x1x32xf32, #tpu.memory_space<vmem>>, %arg5: memref<1x2x32x96xbf16, #tpu.memory_space<vmem>>, %arg6: memref<1x2x1x96xf32, #tpu.memory_space<vmem>>, %arg7: memref<1x2x32x32xbf16, #tpu.memory_space<vmem>>, %arg8: memref<1x2x1x32xf32, #tpu.memory_space<vmem>>, %arg9: memref<1x2x32x64xbf16, #tpu.memory_space<vmem>>, %arg10: memref<1x2x1x64xf32, #tpu.memory_space<vmem>>, %arg11: memref<1x2x64x32xbf16, #tpu.memory_space<vmem>>, %arg12: memref<1x2x1x32xf32, #tpu.memory_space<vmem>>, %arg13: memref<1x2x1x32xf32, #tpu.memory_space<vmem>>, %arg14: memref<1x2x1x32xf32, #tpu.memory_space<vmem>>, %arg15: memref<1x2x1x32xf32, #tpu.memory_space<vmem>>, %arg16: memref<1x2x1x32xf32, #tpu.memory_space<vmem>>, %arg17: memref<1x16x32xf32, #tpu.memory_space<vmem>>) attributes {dimension_semantics = [#tpu.dimension_semantics<parallel>], iteration_bounds = array<i64: 2>, scalar_prefetch = 0 : i64, scratch_operands = 0 : i64, tpu.core_type = #tpu.core_type<tc>, window_params = [{transform_indices = @transform_0, window_bounds = array<i64: 1, 16, 32>}, {transform_indices = @transform_1, window_bounds = array<i64: 1, 16, 16>}, {transform_indices = @transform_2, window_bounds = array<i64: 1, 1, 32>}, {transform_indices = @transform_3, window_bounds = array<i64: 1, 1, 32>}, {transform_indices = @transform_4, window_bounds = array<i64: 1, 2, 32, 96>}, {transform_indices = @transform_5, window_bounds = array<i64: 1, 2, 1, 96>}, {transform_indices = @transform_6, window_bounds = array<i64: 1, 2, 32, 32>}, {transform_indices = @transform_7, window_bounds = array<i64: 1, 2, 1, 32>}, {transform_indices = @transform_8, window_bounds = array<i64: 1, 2, 32, 64>}, {transform_indices = @transform_9, window_bounds = array<i64: 1, 2, 1, 64>}, {transform_indices = @transform_10, window_bounds = array<i64: 1, 2, 64, 32>}, {transform_indices = @transform_11, window_bounds = array<i64: 1, 2, 1, 32>}, {transform_indices = @transform_12, window_bounds = array<i64: 1, 2, 1, 32>}, {transform_indices = @transform_13, window_bounds = array<i64: 1, 2, 1, 32>}, {transform_indices = @transform_14, window_bounds = array<i64: 1, 2, 1, 32>}, {transform_indices = @transform_15, window_bounds = array<i64: 1, 2, 1, 32>}, {transform_indices = @transform_16, window_bounds = array<i64: 1, 16, 32>}]} {
    %c0 = arith.constant 0 : index
    %c0_0 = arith.constant 0 : index
    %c0_1 = arith.constant 0 : index
    %0 = vector.load %arg2[%c0, %c0_0, %c0_1] : memref<1x16x16xf32, #tpu.memory_space<vmem>>, vector<1x16x16xf32>
    %1 = vector.shape_cast %0 : vector<1x16x16xf32> to vector<16x16xf32>
    %c0_2 = arith.constant 0 : index
    %c0_3 = arith.constant 0 : index
    %c0_4 = arith.constant 0 : index
    %2 = vector.load %arg1[%c0_2, %c0_3, %c0_4] : memref<1x16x32xf32, #tpu.memory_space<vmem>>, vector<1x16x32xf32>
    %3 = vector.shape_cast %2 : vector<1x16x32xf32> to vector<16x32xf32>
    %c0_5 = arith.constant 0 : index
    %c0_6 = arith.constant 0 : index
    %c0_7 = arith.constant 0 : index
    %4 = vector.load %arg3[%c0_5, %c0_6, %c0_7] : memref<1x1x32xf32, #tpu.memory_space<vmem>>, vector<1x1x32xf32>
    %5 = vector.shape_cast %4 : vector<1x1x32xf32> to vector<1x32xf32>
    %c0_8 = arith.constant 0 : index
    %c0_9 = arith.constant 0 : index
    %c0_10 = arith.constant 0 : index
    %6 = vector.load %arg4[%c0_8, %c0_9, %c0_10] : memref<1x1x32xf32, #tpu.memory_space<vmem>>, vector<1x1x32xf32>
    %7 = vector.shape_cast %6 : vector<1x1x32xf32> to vector<1x32xf32>
    %cst = arith.constant dense<0.000000e+00> : vector<16xf32>
    %8 = vector.multi_reduction <add>, %3, %cst [1] : vector<16x32xf32> to vector<16xf32>
    %9 = vector.shape_cast %8 : vector<16xf32> to vector<16x1xf32>
    %cst_11 = arith.constant 3.200000e+01 : f32
    %10 = vector.broadcast %cst_11 : f32 to vector<16x1xf32>
    %11 = arith.divf %9, %10 : vector<16x1xf32>
    %12 = vector.broadcast %11 : vector<16x1xf32> to vector<16x32xf32>
    %13 = arith.subf %3, %12 : vector<16x32xf32>
    %14 = arith.mulf %13, %13 : vector<16x32xf32>
    %cst_12 = arith.constant dense<0.000000e+00> : vector<16xf32>
    %15 = vector.multi_reduction <add>, %14, %cst_12 [1] : vector<16x32xf32> to vector<16xf32>
    %16 = vector.shape_cast %15 : vector<16xf32> to vector<16x1xf32>
    %cst_13 = arith.constant 3.200000e+01 : f32
    %17 = vector.broadcast %cst_13 : f32 to vector<16x1xf32>
    %18 = arith.divf %16, %17 : vector<16x1xf32>
    %cst_14 = arith.constant 9.99999974E-6 : f32
    %19 = vector.broadcast %cst_14 : f32 to vector<16x1xf32>
    %20 = arith.addf %18, %19 : vector<16x1xf32>
    %21 = math.rsqrt %20 : vector<16x1xf32>
    %22 = vector.broadcast %21 : vector<16x1xf32> to vector<16x32xf32>
    %23 = arith.mulf %13, %22 : vector<16x32xf32>
    %24 = vector.broadcast %5 : vector<1x32xf32> to vector<16x32xf32>
    %25 = arith.mulf %23, %24 : vector<16x32xf32>
    %26 = vector.broadcast %7 : vector<1x32xf32> to vector<16x32xf32>
    %27 = arith.addf %25, %26 : vector<16x32xf32>
    %c0_15 = arith.constant 0 : index
    %c0_16 = arith.constant 0 : index
    %c0_17 = arith.constant 0 : index
    %c0_18 = arith.constant 0 : index
    %28 = vector.load %arg5[%c0_15, %c0_16, %c0_17, %c0_18] : memref<1x2x32x96xbf16, #tpu.memory_space<vmem>>, vector<1x1x32x96xbf16>
    %29 = vector.shape_cast %28 : vector<1x1x32x96xbf16> to vector<32x96xbf16>
    %30 = arith.truncf %27 : vector<16x32xf32> to vector<16x32xbf16>
    %cst_19 = arith.constant dense<0.000000e+00> : vector<16x96xf32>
    %31 = tpu.matmul %30, %29, %cst_19 {dimension_numbers = #tpu.dot_dimension_numbers<[1], [0], [0], [1], [0, 0, 1, 1], [], []>} : vector<16x32xbf16>, vector<32x96xbf16>, vector<16x96xf32> -> vector<16x96xf32>
    %c0_20 = arith.constant 0 : index
    %c0_21 = arith.constant 0 : index
    %c0_22 = arith.constant 0 : index
    %c0_23 = arith.constant 0 : index
    %32 = vector.load %arg6[%c0_20, %c0_21, %c0_22, %c0_23] : memref<1x2x1x96xf32, #tpu.memory_space<vmem>>, vector<1x1x1x96xf32>
    %33 = vector.shape_cast %32 : vector<1x1x1x96xf32> to vector<1x96xf32>
    %34 = vector.broadcast %33 : vector<1x96xf32> to vector<16x96xf32>
    %35 = arith.addf %31, %34 : vector<16x96xf32>
    %c0_24 = arith.constant 0 : index
    %c0_25 = arith.constant 0 : index
    %c0_26 = arith.constant 0 : index
    %c0_27 = arith.constant 0 : index
    %36 = vector.load %arg7[%c0_24, %c0_25, %c0_26, %c0_27] : memref<1x2x32x32xbf16, #tpu.memory_space<vmem>>, vector<1x1x32x32xbf16>
    %37 = vector.shape_cast %36 : vector<1x1x32x32xbf16> to vector<32x32xbf16>
    %cst_28 = arith.constant 0.000000e+00 : f32
    %38 = vector.broadcast %cst_28 : f32 to vector<16x32xf32>
    %39 = vector.extract_strided_slice %35 {offsets = [0, 0], sizes = [16, 16], strides = [1, 1]} : vector<16x96xf32> to vector<16x16xf32>
    %40 = vector.extract_strided_slice %35 {offsets = [0, 32], sizes = [16, 16], strides = [1, 1]} : vector<16x96xf32> to vector<16x16xf32>
    %41 = vector.extract_strided_slice %35 {offsets = [0, 64], sizes = [16, 16], strides = [1, 1]} : vector<16x96xf32> to vector<16x16xf32>
    %42 = tpu.transpose %40, [1, 0] : vector<16x16xf32> -> vector<16x16xf32>
    %43 = arith.truncf %39 : vector<16x16xf32> to vector<16x16xbf16>
    %44 = arith.truncf %42 : vector<16x16xf32> to vector<16x16xbf16>
    %cst_29 = arith.constant dense<0.000000e+00> : vector<16x16xf32>
    %45 = tpu.matmul %43, %44, %cst_29 {dimension_numbers = #tpu.dot_dimension_numbers<[1], [0], [0], [1], [0, 0, 1, 1], [], []>} : vector<16x16xbf16>, vector<16x16xbf16>, vector<16x16xf32> -> vector<16x16xf32>
    %cst_30 = arith.constant 2.500000e-01 : f32
    %46 = vector.broadcast %cst_30 : f32 to vector<16x16xf32>
    %47 = arith.mulf %45, %46 : vector<16x16xf32>
    %48 = arith.addf %47, %1 : vector<16x16xf32>
    %cst_31 = arith.constant dense<0xFF800000> : vector<16xf32>
    %49 = vector.multi_reduction <maximumf>, %48, %cst_31 [1] : vector<16x16xf32> to vector<16xf32>
    %50 = vector.shape_cast %49 : vector<16xf32> to vector<16x1xf32>
    %51 = vector.broadcast %50 : vector<16x1xf32> to vector<16x16xf32>
    %52 = arith.subf %48, %51 : vector<16x16xf32>
    %53 = math.exp %52 : vector<16x16xf32>
    %cst_32 = arith.constant dense<0.000000e+00> : vector<16xf32>
    %54 = vector.multi_reduction <add>, %53, %cst_32 [1] : vector<16x16xf32> to vector<16xf32>
    %55 = vector.shape_cast %54 : vector<16xf32> to vector<16x1xf32>
    %56 = tpu.reciprocal %55 {approx = true} : vector<16x1xf32> -> vector<16x1xf32>
    %57 = vector.broadcast %56 : vector<16x1xf32> to vector<16x16xf32>
    %58 = arith.mulf %53, %57 : vector<16x16xf32>
    %59 = arith.truncf %58 : vector<16x16xf32> to vector<16x16xbf16>
    %60 = arith.truncf %41 : vector<16x16xf32> to vector<16x16xbf16>
    %cst_33 = arith.constant dense<0.000000e+00> : vector<16x16xf32>
    %61 = tpu.matmul %59, %60, %cst_33 {dimension_numbers = #tpu.dot_dimension_numbers<[1], [0], [0], [1], [0, 0, 1, 1], [], []>} : vector<16x16xbf16>, vector<16x16xbf16>, vector<16x16xf32> -> vector<16x16xf32>
    %62 = vector.extract_strided_slice %37 {offsets = [0, 0], sizes = [16, 32], strides = [1, 1]} : vector<32x32xbf16> to vector<16x32xbf16>
    %63 = arith.truncf %61 : vector<16x16xf32> to vector<16x16xbf16>
    %cst_34 = arith.constant dense<0.000000e+00> : vector<16x32xf32>
    %64 = tpu.matmul %63, %62, %cst_34 {dimension_numbers = #tpu.dot_dimension_numbers<[1], [0], [0], [1], [0, 0, 1, 1], [], []>} : vector<16x16xbf16>, vector<16x32xbf16>, vector<16x32xf32> -> vector<16x32xf32>
    %65 = arith.addf %38, %64 : vector<16x32xf32>
    %66 = vector.extract_strided_slice %35 {offsets = [0, 16], sizes = [16, 16], strides = [1, 1]} : vector<16x96xf32> to vector<16x16xf32>
    %67 = vector.extract_strided_slice %35 {offsets = [0, 48], sizes = [16, 16], strides = [1, 1]} : vector<16x96xf32> to vector<16x16xf32>
    %68 = vector.extract_strided_slice %35 {offsets = [0, 80], sizes = [16, 16], strides = [1, 1]} : vector<16x96xf32> to vector<16x16xf32>
    %69 = tpu.transpose %67, [1, 0] : vector<16x16xf32> -> vector<16x16xf32>
    %70 = arith.truncf %66 : vector<16x16xf32> to vector<16x16xbf16>
    %71 = arith.truncf %69 : vector<16x16xf32> to vector<16x16xbf16>
    %cst_35 = arith.constant dense<0.000000e+00> : vector<16x16xf32>
    %72 = tpu.matmul %70, %71, %cst_35 {dimension_numbers = #tpu.dot_dimension_numbers<[1], [0], [0], [1], [0, 0, 1, 1], [], []>} : vector<16x16xbf16>, vector<16x16xbf16>, vector<16x16xf32> -> vector<16x16xf32>
    %cst_36 = arith.constant 2.500000e-01 : f32
    %73 = vector.broadcast %cst_36 : f32 to vector<16x16xf32>
    %74 = arith.mulf %72, %73 : vector<16x16xf32>
    %75 = arith.addf %74, %1 : vector<16x16xf32>
    %cst_37 = arith.constant dense<0xFF800000> : vector<16xf32>
    %76 = vector.multi_reduction <maximumf>, %75, %cst_37 [1] : vector<16x16xf32> to vector<16xf32>
    %77 = vector.shape_cast %76 : vector<16xf32> to vector<16x1xf32>
    %78 = vector.broadcast %77 : vector<16x1xf32> to vector<16x16xf32>
    %79 = arith.subf %75, %78 : vector<16x16xf32>
    %80 = math.exp %79 : vector<16x16xf32>
    %cst_38 = arith.constant dense<0.000000e+00> : vector<16xf32>
    %81 = vector.multi_reduction <add>, %80, %cst_38 [1] : vector<16x16xf32> to vector<16xf32>
    %82 = vector.shape_cast %81 : vector<16xf32> to vector<16x1xf32>
    %83 = tpu.reciprocal %82 {approx = true} : vector<16x1xf32> -> vector<16x1xf32>
    %84 = vector.broadcast %83 : vector<16x1xf32> to vector<16x16xf32>
    %85 = arith.mulf %80, %84 : vector<16x16xf32>
    %86 = arith.truncf %85 : vector<16x16xf32> to vector<16x16xbf16>
    %87 = arith.truncf %68 : vector<16x16xf32> to vector<16x16xbf16>
    %cst_39 = arith.constant dense<0.000000e+00> : vector<16x16xf32>
    %88 = tpu.matmul %86, %87, %cst_39 {dimension_numbers = #tpu.dot_dimension_numbers<[1], [0], [0], [1], [0, 0, 1, 1], [], []>} : vector<16x16xbf16>, vector<16x16xbf16>, vector<16x16xf32> -> vector<16x16xf32>
    %89 = vector.extract_strided_slice %37 {offsets = [16, 0], sizes = [16, 32], strides = [1, 1]} : vector<32x32xbf16> to vector<16x32xbf16>
    %90 = arith.truncf %88 : vector<16x16xf32> to vector<16x16xbf16>
    %cst_40 = arith.constant dense<0.000000e+00> : vector<16x32xf32>
    %91 = tpu.matmul %90, %89, %cst_40 {dimension_numbers = #tpu.dot_dimension_numbers<[1], [0], [0], [1], [0, 0, 1, 1], [], []>} : vector<16x16xbf16>, vector<16x32xbf16>, vector<16x32xf32> -> vector<16x32xf32>
    %92 = arith.addf %65, %91 : vector<16x32xf32>
    %c0_41 = arith.constant 0 : index
    %c0_42 = arith.constant 0 : index
    %c0_43 = arith.constant 0 : index
    %c0_44 = arith.constant 0 : index
    %93 = vector.load %arg8[%c0_41, %c0_42, %c0_43, %c0_44] : memref<1x2x1x32xf32, #tpu.memory_space<vmem>>, vector<1x1x1x32xf32>
    %94 = vector.shape_cast %93 : vector<1x1x1x32xf32> to vector<1x32xf32>
    %95 = vector.broadcast %94 : vector<1x32xf32> to vector<16x32xf32>
    %96 = arith.addf %92, %95 : vector<16x32xf32>
    %97 = arith.addf %96, %27 : vector<16x32xf32>
    %c0_45 = arith.constant 0 : index
    %c0_46 = arith.constant 0 : index
    %c0_47 = arith.constant 0 : index
    %c0_48 = arith.constant 0 : index
    %98 = vector.load %arg13[%c0_45, %c0_46, %c0_47, %c0_48] : memref<1x2x1x32xf32, #tpu.memory_space<vmem>>, vector<1x1x1x32xf32>
    %99 = vector.shape_cast %98 : vector<1x1x1x32xf32> to vector<1x32xf32>
    %c0_49 = arith.constant 0 : index
    %c0_50 = arith.constant 0 : index
    %c0_51 = arith.constant 0 : index
    %c0_52 = arith.constant 0 : index
    %100 = vector.load %arg14[%c0_49, %c0_50, %c0_51, %c0_52] : memref<1x2x1x32xf32, #tpu.memory_space<vmem>>, vector<1x1x1x32xf32>
    %101 = vector.shape_cast %100 : vector<1x1x1x32xf32> to vector<1x32xf32>
    %cst_53 = arith.constant dense<0.000000e+00> : vector<16xf32>
    %102 = vector.multi_reduction <add>, %97, %cst_53 [1] : vector<16x32xf32> to vector<16xf32>
    %103 = vector.shape_cast %102 : vector<16xf32> to vector<16x1xf32>
    %cst_54 = arith.constant 3.200000e+01 : f32
    %104 = vector.broadcast %cst_54 : f32 to vector<16x1xf32>
    %105 = arith.divf %103, %104 : vector<16x1xf32>
    %106 = vector.broadcast %105 : vector<16x1xf32> to vector<16x32xf32>
    %107 = arith.subf %97, %106 : vector<16x32xf32>
    %108 = arith.mulf %107, %107 : vector<16x32xf32>
    %cst_55 = arith.constant dense<0.000000e+00> : vector<16xf32>
    %109 = vector.multi_reduction <add>, %108, %cst_55 [1] : vector<16x32xf32> to vector<16xf32>
    %110 = vector.shape_cast %109 : vector<16xf32> to vector<16x1xf32>
    %cst_56 = arith.constant 3.200000e+01 : f32
    %111 = vector.broadcast %cst_56 : f32 to vector<16x1xf32>
    %112 = arith.divf %110, %111 : vector<16x1xf32>
    %cst_57 = arith.constant 9.99999974E-6 : f32
    %113 = vector.broadcast %cst_57 : f32 to vector<16x1xf32>
    %114 = arith.addf %112, %113 : vector<16x1xf32>
    %115 = math.rsqrt %114 : vector<16x1xf32>
    %116 = vector.broadcast %115 : vector<16x1xf32> to vector<16x32xf32>
    %117 = arith.mulf %107, %116 : vector<16x32xf32>
    %118 = vector.broadcast %99 : vector<1x32xf32> to vector<16x32xf32>
    %119 = arith.mulf %117, %118 : vector<16x32xf32>
    %120 = vector.broadcast %101 : vector<1x32xf32> to vector<16x32xf32>
    %121 = arith.addf %119, %120 : vector<16x32xf32>
    %c0_58 = arith.constant 0 : index
    %c0_59 = arith.constant 0 : index
    %c0_60 = arith.constant 0 : index
    %c0_61 = arith.constant 0 : index
    %122 = vector.load %arg9[%c0_58, %c0_59, %c0_60, %c0_61] : memref<1x2x32x64xbf16, #tpu.memory_space<vmem>>, vector<1x1x32x64xbf16>
    %123 = vector.shape_cast %122 : vector<1x1x32x64xbf16> to vector<32x64xbf16>
    %124 = arith.truncf %121 : vector<16x32xf32> to vector<16x32xbf16>
    %cst_62 = arith.constant dense<0.000000e+00> : vector<16x64xf32>
    %125 = tpu.matmul %124, %123, %cst_62 {dimension_numbers = #tpu.dot_dimension_numbers<[1], [0], [0], [1], [0, 0, 1, 1], [], []>} : vector<16x32xbf16>, vector<32x64xbf16>, vector<16x64xf32> -> vector<16x64xf32>
    %c0_63 = arith.constant 0 : index
    %c0_64 = arith.constant 0 : index
    %c0_65 = arith.constant 0 : index
    %c0_66 = arith.constant 0 : index
    %126 = vector.load %arg10[%c0_63, %c0_64, %c0_65, %c0_66] : memref<1x2x1x64xf32, #tpu.memory_space<vmem>>, vector<1x1x1x64xf32>
    %127 = vector.shape_cast %126 : vector<1x1x1x64xf32> to vector<1x64xf32>
    %128 = vector.broadcast %127 : vector<1x64xf32> to vector<16x64xf32>
    %129 = arith.addf %125, %128 : vector<16x64xf32>
    %130 = arith.mulf %129, %129 : vector<16x64xf32>
    %131 = arith.mulf %129, %130 : vector<16x64xf32>
    %cst_67 = arith.constant 4.471500e-02 : f32
    %132 = vector.broadcast %cst_67 : f32 to vector<16x64xf32>
    %133 = arith.mulf %132, %131 : vector<16x64xf32>
    %134 = arith.addf %129, %133 : vector<16x64xf32>
    %cst_68 = arith.constant 0.797884583 : f32
    %135 = vector.broadcast %cst_68 : f32 to vector<16x64xf32>
    %136 = arith.mulf %135, %134 : vector<16x64xf32>
    %137 = math.tanh %136 : vector<16x64xf32>
    %cst_69 = arith.constant 1.000000e+00 : f32
    %138 = vector.broadcast %cst_69 : f32 to vector<16x64xf32>
    %139 = arith.addf %138, %137 : vector<16x64xf32>
    %cst_70 = arith.constant 5.000000e-01 : f32
    %140 = vector.broadcast %cst_70 : f32 to vector<16x64xf32>
    %141 = arith.mulf %140, %139 : vector<16x64xf32>
    %142 = arith.mulf %129, %141 : vector<16x64xf32>
    %c0_71 = arith.constant 0 : index
    %c0_72 = arith.constant 0 : index
    %c0_73 = arith.constant 0 : index
    %c0_74 = arith.constant 0 : index
    %143 = vector.load %arg11[%c0_71, %c0_72, %c0_73, %c0_74] : memref<1x2x64x32xbf16, #tpu.memory_space<vmem>>, vector<1x1x64x32xbf16>
    %144 = vector.shape_cast %143 : vector<1x1x64x32xbf16> to vector<64x32xbf16>
    %145 = arith.truncf %142 : vector<16x64xf32> to vector<16x64xbf16>
    %cst_75 = arith.constant dense<0.000000e+00> : vector<16x32xf32>
    %146 = tpu.matmul %145, %144, %cst_75 {dimension_numbers = #tpu.dot_dimension_numbers<[1], [0], [0], [1], [0, 0, 1, 1], [], []>} : vector<16x64xbf16>, vector<64x32xbf16>, vector<16x32xf32> -> vector<16x32xf32>
    %c0_76 = arith.constant 0 : index
    %c0_77 = arith.constant 0 : index
    %c0_78 = arith.constant 0 : index
    %c0_79 = arith.constant 0 : index
    %147 = vector.load %arg12[%c0_76, %c0_77, %c0_78, %c0_79] : memref<1x2x1x32xf32, #tpu.memory_space<vmem>>, vector<1x1x1x32xf32>
    %148 = vector.shape_cast %147 : vector<1x1x1x32xf32> to vector<1x32xf32>
    %149 = vector.broadcast %148 : vector<1x32xf32> to vector<16x32xf32>
    %150 = arith.addf %146, %149 : vector<16x32xf32>
    %151 = arith.addf %150, %121 : vector<16x32xf32>
    %c0_80 = arith.constant 0 : index
    %c0_81 = arith.constant 0 : index
    %c0_82 = arith.constant 0 : index
    %c0_83 = arith.constant 0 : index
    %152 = vector.load %arg15[%c0_80, %c0_81, %c0_82, %c0_83] : memref<1x2x1x32xf32, #tpu.memory_space<vmem>>, vector<1x1x1x32xf32>
    %153 = vector.shape_cast %152 : vector<1x1x1x32xf32> to vector<1x32xf32>
    %c0_84 = arith.constant 0 : index
    %c0_85 = arith.constant 0 : index
    %c0_86 = arith.constant 0 : index
    %c0_87 = arith.constant 0 : index
    %154 = vector.load %arg16[%c0_84, %c0_85, %c0_86, %c0_87] : memref<1x2x1x32xf32, #tpu.memory_space<vmem>>, vector<1x1x1x32xf32>
    %155 = vector.shape_cast %154 : vector<1x1x1x32xf32> to vector<1x32xf32>
    %cst_88 = arith.constant dense<0.000000e+00> : vector<16xf32>
    %156 = vector.multi_reduction <add>, %151, %cst_88 [1] : vector<16x32xf32> to vector<16xf32>
    %157 = vector.shape_cast %156 : vector<16xf32> to vector<16x1xf32>
    %cst_89 = arith.constant 3.200000e+01 : f32
    %158 = vector.broadcast %cst_89 : f32 to vector<16x1xf32>
    %159 = arith.divf %157, %158 : vector<16x1xf32>
    %160 = vector.broadcast %159 : vector<16x1xf32> to vector<16x32xf32>
    %161 = arith.subf %151, %160 : vector<16x32xf32>
    %162 = arith.mulf %161, %161 : vector<16x32xf32>
    %cst_90 = arith.constant dense<0.000000e+00> : vector<16xf32>
    %163 = vector.multi_reduction <add>, %162, %cst_90 [1] : vector<16x32xf32> to vector<16xf32>
    %164 = vector.shape_cast %163 : vector<16xf32> to vector<16x1xf32>
    %cst_91 = arith.constant 3.200000e+01 : f32
    %165 = vector.broadcast %cst_91 : f32 to vector<16x1xf32>
    %166 = arith.divf %164, %165 : vector<16x1xf32>
    %cst_92 = arith.constant 9.99999974E-6 : f32
    %167 = vector.broadcast %cst_92 : f32 to vector<16x1xf32>
    %168 = arith.addf %166, %167 : vector<16x1xf32>
    %169 = math.rsqrt %168 : vector<16x1xf32>
    %170 = vector.broadcast %169 : vector<16x1xf32> to vector<16x32xf32>
    %171 = arith.mulf %161, %170 : vector<16x32xf32>
    %172 = vector.broadcast %153 : vector<1x32xf32> to vector<16x32xf32>
    %173 = arith.mulf %171, %172 : vector<16x32xf32>
    %174 = vector.broadcast %155 : vector<1x32xf32> to vector<16x32xf32>
    %175 = arith.addf %173, %174 : vector<16x32xf32>
    %c0_93 = arith.constant 0 : index
    %c1 = arith.constant 1 : index
    %c0_94 = arith.constant 0 : index
    %c0_95 = arith.constant 0 : index
    %176 = vector.load %arg5[%c0_93, %c1, %c0_94, %c0_95] : memref<1x2x32x96xbf16, #tpu.memory_space<vmem>>, vector<1x1x32x96xbf16>
    %177 = vector.shape_cast %176 : vector<1x1x32x96xbf16> to vector<32x96xbf16>
    %178 = arith.truncf %175 : vector<16x32xf32> to vector<16x32xbf16>
    %cst_96 = arith.constant dense<0.000000e+00> : vector<16x96xf32>
    %179 = tpu.matmul %178, %177, %cst_96 {dimension_numbers = #tpu.dot_dimension_numbers<[1], [0], [0], [1], [0, 0, 1, 1], [], []>} : vector<16x32xbf16>, vector<32x96xbf16>, vector<16x96xf32> -> vector<16x96xf32>
    %c0_97 = arith.constant 0 : index
    %c1_98 = arith.constant 1 : index
    %c0_99 = arith.constant 0 : index
    %c0_100 = arith.constant 0 : index
    %180 = vector.load %arg6[%c0_97, %c1_98, %c0_99, %c0_100] : memref<1x2x1x96xf32, #tpu.memory_space<vmem>>, vector<1x1x1x96xf32>
    %181 = vector.shape_cast %180 : vector<1x1x1x96xf32> to vector<1x96xf32>
    %182 = vector.broadcast %181 : vector<1x96xf32> to vector<16x96xf32>
    %183 = arith.addf %179, %182 : vector<16x96xf32>
    %c0_101 = arith.constant 0 : index
    %c1_102 = arith.constant 1 : index
    %c0_103 = arith.constant 0 : index
    %c0_104 = arith.constant 0 : index
    %184 = vector.load %arg7[%c0_101, %c1_102, %c0_103, %c0_104] : memref<1x2x32x32xbf16, #tpu.memory_space<vmem>>, vector<1x1x32x32xbf16>
    %185 = vector.shape_cast %184 : vector<1x1x32x32xbf16> to vector<32x32xbf16>
    %cst_105 = arith.constant 0.000000e+00 : f32
    %186 = vector.broadcast %cst_105 : f32 to vector<16x32xf32>
    %187 = vector.extract_strided_slice %183 {offsets = [0, 0], sizes = [16, 16], strides = [1, 1]} : vector<16x96xf32> to vector<16x16xf32>
    %188 = vector.extract_strided_slice %183 {offsets = [0, 32], sizes = [16, 16], strides = [1, 1]} : vector<16x96xf32> to vector<16x16xf32>
    %189 = vector.extract_strided_slice %183 {offsets = [0, 64], sizes = [16, 16], strides = [1, 1]} : vector<16x96xf32> to vector<16x16xf32>
    %190 = tpu.transpose %188, [1, 0] : vector<16x16xf32> -> vector<16x16xf32>
    %191 = arith.truncf %187 : vector<16x16xf32> to vector<16x16xbf16>
    %192 = arith.truncf %190 : vector<16x16xf32> to vector<16x16xbf16>
    %cst_106 = arith.constant dense<0.000000e+00> : vector<16x16xf32>
    %193 = tpu.matmul %191, %192, %cst_106 {dimension_numbers = #tpu.dot_dimension_numbers<[1], [0], [0], [1], [0, 0, 1, 1], [], []>} : vector<16x16xbf16>, vector<16x16xbf16>, vector<16x16xf32> -> vector<16x16xf32>
    %cst_107 = arith.constant 2.500000e-01 : f32
    %194 = vector.broadcast %cst_107 : f32 to vector<16x16xf32>
    %195 = arith.mulf %193, %194 : vector<16x16xf32>
    %196 = arith.addf %195, %1 : vector<16x16xf32>
    %cst_108 = arith.constant dense<0xFF800000> : vector<16xf32>
    %197 = vector.multi_reduction <maximumf>, %196, %cst_108 [1] : vector<16x16xf32> to vector<16xf32>
    %198 = vector.shape_cast %197 : vector<16xf32> to vector<16x1xf32>
    %199 = vector.broadcast %198 : vector<16x1xf32> to vector<16x16xf32>
    %200 = arith.subf %196, %199 : vector<16x16xf32>
    %201 = math.exp %200 : vector<16x16xf32>
    %cst_109 = arith.constant dense<0.000000e+00> : vector<16xf32>
    %202 = vector.multi_reduction <add>, %201, %cst_109 [1] : vector<16x16xf32> to vector<16xf32>
    %203 = vector.shape_cast %202 : vector<16xf32> to vector<16x1xf32>
    %204 = tpu.reciprocal %203 {approx = true} : vector<16x1xf32> -> vector<16x1xf32>
    %205 = vector.broadcast %204 : vector<16x1xf32> to vector<16x16xf32>
    %206 = arith.mulf %201, %205 : vector<16x16xf32>
    %207 = arith.truncf %206 : vector<16x16xf32> to vector<16x16xbf16>
    %208 = arith.truncf %189 : vector<16x16xf32> to vector<16x16xbf16>
    %cst_110 = arith.constant dense<0.000000e+00> : vector<16x16xf32>
    %209 = tpu.matmul %207, %208, %cst_110 {dimension_numbers = #tpu.dot_dimension_numbers<[1], [0], [0], [1], [0, 0, 1, 1], [], []>} : vector<16x16xbf16>, vector<16x16xbf16>, vector<16x16xf32> -> vector<16x16xf32>
    %210 = vector.extract_strided_slice %185 {offsets = [0, 0], sizes = [16, 32], strides = [1, 1]} : vector<32x32xbf16> to vector<16x32xbf16>
    %211 = arith.truncf %209 : vector<16x16xf32> to vector<16x16xbf16>
    %cst_111 = arith.constant dense<0.000000e+00> : vector<16x32xf32>
    %212 = tpu.matmul %211, %210, %cst_111 {dimension_numbers = #tpu.dot_dimension_numbers<[1], [0], [0], [1], [0, 0, 1, 1], [], []>} : vector<16x16xbf16>, vector<16x32xbf16>, vector<16x32xf32> -> vector<16x32xf32>
    %213 = arith.addf %186, %212 : vector<16x32xf32>
    %214 = vector.extract_strided_slice %183 {offsets = [0, 16], sizes = [16, 16], strides = [1, 1]} : vector<16x96xf32> to vector<16x16xf32>
    %215 = vector.extract_strided_slice %183 {offsets = [0, 48], sizes = [16, 16], strides = [1, 1]} : vector<16x96xf32> to vector<16x16xf32>
    %216 = vector.extract_strided_slice %183 {offsets = [0, 80], sizes = [16, 16], strides = [1, 1]} : vector<16x96xf32> to vector<16x16xf32>
    %217 = tpu.transpose %215, [1, 0] : vector<16x16xf32> -> vector<16x16xf32>
    %218 = arith.truncf %214 : vector<16x16xf32> to vector<16x16xbf16>
    %219 = arith.truncf %217 : vector<16x16xf32> to vector<16x16xbf16>
    %cst_112 = arith.constant dense<0.000000e+00> : vector<16x16xf32>
    %220 = tpu.matmul %218, %219, %cst_112 {dimension_numbers = #tpu.dot_dimension_numbers<[1], [0], [0], [1], [0, 0, 1, 1], [], []>} : vector<16x16xbf16>, vector<16x16xbf16>, vector<16x16xf32> -> vector<16x16xf32>
    %cst_113 = arith.constant 2.500000e-01 : f32
    %221 = vector.broadcast %cst_113 : f32 to vector<16x16xf32>
    %222 = arith.mulf %220, %221 : vector<16x16xf32>
    %223 = arith.addf %222, %1 : vector<16x16xf32>
    %cst_114 = arith.constant dense<0xFF800000> : vector<16xf32>
    %224 = vector.multi_reduction <maximumf>, %223, %cst_114 [1] : vector<16x16xf32> to vector<16xf32>
    %225 = vector.shape_cast %224 : vector<16xf32> to vector<16x1xf32>
    %226 = vector.broadcast %225 : vector<16x1xf32> to vector<16x16xf32>
    %227 = arith.subf %223, %226 : vector<16x16xf32>
    %228 = math.exp %227 : vector<16x16xf32>
    %cst_115 = arith.constant dense<0.000000e+00> : vector<16xf32>
    %229 = vector.multi_reduction <add>, %228, %cst_115 [1] : vector<16x16xf32> to vector<16xf32>
    %230 = vector.shape_cast %229 : vector<16xf32> to vector<16x1xf32>
    %231 = tpu.reciprocal %230 {approx = true} : vector<16x1xf32> -> vector<16x1xf32>
    %232 = vector.broadcast %231 : vector<16x1xf32> to vector<16x16xf32>
    %233 = arith.mulf %228, %232 : vector<16x16xf32>
    %234 = arith.truncf %233 : vector<16x16xf32> to vector<16x16xbf16>
    %235 = arith.truncf %216 : vector<16x16xf32> to vector<16x16xbf16>
    %cst_116 = arith.constant dense<0.000000e+00> : vector<16x16xf32>
    %236 = tpu.matmul %234, %235, %cst_116 {dimension_numbers = #tpu.dot_dimension_numbers<[1], [0], [0], [1], [0, 0, 1, 1], [], []>} : vector<16x16xbf16>, vector<16x16xbf16>, vector<16x16xf32> -> vector<16x16xf32>
    %237 = vector.extract_strided_slice %185 {offsets = [16, 0], sizes = [16, 32], strides = [1, 1]} : vector<32x32xbf16> to vector<16x32xbf16>
    %238 = arith.truncf %236 : vector<16x16xf32> to vector<16x16xbf16>
    %cst_117 = arith.constant dense<0.000000e+00> : vector<16x32xf32>
    %239 = tpu.matmul %238, %237, %cst_117 {dimension_numbers = #tpu.dot_dimension_numbers<[1], [0], [0], [1], [0, 0, 1, 1], [], []>} : vector<16x16xbf16>, vector<16x32xbf16>, vector<16x32xf32> -> vector<16x32xf32>
    %240 = arith.addf %213, %239 : vector<16x32xf32>
    %c0_118 = arith.constant 0 : index
    %c1_119 = arith.constant 1 : index
    %c0_120 = arith.constant 0 : index
    %c0_121 = arith.constant 0 : index
    %241 = vector.load %arg8[%c0_118, %c1_119, %c0_120, %c0_121] : memref<1x2x1x32xf32, #tpu.memory_space<vmem>>, vector<1x1x1x32xf32>
    %242 = vector.shape_cast %241 : vector<1x1x1x32xf32> to vector<1x32xf32>
    %243 = vector.broadcast %242 : vector<1x32xf32> to vector<16x32xf32>
    %244 = arith.addf %240, %243 : vector<16x32xf32>
    %245 = arith.addf %244, %175 : vector<16x32xf32>
    %c0_122 = arith.constant 0 : index
    %c1_123 = arith.constant 1 : index
    %c0_124 = arith.constant 0 : index
    %c0_125 = arith.constant 0 : index
    %246 = vector.load %arg13[%c0_122, %c1_123, %c0_124, %c0_125] : memref<1x2x1x32xf32, #tpu.memory_space<vmem>>, vector<1x1x1x32xf32>
    %247 = vector.shape_cast %246 : vector<1x1x1x32xf32> to vector<1x32xf32>
    %c0_126 = arith.constant 0 : index
    %c1_127 = arith.constant 1 : index
    %c0_128 = arith.constant 0 : index
    %c0_129 = arith.constant 0 : index
    %248 = vector.load %arg14[%c0_126, %c1_127, %c0_128, %c0_129] : memref<1x2x1x32xf32, #tpu.memory_space<vmem>>, vector<1x1x1x32xf32>
    %249 = vector.shape_cast %248 : vector<1x1x1x32xf32> to vector<1x32xf32>
    %cst_130 = arith.constant dense<0.000000e+00> : vector<16xf32>
    %250 = vector.multi_reduction <add>, %245, %cst_130 [1] : vector<16x32xf32> to vector<16xf32>
    %251 = vector.shape_cast %250 : vector<16xf32> to vector<16x1xf32>
    %cst_131 = arith.constant 3.200000e+01 : f32
    %252 = vector.broadcast %cst_131 : f32 to vector<16x1xf32>
    %253 = arith.divf %251, %252 : vector<16x1xf32>
    %254 = vector.broadcast %253 : vector<16x1xf32> to vector<16x32xf32>
    %255 = arith.subf %245, %254 : vector<16x32xf32>
    %256 = arith.mulf %255, %255 : vector<16x32xf32>
    %cst_132 = arith.constant dense<0.000000e+00> : vector<16xf32>
    %257 = vector.multi_reduction <add>, %256, %cst_132 [1] : vector<16x32xf32> to vector<16xf32>
    %258 = vector.shape_cast %257 : vector<16xf32> to vector<16x1xf32>
    %cst_133 = arith.constant 3.200000e+01 : f32
    %259 = vector.broadcast %cst_133 : f32 to vector<16x1xf32>
    %260 = arith.divf %258, %259 : vector<16x1xf32>
    %cst_134 = arith.constant 9.99999974E-6 : f32
    %261 = vector.broadcast %cst_134 : f32 to vector<16x1xf32>
    %262 = arith.addf %260, %261 : vector<16x1xf32>
    %263 = math.rsqrt %262 : vector<16x1xf32>
    %264 = vector.broadcast %263 : vector<16x1xf32> to vector<16x32xf32>
    %265 = arith.mulf %255, %264 : vector<16x32xf32>
    %266 = vector.broadcast %247 : vector<1x32xf32> to vector<16x32xf32>
    %267 = arith.mulf %265, %266 : vector<16x32xf32>
    %268 = vector.broadcast %249 : vector<1x32xf32> to vector<16x32xf32>
    %269 = arith.addf %267, %268 : vector<16x32xf32>
    %c0_135 = arith.constant 0 : index
    %c1_136 = arith.constant 1 : index
    %c0_137 = arith.constant 0 : index
    %c0_138 = arith.constant 0 : index
    %270 = vector.load %arg9[%c0_135, %c1_136, %c0_137, %c0_138] : memref<1x2x32x64xbf16, #tpu.memory_space<vmem>>, vector<1x1x32x64xbf16>
    %271 = vector.shape_cast %270 : vector<1x1x32x64xbf16> to vector<32x64xbf16>
    %272 = arith.truncf %269 : vector<16x32xf32> to vector<16x32xbf16>
    %cst_139 = arith.constant dense<0.000000e+00> : vector<16x64xf32>
    %273 = tpu.matmul %272, %271, %cst_139 {dimension_numbers = #tpu.dot_dimension_numbers<[1], [0], [0], [1], [0, 0, 1, 1], [], []>} : vector<16x32xbf16>, vector<32x64xbf16>, vector<16x64xf32> -> vector<16x64xf32>
    %c0_140 = arith.constant 0 : index
    %c1_141 = arith.constant 1 : index
    %c0_142 = arith.constant 0 : index
    %c0_143 = arith.constant 0 : index
    %274 = vector.load %arg10[%c0_140, %c1_141, %c0_142, %c0_143] : memref<1x2x1x64xf32, #tpu.memory_space<vmem>>, vector<1x1x1x64xf32>
    %275 = vector.shape_cast %274 : vector<1x1x1x64xf32> to vector<1x64xf32>
    %276 = vector.broadcast %275 : vector<1x64xf32> to vector<16x64xf32>
    %277 = arith.addf %273, %276 : vector<16x64xf32>
    %278 = arith.mulf %277, %277 : vector<16x64xf32>
    %279 = arith.mulf %277, %278 : vector<16x64xf32>
    %cst_144 = arith.constant 4.471500e-02 : f32
    %280 = vector.broadcast %cst_144 : f32 to vector<16x64xf32>
    %281 = arith.mulf %280, %279 : vector<16x64xf32>
    %282 = arith.addf %277, %281 : vector<16x64xf32>
    %cst_145 = arith.constant 0.797884583 : f32
    %283 = vector.broadcast %cst_145 : f32 to vector<16x64xf32>
    %284 = arith.mulf %283, %282 : vector<16x64xf32>
    %285 = math.tanh %284 : vector<16x64xf32>
    %cst_146 = arith.constant 1.000000e+00 : f32
    %286 = vector.broadcast %cst_146 : f32 to vector<16x64xf32>
    %287 = arith.addf %286, %285 : vector<16x64xf32>
    %cst_147 = arith.constant 5.000000e-01 : f32
    %288 = vector.broadcast %cst_147 : f32 to vector<16x64xf32>
    %289 = arith.mulf %288, %287 : vector<16x64xf32>
    %290 = arith.mulf %277, %289 : vector<16x64xf32>
    %c0_148 = arith.constant 0 : index
    %c1_149 = arith.constant 1 : index
    %c0_150 = arith.constant 0 : index
    %c0_151 = arith.constant 0 : index
    %291 = vector.load %arg11[%c0_148, %c1_149, %c0_150, %c0_151] : memref<1x2x64x32xbf16, #tpu.memory_space<vmem>>, vector<1x1x64x32xbf16>
    %292 = vector.shape_cast %291 : vector<1x1x64x32xbf16> to vector<64x32xbf16>
    %293 = arith.truncf %290 : vector<16x64xf32> to vector<16x64xbf16>
    %cst_152 = arith.constant dense<0.000000e+00> : vector<16x32xf32>
    %294 = tpu.matmul %293, %292, %cst_152 {dimension_numbers = #tpu.dot_dimension_numbers<[1], [0], [0], [1], [0, 0, 1, 1], [], []>} : vector<16x64xbf16>, vector<64x32xbf16>, vector<16x32xf32> -> vector<16x32xf32>
    %c0_153 = arith.constant 0 : index
    %c1_154 = arith.constant 1 : index
    %c0_155 = arith.constant 0 : index
    %c0_156 = arith.constant 0 : index
    %295 = vector.load %arg12[%c0_153, %c1_154, %c0_155, %c0_156] : memref<1x2x1x32xf32, #tpu.memory_space<vmem>>, vector<1x1x1x32xf32>
    %296 = vector.shape_cast %295 : vector<1x1x1x32xf32> to vector<1x32xf32>
    %297 = vector.broadcast %296 : vector<1x32xf32> to vector<16x32xf32>
    %298 = arith.addf %294, %297 : vector<16x32xf32>
    %299 = arith.addf %298, %269 : vector<16x32xf32>
    %c0_157 = arith.constant 0 : index
    %c1_158 = arith.constant 1 : index
    %c0_159 = arith.constant 0 : index
    %c0_160 = arith.constant 0 : index
    %300 = vector.load %arg15[%c0_157, %c1_158, %c0_159, %c0_160] : memref<1x2x1x32xf32, #tpu.memory_space<vmem>>, vector<1x1x1x32xf32>
    %301 = vector.shape_cast %300 : vector<1x1x1x32xf32> to vector<1x32xf32>
    %c0_161 = arith.constant 0 : index
    %c1_162 = arith.constant 1 : index
    %c0_163 = arith.constant 0 : index
    %c0_164 = arith.constant 0 : index
    %302 = vector.load %arg16[%c0_161, %c1_162, %c0_163, %c0_164] : memref<1x2x1x32xf32, #tpu.memory_space<vmem>>, vector<1x1x1x32xf32>
    %303 = vector.shape_cast %302 : vector<1x1x1x32xf32> to vector<1x32xf32>
    %cst_165 = arith.constant dense<0.000000e+00> : vector<16xf32>
    %304 = vector.multi_reduction <add>, %299, %cst_165 [1] : vector<16x32xf32> to vector<16xf32>
    %305 = vector.shape_cast %304 : vector<16xf32> to vector<16x1xf32>
    %cst_166 = arith.constant 3.200000e+01 : f32
    %306 = vector.broadcast %cst_166 : f32 to vector<16x1xf32>
    %307 = arith.divf %305, %306 : vector<16x1xf32>
    %308 = vector.broadcast %307 : vector<16x1xf32> to vector<16x32xf32>
    %309 = arith.subf %299, %308 : vector<16x32xf32>
    %310 = arith.mulf %309, %309 : vector<16x32xf32>
    %cst_167 = arith.constant dense<0.000000e+00> : vector<16xf32>
    %311 = vector.multi_reduction <add>, %310, %cst_167 [1] : vector<16x32xf32> to vector<16xf32>
    %312 = vector.shape_cast %311 : vector<16xf32> to vector<16x1xf32>
    %cst_168 = arith.constant 3.200000e+01 : f32
    %313 = vector.broadcast %cst_168 : f32 to vector<16x1xf32>
    %314 = arith.divf %312, %313 : vector<16x1xf32>
    %cst_169 = arith.constant 9.99999974E-6 : f32
    %315 = vector.broadcast %cst_169 : f32 to vector<16x1xf32>
    %316 = arith.addf %314, %315 : vector<16x1xf32>
    %317 = math.rsqrt %316 : vector<16x1xf32>
    %318 = vector.broadcast %317 : vector<16x1xf32> to vector<16x32xf32>
    %319 = arith.mulf %309, %318 : vector<16x32xf32>
    %320 = vector.broadcast %301 : vector<1x32xf32> to vector<16x32xf32>
    %321 = arith.mulf %319, %320 : vector<16x32xf32>
    %322 = vector.broadcast %303 : vector<1x32xf32> to vector<16x32xf32>
    %323 = arith.addf %321, %322 : vector<16x32xf32>
    %c0_170 = arith.constant 0 : index
    %c0_171 = arith.constant 0 : index
    %c0_172 = arith.constant 0 : index
    %324 = vector.load %arg17[%c0_170, %c0_171, %c0_172] : memref<1x16x32xf32, #tpu.memory_space<vmem>>, vector<1x16x32xf32>
    %325 = vector.shape_cast %324 : vector<1x16x32xf32> to vector<16x32xf32>
    %326 = vector.shape_cast %323 : vector<16x32xf32> to vector<1x16x32xf32>
    tpu.vector_store %arg17[%c0_170, %c0_171, %c0_172], %326 {strides = array<i32>} : memref<1x16x32xf32, #tpu.memory_space<vmem>>, vector<1x16x32xf32>,
    return
  }
  func.func @transform_0(%arg0: i32) -> (i32, i32, i32) {
    %c0_i32 = arith.constant 0 : i32
    %c0_i32_0 = arith.constant 0 : i32
    %c0_i32_1 = arith.constant 0 : i32
    return %arg0, %c0_i32, %c0_i32_0 : i32, i32, i32
  }
  func.func @transform_1(%arg0: i32) -> (i32, i32, i32) {
    %c0_i32 = arith.constant 0 : i32
    %c0_i32_0 = arith.constant 0 : i32
    %c0_i32_1 = arith.constant 0 : i32
    return %arg0, %c0_i32, %c0_i32_0 : i32, i32, i32
  }
  func.func @transform_2(%arg0: i32) -> (i32, i32, i32) {
    %c0_i32 = arith.constant 0 : i32
    %c0_i32_0 = arith.constant 0 : i32
    %c0_i32_1 = arith.constant 0 : i32
    return %arg0, %c0_i32, %c0_i32_0 : i32, i32, i32
  }
  func.func @transform_3(%arg0: i32) -> (i32, i32, i32) {
    %c0_i32 = arith.constant 0 : i32
    %c0_i32_0 = arith.constant 0 : i32
    %c0_i32_1 = arith.constant 0 : i32
    return %arg0, %c0_i32, %c0_i32_0 : i32, i32, i32
  }
  func.func @transform_4(%arg0: i32) -> (i32, i32, i32, i32) {
    %c0_i32 = arith.constant 0 : i32
    %c0_i32_0 = arith.constant 0 : i32
    %c0_i32_1 = arith.constant 0 : i32
    %c0_i32_2 = arith.constant 0 : i32
    return %arg0, %c0_i32, %c0_i32_0, %c0_i32_1 : i32, i32, i32, i32
  }
  func.func @transform_5(%arg0: i32) -> (i32, i32, i32, i32) {
    %c0_i32 = arith.constant 0 : i32
    %c0_i32_0 = arith.constant 0 : i32
    %c0_i32_1 = arith.constant 0 : i32
    %c0_i32_2 = arith.constant 0 : i32
    return %arg0, %c0_i32, %c0_i32_0, %c0_i32_1 : i32, i32, i32, i32
  }
  func.func @transform_6(%arg0: i32) -> (i32, i32, i32, i32) {
    %c0_i32 = arith.constant 0 : i32
    %c0_i32_0 = arith.constant 0 : i32
    %c0_i32_1 = arith.constant 0 : i32
    %c0_i32_2 = arith.constant 0 : i32
    return %arg0, %c0_i32, %c0_i32_0, %c0_i32_1 : i32, i32, i32, i32
  }
  func.func @transform_7(%arg0: i32) -> (i32, i32, i32, i32) {
    %c0_i32 = arith.constant 0 : i32
    %c0_i32_0 = arith.constant 0 : i32
    %c0_i32_1 = arith.constant 0 : i32
    %c0_i32_2 = arith.constant 0 : i32
    return %arg0, %c0_i32, %c0_i32_0, %c0_i32_1 : i32, i32, i32, i32
  }
  func.func @transform_8(%arg0: i32) -> (i32, i32, i32, i32) {
    %c0_i32 = arith.constant 0 : i32
    %c0_i32_0 = arith.constant 0 : i32
    %c0_i32_1 = arith.constant 0 : i32
    %c0_i32_2 = arith.constant 0 : i32
    return %arg0, %c0_i32, %c0_i32_0, %c0_i32_1 : i32, i32, i32, i32
  }
  func.func @transform_9(%arg0: i32) -> (i32, i32, i32, i32) {
    %c0_i32 = arith.constant 0 : i32
    %c0_i32_0 = arith.constant 0 : i32
    %c0_i32_1 = arith.constant 0 : i32
    %c0_i32_2 = arith.constant 0 : i32
    return %arg0, %c0_i32, %c0_i32_0, %c0_i32_1 : i32, i32, i32, i32
  }
  func.func @transform_10(%arg0: i32) -> (i32, i32, i32, i32) {
    %c0_i32 = arith.constant 0 : i32
    %c0_i32_0 = arith.constant 0 : i32
    %c0_i32_1 = arith.constant 0 : i32
    %c0_i32_2 = arith.constant 0 : i32
    return %arg0, %c0_i32, %c0_i32_0, %c0_i32_1 : i32, i32, i32, i32
  }
  func.func @transform_11(%arg0: i32) -> (i32, i32, i32, i32) {
    %c0_i32 = arith.constant 0 : i32
    %c0_i32_0 = arith.constant 0 : i32
    %c0_i32_1 = arith.constant 0 : i32
    %c0_i32_2 = arith.constant 0 : i32
    return %arg0, %c0_i32, %c0_i32_0, %c0_i32_1 : i32, i32, i32, i32
  }
  func.func @transform_12(%arg0: i32) -> (i32, i32, i32, i32) {
    %c0_i32 = arith.constant 0 : i32
    %c0_i32_0 = arith.constant 0 : i32
    %c0_i32_1 = arith.constant 0 : i32
    %c0_i32_2 = arith.constant 0 : i32
    return %arg0, %c0_i32, %c0_i32_0, %c0_i32_1 : i32, i32, i32, i32
  }
  func.func @transform_13(%arg0: i32) -> (i32, i32, i32, i32) {
    %c0_i32 = arith.constant 0 : i32
    %c0_i32_0 = arith.constant 0 : i32
    %c0_i32_1 = arith.constant 0 : i32
    %c0_i32_2 = arith.constant 0 : i32
    return %arg0, %c0_i32, %c0_i32_0, %c0_i32_1 : i32, i32, i32, i32
  }
  func.func @transform_14(%arg0: i32) -> (i32, i32, i32, i32) {
    %c0_i32 = arith.constant 0 : i32
    %c0_i32_0 = arith.constant 0 : i32
    %c0_i32_1 = arith.constant 0 : i32
    %c0_i32_2 = arith.constant 0 : i32
    return %arg0, %c0_i32, %c0_i32_0, %c0_i32_1 : i32, i32, i32, i32
  }
  func.func @transform_15(%arg0: i32) -> (i32, i32, i32, i32) {
    %c0_i32 = arith.constant 0 : i32
    %c0_i32_0 = arith.constant 0 : i32
    %c0_i32_1 = arith.constant 0 : i32
    %c0_i32_2 = arith.constant 0 : i32
    return %arg0, %c0_i32, %c0_i32_0, %c0_i32_1 : i32, i32, i32, i32
  }
  func.func @transform_16(%arg0: i32) -> (i32, i32, i32) {
    %c0_i32 = arith.constant 0 : i32
    %c0_i32_0 = arith.constant 0 : i32
    %c0_i32_1 = arith.constant 0 : i32
    return %arg0, %c0_i32, %c0_i32_0 : i32, i32, i32
  }
}

</mosaic_0001>

<llo_original>
// kernel: _encode_stacked.1
$region0: #{_encode_stacked.1}
  #allocation0 [shape = 'u32[]', space=smem, size = 0x4, offset = 0x4, fixed_abs, tag = 'smem constant byte address 0x4 - core index']
  #allocation1 [shape = 'u32[144,128]{1,0:T(1,128)}', space=vmem, size = 0x12000, scoped, tag = 'internal scratch']
  %s0 = inlined_call_operand.vmem [shape: f32[2,16,32], index: 0, kind: input, shape index: {}]
  %s1 = inlined_call_operand.vmem [shape: f32[2,16,16], index: 1, kind: input, shape index: {}]
  %s2 = inlined_call_operand.vmem [shape: f32[2,1,32], index: 2, kind: input, shape index: {}]
  %s3 = inlined_call_operand.vmem [shape: f32[2,1,32], index: 3, kind: input, shape index: {}]
  %s4 = inlined_call_operand.vmem [shape: bf16[2,2,32,96], index: 4, kind: input, shape index: {}]
  %s5 = inlined_call_operand.vmem [shape: f32[2,2,1,96], index: 5, kind: input, shape index: {}]
  %s6 = inlined_call_operand.vmem [shape: bf16[2,2,32,32], index: 6, kind: input, shape index: {}]
  %s7 = inlined_call_operand.vmem [shape: f32[2,2,1,32], index: 7, kind: input, shape index: {}]
  %s8 = inlined_call_operand.vmem [shape: bf16[2,2,32,64], index: 8, kind: input, shape index: {}]
  %s9 = inlined_call_operand.vmem [shape: f32[2,2,1,64], index: 9, kind: input, shape index: {}]
  %s10 = inlined_call_operand.vmem [shape: bf16[2,2,64,32], index: 10, kind: input, shape index: {}]
  %s11 = inlined_call_operand.vmem [shape: f32[2,2,1,32], index: 11, kind: input, shape index: {}]
  %s12 = inlined_call_operand.vmem [shape: f32[2,2,1,32], index: 12, kind: input, shape index: {}]
  %s13 = inlined_call_operand.vmem [shape: f32[2,2,1,32], index: 13, kind: input, shape index: {}]
  %s14 = inlined_call_operand.vmem [shape: f32[2,2,1,32], index: 14, kind: input, shape index: {}]
  %s15 = inlined_call_operand.vmem [shape: f32[2,2,1,32], index: 15, kind: input, shape index: {}]
  %s16 = inlined_call_operand.vmem [shape: f32[2,16,32], index: 16, kind: output, shape index: {}]
  %s17 = sld [smem:[#allocation0]]
  $region97: #{_encode_stacked.1} parent=0
    _
  %s19 = ssub.s32 1, %s17
  %s20 = scalar_select 0, %s19, %s17
  loop: start=0, step=1, limit=4
  $region2: #{_encode_stacked.1} parent=0 // loop_pre_header
    _
  $region3: #{_encode_stacked.1} parent=0 // loop_header
    %s22 = sphi 0, %s26
    %p23 = scmp.ge.s32.totalorder %s22, 4
    %s32 = sphi 0, %s34
    %s35 = sphi 0, %s32
    %s36 = sphi 0, %s35
    %s52 = sphi 0, %s36
    %s58 = sphi 0, %s60
    %s61 = sphi 0, %s58
    %s62 = sphi 0, %s61
    %s78 = sphi 0, %s62
    %s84 = sphi 0, %s86
    %s87 = sphi 0, %s84
    %s88 = sphi 0, %s87
    %s104 = sphi 0, %s88
    %s110 = sphi 0, %s112
    %s113 = sphi 0, %s110
    %s114 = sphi 0, %s113
    %s130 = sphi 0, %s114
    %s136 = sphi 0, %s138
    %s139 = sphi 0, %s136
    %s140 = sphi 0, %s139
    %s156 = sphi 0, %s140
    %s162 = sphi 0, %s164
    %s165 = sphi 0, %s162
    %s166 = sphi 0, %s165
    %s182 = sphi 0, %s166
    %s188 = sphi 0, %s190
    %s191 = sphi 0, %s188
    %s192 = sphi 0, %s191
    %s208 = sphi 0, %s192
    %s214 = sphi 0, %s216
    %s217 = sphi 0, %s214
    %s218 = sphi 0, %s217
    %s234 = sphi 0, %s218
    %s240 = sphi 0, %s242
    %s243 = sphi 0, %s240
    %s244 = sphi 0, %s243
    %s260 = sphi 0, %s244
    %s266 = sphi 0, %s268
    %s269 = sphi 0, %s266
    %s270 = sphi 0, %s269
    %s286 = sphi 0, %s270
    %s292 = sphi 0, %s294
    %s295 = sphi 0, %s292
    %s296 = sphi 0, %s295
    %s312 = sphi 0, %s296
    %s318 = sphi 0, %s320
    %s321 = sphi 0, %s318
    %s322 = sphi 0, %s321
    %s338 = sphi 0, %s322
    %s344 = sphi 0, %s346
    %s347 = sphi 0, %s344
    %s348 = sphi 0, %s347
    %s364 = sphi 0, %s348
    %s370 = sphi 0, %s372
    %s373 = sphi 0, %s370
    %s374 = sphi 0, %s373
    %s390 = sphi 0, %s374
    %s396 = sphi 0, %s398
    %s399 = sphi 0, %s396
    %s400 = sphi 0, %s399
    %s416 = sphi 0, %s400
    %s422 = sphi 0, %s424
    %s425 = sphi 0, %s422
    %s426 = sphi 0, %s425
    %s442 = sphi 0, %s426
    %s448 = sphi 0, %s450
    %s451 = sphi 0, %s448
    %s452 = sphi 0, %s451
    %s468 = sphi 0, %s452
  $region4: #{_encode_stacked.1} parent=0 // loop_header_branch
    %25 = sbr.rel (%p23) target = $region8
  $region5: #{_encode_stacked.1} parent=0 // loop_body
    %s27 = ssub.s32 %s22, 1
    %s28 = ssub.s32 %s22, 2
    %s29 = sadd.s32 %s22, 1
    %s30 = ssub.s32 %s22, %s29
    %p31 = scmp.eq.s32.totalorder %s30, 0
    %s33 = sadd.s32 %s32, 1
    %s34 = scalar_select %p31, %s32, %s33
    %p37 = pneg %p31
    %p38 = scmp.eq.s32.totalorder %s22, 1
    %p39 = por %p37, %p38
    %p40 = scmp.ne.s32.totalorder %s32, %s35
    %p41 = scmp.eq.s32.totalorder %s22, 0
    %p42 = por %p40, %p41
    %p43 = scmp.ne.s32.totalorder %s32, %s35
    %p44 = scmp.eq.s32.totalorder %s27, 1
    %p45 = por %p43, %p44
    %p46 = scmp.ne.s32.totalorder %s35, %s36
    %p47 = scmp.eq.s32.totalorder %s27, 0
    %p48 = por %p46, %p47
    %p49 = scmp.ne.s32.totalorder %s35, %s36
    %p50 = scmp.eq.s32.totalorder %s28, 1
    %p51 = por %p49, %p50
    %p53 = scmp.ne.s32.totalorder %s36, %s52
    %p54 = scmp.eq.s32.totalorder %s28, 0
    %p55 = por %p53, %p54
    %s56 = ssub.s32 %s22, %s29
    %p57 = scmp.eq.s32.totalorder %s56, 0
    %s59 = sadd.s32 %s58, 1
    %s60 = scalar_select %p57, %s58, %s59
    %p63 = pneg %p57
    %p64 = scmp.eq.s32.totalorder %s22, 1
    %p65 = por %p63, %p64
    %p66 = scmp.ne.s32.totalorder %s58, %s61
    %p67 = scmp.eq.s32.totalorder %s22, 0
    %p68 = por %p66, %p67
    %p69 = scmp.ne.s32.totalorder %s58, %s61
    %p70 = scmp.eq.s32.totalorder %s27, 1
    %p71 = por %p69, %p70
    %p72 = scmp.ne.s32.totalorder %s61, %s62
    %p73 = scmp.eq.s32.totalorder %s27, 0
    %p74 = por %p72, %p73
    %p75 = scmp.ne.s32.totalorder %s61, %s62
    %p76 = scmp.eq.s32.totalorder %s28, 1
    %p77 = por %p75, %p76
    %p79 = scmp.ne.s32.totalorder %s62, %s78
    %p80 = scmp.eq.s32.totalorder %s28, 0
    %p81 = por %p79, %p80
    %s82 = ssub.s32 %s22, %s29
    %p83 = scmp.eq.s32.totalorder %s82, 0
    %s85 = sadd.s32 %s84, 1
    %s86 = scalar_select %p83, %s84, %s85
    %p89 = pneg %p83
    %p90 = scmp.eq.s32.totalorder %s22, 1
    %p91 = por %p89, %p90
    %p92 = scmp.ne.s32.totalorder %s84, %s87
    %p93 = scmp.eq.s32.totalorder %s22, 0
    %p94 = por %p92, %p93
    %p95 = scmp.ne.s32.totalorder %s84, %s87
    %p96 = scmp.eq.s32.totalorder %s27, 1
    %p97 = por %p95, %p96
    %p98 = scmp.ne.s32.totalorder %s87, %s88
    %p99 = scmp.eq.s32.totalorder %s27, 0
    %p100 = por %p98, %p99
    %p101 = scmp.ne.s32.totalorder %s87, %s88
    %p102 = scmp.eq.s32.totalorder %s28, 1
    %p103 = por %p101, %p102
    %p105 = scmp.ne.s32.totalorder %s88, %s104
    %p106 = scmp.eq.s32.totalorder %s28, 0
    %p107 = por %p105, %p106
    %s108 = ssub.s32 %s22, %s29
    %p109 = scmp.eq.s32.totalorder %s108, 0
    %s111 = sadd.s32 %s110, 1
    %s112 = scalar_select %p109, %s110, %s111
    %p115 = pneg %p109
    %p116 = scmp.eq.s32.totalorder %s22, 1
    %p117 = por %p115, %p116
    %p118 = scmp.ne.s32.totalorder %s110, %s113
    %p119 = scmp.eq.s32.totalorder %s22, 0
    %p120 = por %p118, %p119
    %p121 = scmp.ne.s32.totalorder %s110, %s113
    %p122 = scmp.eq.s32.totalorder %s27, 1
    %p123 = por %p121, %p122
    %p124 = scmp.ne.s32.totalorder %s113, %s114
    %p125 = scmp.eq.s32.totalorder %s27, 0
    %p126 = por %p124, %p125
    %p127 = scmp.ne.s32.totalorder %s113, %s114
    %p128 = scmp.eq.s32.totalorder %s28, 1
    %p129 = por %p127, %p128
    %p131 = scmp.ne.s32.totalorder %s114, %s130
    %p132 = scmp.eq.s32.totalorder %s28, 0
    %p133 = por %p131, %p132
    %s134 = ssub.s32 %s22, %s29
    %p135 = scmp.eq.s32.totalorder %s134, 0
    %s137 = sadd.s32 %s136, 1
    %s138 = scalar_select %p135, %s136, %s137
    %p141 = pneg %p135
    %p142 = scmp.eq.s32.totalorder %s22, 1
    %p143 = por %p141, %p142
    %p144 = scmp.ne.s32.totalorder %s136, %s139
    %p145 = scmp.eq.s32.totalorder %s22, 0
    %p146 = por %p144, %p145
    %p147 = scmp.ne.s32.totalorder %s136, %s139
    %p148 = scmp.eq.s32.totalorder %s27, 1
    %p149 = por %p147, %p148
    %p150 = scmp.ne.s32.totalorder %s139, %s140
    %p151 = scmp.eq.s32.totalorder %s27, 0
    %p152 = por %p150, %p151
    %p153 = scmp.ne.s32.totalorder %s139, %s140
    %p154 = scmp.eq.s32.totalorder %s28, 1
    %p155 = por %p153, %p154
    %p157 = scmp.ne.s32.totalorder %s140, %s156
    %p158 = scmp.eq.s32.totalorder %s28, 0
    %p159 = por %p157, %p158
    %s160 = ssub.s32 %s22, %s29
    %p161 = scmp.eq.s32.totalorder %s160, 0
    %s163 = sadd.s32 %s162, 1
    %s164 = scalar_select %p161, %s162, %s163
    %p167 = pneg %p161
    %p168 = scmp.eq.s32.totalorder %s22, 1
    %p169 = por %p167, %p168
    %p170 = scmp.ne.s32.totalorder %s162, %s165
    %p171 = scmp.eq.s32.totalorder %s22, 0
    %p172 = por %p170, %p171
    %p173 = scmp.ne.s32.totalorder %s162, %s165
    %p174 = scmp.eq.s32.totalorder %s27, 1
    %p175 = por %p173, %p174
    %p176 = scmp.ne.s32.totalorder %s165, %s166
    %p177 = scmp.eq.s32.totalorder %s27, 0
    %p178 = por %p176, %p177
    %p179 = scmp.ne.s32.totalorder %s165, %s166
    %p180 = scmp.eq.s32.totalorder %s28, 1
    %p181 = por %p179, %p180
    %p183 = scmp.ne.s32.totalorder %s166, %s182
    %p184 = scmp.eq.s32.totalorder %s28, 0
    %p185 = por %p183, %p184
    %s186 = ssub.s32 %s22, %s29
    %p187 = scmp.eq.s32.totalorder %s186, 0
    %s189 = sadd.s32 %s188, 1
    %s190 = scalar_select %p187, %s188, %s189
    %p193 = pneg %p187
    %p194 = scmp.eq.s32.totalorder %s22, 1
    %p195 = por %p193, %p194
    %p196 = scmp.ne.s32.totalorder %s188, %s191
    %p197 = scmp.eq.s32.totalorder %s22, 0
    %p198 = por %p196, %p197
    %p199 = scmp.ne.s32.totalorder %s188, %s191
    %p200 = scmp.eq.s32.totalorder %s27, 1
    %p201 = por %p199, %p200
    %p202 = scmp.ne.s32.totalorder %s191, %s192
    %p203 = scmp.eq.s32.totalorder %s27, 0
    %p204 = por %p202, %p203
    %p205 = scmp.ne.s32.totalorder %s191, %s192
    %p206 = scmp.eq.s32.totalorder %s28, 1
    %p207 = por %p205, %p206
    %p209 = scmp.ne.s32.totalorder %s192, %s208
    %p210 = scmp.eq.s32.totalorder %s28, 0
    %p211 = por %p209, %p210
    %s212 = ssub.s32 %s22, %s29
    %p213 = scmp.eq.s32.totalorder %s212, 0
    %s215 = sadd.s32 %s214, 1
    %s216 = scalar_select %p213, %s214, %s215
    %p219 = pneg %p213
    %p220 = scmp.eq.s32.totalorder %s22, 1
    %p221 = por %p219, %p220
    %p222 = scmp.ne.s32.totalorder %s214, %s217
    %p223 = scmp.eq.s32.totalorder %s22, 0
    %p224 = por %p222, %p223
    %p225 = scmp.ne.s32.totalorder %s214, %s217
    %p226 = scmp.eq.s32.totalorder %s27, 1
    %p227 = por %p225, %p226
    %p228 = scmp.ne.s32.totalorder %s217, %s218
    %p229 = scmp.eq.s32.totalorder %s27, 0
    %p230 = por %p228, %p229
    %p231 = scmp.ne.s32.totalorder %s217, %s218
    %p232 = scmp.eq.s32.totalorder %s28, 1
    %p233 = por %p231, %p232
    %p235 = scmp.ne.s32.totalorder %s218, %s234
    %p236 = scmp.eq.s32.totalorder %s28, 0
    %p237 = por %p235, %p236
    %s238 = ssub.s32 %s22, %s29
    %p239 = scmp.eq.s32.totalorder %s238, 0
    %s241 = sadd.s32 %s240, 1
    %s242 = scalar_select %p239, %s240, %s241
    %p245 = pneg %p239
    %p246 = scmp.eq.s32.totalorder %s22, 1
    %p247 = por %p245, %p246
    %p248 = scmp.ne.s32.totalorder %s240, %s243
    %p249 = scmp.eq.s32.totalorder %s22, 0
    %p250 = por %p248, %p249
    %p251 = scmp.ne.s32.totalorder %s240, %s243
    %p252 = scmp.eq.s32.totalorder %s27, 1
    %p253 = por %p251, %p252
    %p254 = scmp.ne.s32.totalorder %s243, %s244
    %p255 = scmp.eq.s32.totalorder %s27, 0
    %p256 = por %p254, %p255
    %p257 = scmp.ne.s32.totalorder %s243, %s244
    %p258 = scmp.eq.s32.totalorder %s28, 1
    %p259 = por %p257, %p258
    %p261 = scmp.ne.s32.totalorder %s244, %s260
    %p262 = scmp.eq.s32.totalorder %s28, 0
    %p263 = por %p261, %p262
    %s264 = ssub.s32 %s22, %s29
    %p265 = scmp.eq.s32.totalorder %s264, 0
    %s267 = sadd.s32 %s266, 1
    %s268 = scalar_select %p265, %s266, %s267
    %p271 = pneg %p265
    %p272 = scmp.eq.s32.totalorder %s22, 1
    %p273 = por %p271, %p272
    %p274 = scmp.ne.s32.totalorder %s266, %s269
    %p275 = scmp.eq.s32.totalorder %s22, 0
    %p276 = por %p274, %p275
    %p277 = scmp.ne.s32.totalorder %s266, %s269
    %p278 = scmp.eq.s32.totalorder %s27, 1
    %p279 = por %p277, %p278
    %p280 = scmp.ne.s32.totalorder %s269, %s270
    %p281 = scmp.eq.s32.totalorder %s27, 0
    %p282 = por %p280, %p281
    %p283 = scmp.ne.s32.totalorder %s269, %s270
    %p284 = scmp.eq.s32.totalorder %s28, 1
    %p285 = por %p283, %p284
    %p287 = scmp.ne.s32.totalorder %s270, %s286
    %p288 = scmp.eq.s32.totalorder %s28, 0
    %p289 = por %p287, %p288
    %s290 = ssub.s32 %s22, %s29
    %p291 = scmp.eq.s32.totalorder %s290, 0
    %s293 = sadd.s32 %s292, 1
    %s294 = scalar_select %p291, %s292, %s293
    %p297 = pneg %p291
    %p298 = scmp.eq.s32.totalorder %s22, 1
    %p299 = por %p297, %p298
    %p300 = scmp.ne.s32.totalorder %s292, %s295
    %p301 = scmp.eq.s32.totalorder %s22, 0
    %p302 = por %p300, %p301
    %p303 = scmp.ne.s32.totalorder %s292, %s295
    %p304 = scmp.eq.s32.totalorder %s27, 1
    %p305 = por %p303, %p304
    %p306 = scmp.ne.s32.totalorder %s295, %s296
    %p307 = scmp.eq.s32.totalorder %s27, 0
    %p308 = por %p306, %p307
    %p309 = scmp.ne.s32.totalorder %s295, %s296
    %p310 = scmp.eq.s32.totalorder %s28, 1
    %p311 = por %p309, %p310
    %p313 = scmp.ne.s32.totalorder %s296, %s312
    %p314 = scmp.eq.s32.totalorder %s28, 0
    %p315 = por %p313, %p314
    %s316 = ssub.s32 %s22, %s29
    %p317 = scmp.eq.s32.totalorder %s316, 0
    %s319 = sadd.s32 %s318, 1
    %s320 = scalar_select %p317, %s318, %s319
    %p323 = pneg %p317
    %p324 = scmp.eq.s32.totalorder %s22, 1
    %p325 = por %p323, %p324
    %p326 = scmp.ne.s32.totalorder %s318, %s321
    %p327 = scmp.eq.s32.totalorder %s22, 0
    %p328 = por %p326, %p327
    %p329 = scmp.ne.s32.totalorder %s318, %s321
    %p330 = scmp.eq.s32.totalorder %s27, 1
    %p331 = por %p329, %p330
    %p332 = scmp.ne.s32.totalorder %s321, %s322
    %p333 = scmp.eq.s32.totalorder %s27, 0
    %p334 = por %p332, %p333
    %p335 = scmp.ne.s32.totalorder %s321, %s322
    %p336 = scmp.eq.s32.totalorder %s28, 1
    %p337 = por %p335, %p336
    %p339 = scmp.ne.s32.totalorder %s322, %s338
    %p340 = scmp.eq.s32.totalorder %s28, 0
    %p341 = por %p339, %p340
    %s342 = ssub.s32 %s22, %s29
    %p343 = scmp.eq.s32.totalorder %s342, 0
    %s345 = sadd.s32 %s344, 1
    %s346 = scalar_select %p343, %s344, %s345
    %p349 = pneg %p343
    %p350 = scmp.eq.s32.totalorder %s22, 1
    %p351 = por %p349, %p350
    %p352 = scmp.ne.s32.totalorder %s344, %s347
    %p353 = scmp.eq.s32.totalorder %s22, 0
    %p354 = por %p352, %p353
    %p355 = scmp.ne.s32.totalorder %s344, %s347
    %p356 = scmp.eq.s32.totalorder %s27, 1
    %p357 = por %p355, %p356
    %p358 = scmp.ne.s32.totalorder %s347, %s348
    %p359 = scmp.eq.s32.totalorder %s27, 0
    %p360 = por %p358, %p359
    %p361 = scmp.ne.s32.totalorder %s347, %s348
    %p362 = scmp.eq.s32.totalorder %s28, 1
    %p363 = por %p361, %p362
    %p365 = scmp.ne.s32.totalorder %s348, %s364
    %p366 = scmp.eq.s32.totalorder %s28, 0
    %p367 = por %p365, %p366
    %s368 = ssub.s32 %s22, %s29
    %p369 = scmp.eq.s32.totalorder %s368, 0
    %s371 = sadd.s32 %s370, 1
    %s372 = scalar_select %p369, %s370, %s371
    %p375 = pneg %p369
    %p376 = scmp.eq.s32.totalorder %s22, 1
    %p377 = por %p375, %p376
    %p378 = scmp.ne.s32.totalorder %s370, %s373
    %p379 = scmp.eq.s32.totalorder %s22, 0
    %p380 = por %p378, %p379
    %p381 = scmp.ne.s32.totalorder %s370, %s373
    %p382 = scmp.eq.s32.totalorder %s27, 1
    %p383 = por %p381, %p382
    %p384 = scmp.ne.s32.totalorder %s373, %s374
    %p385 = scmp.eq.s32.totalorder %s27, 0
    %p386 = por %p384, %p385
    %p387 = scmp.ne.s32.totalorder %s373, %s374
    %p388 = scmp.eq.s32.totalorder %s28, 1
    %p389 = por %p387, %p388
    %p391 = scmp.ne.s32.totalorder %s374, %s390
    %p392 = scmp.eq.s32.totalorder %s28, 0
    %p393 = por %p391, %p392
    %s394 = ssub.s32 %s22, %s29
    %p395 = scmp.eq.s32.totalorder %s394, 0
    %s397 = sadd.s32 %s396, 1
    %s398 = scalar_select %p395, %s396, %s397
    %p401 = pneg %p395
    %p402 = scmp.eq.s32.totalorder %s22, 1
    %p403 = por %p401, %p402
    %p404 = scmp.ne.s32.totalorder %s396, %s399
    %p405 = scmp.eq.s32.totalorder %s22, 0
    %p406 = por %p404, %p405
    %p407 = scmp.ne.s32.totalorder %s396, %s399
    %p408 = scmp.eq.s32.totalorder %s27, 1
    %p409 = por %p407, %p408
    %p410 = scmp.ne.s32.totalorder %s399, %s400
    %p411 = scmp.eq.s32.totalorder %s27, 0
    %p412 = por %p410, %p411
    %p413 = scmp.ne.s32.totalorder %s399, %s400
    %p414 = scmp.eq.s32.totalorder %s28, 1
    %p415 = por %p413, %p414
    %p417 = scmp.ne.s32.totalorder %s400, %s416
    %p418 = scmp.eq.s32.totalorder %s28, 0
    %p419 = por %p417, %p418
    %s420 = ssub.s32 %s22, %s29
    %p421 = scmp.eq.s32.totalorder %s420, 0
    %s423 = sadd.s32 %s422, 1
    %s424 = scalar_select %p421, %s422, %s423
    %p427 = pneg %p421
    %p428 = scmp.eq.s32.totalorder %s22, 1
    %p429 = por %p427, %p428
    %p430 = scmp.ne.s32.totalorder %s422, %s425
    %p431 = scmp.eq.s32.totalorder %s22, 0
    %p432 = por %p430, %p431
    %p433 = scmp.ne.s32.totalorder %s422, %s425
    %p434 = scmp.eq.s32.totalorder %s27, 1
    %p435 = por %p433, %p434
    %p436 = scmp.ne.s32.totalorder %s425, %s426
    %p437 = scmp.eq.s32.totalorder %s27, 0
    %p438 = por %p436, %p437
    %p439 = scmp.ne.s32.totalorder %s425, %s426
    %p440 = scmp.eq.s32.totalorder %s28, 1
    %p441 = por %p439, %p440
    %p443 = scmp.ne.s32.totalorder %s426, %s442
    %p444 = scmp.eq.s32.totalorder %s28, 0
    %p445 = por %p443, %p444
    %s446 = ssub.s32 %s22, %s29
    %p447 = scmp.eq.s32.totalorder %s446, 0
    %s449 = sadd.s32 %s448, 1
    %s450 = scalar_select %p447, %s448, %s449
    %p453 = pneg %p447
    %p454 = scmp.eq.s32.totalorder %s22, 1
    %p455 = por %p453, %p454
    %p456 = scmp.ne.s32.totalorder %s448, %s451
    %p457 = scmp.eq.s32.totalorder %s22, 0
    %p458 = por %p456, %p457
    %p459 = scmp.ne.s32.totalorder %s448, %s451
    %p460 = scmp.eq.s32.totalorder %s27, 1
    %p461 = por %p459, %p460
    %p462 = scmp.ne.s32.totalorder %s451, %s452
    %p463 = scmp.eq.s32.totalorder %s27, 0
    %p464 = por %p462, %p463
    %p465 = scmp.ne.s32.totalorder %s451, %s452
    %p466 = scmp.eq.s32.totalorder %s28, 1
    %p467 = por %p465, %p466
    %p469 = scmp.ne.s32.totalorder %s452, %s468
    %p470 = scmp.eq.s32.totalorder %s28, 0
    %p471 = por %p469, %p470
    %p472 = scmp.le.s32.totalorder 1, %s22
    %p473 = scmp.lt.s32.totalorder %s22, 3
    %p474 = pnand %p472, %p473
    %p475 = pneg %p474
    // Predicated region
    $region9: #{_encode_stacked.1} parent=5 // pred_check
      _
    $region10: #{_encode_stacked.1} parent=5 // pred_check_branch
      %477 = sbr.rel (%p474) target = $region12
    $region11: #{_encode_stacked.1} parent=5 // pred_region
      %s478 = ssub.s32 %s22, 1
    $region12: #{_encode_stacked.1} parent=5 // pred_fallthru
      _
    %p479 = scmp.lt.s32.totalorder %s22, 2
    // Predicated region
    $region13: #{_encode_stacked.1} parent=5 // pred_check
      %p480 = pneg %p479
    $region14: #{_encode_stacked.1} parent=5 // pred_check_branch
      %482 = sbr.rel (%p480) target = $region16
    $region15: #{_encode_stacked.1} parent=5 // pred_region
      // Predicated region
      $region17: #{_encode_stacked.1} parent=15 // pred_check
        %p483 = pneg %p42
      $region18: #{_encode_stacked.1} parent=15 // pred_check_branch
        %485 = sbr.rel (%p483) target = $region20
      $region19: #{_encode_stacked.1} parent=15 // pred_region
        %p486 = scmp.lt.s32.totalorder %s22, 1
        %s487 = scalar_select %p486, %s22, 1
        %s488 = smul.addr %s487, 2
        %s489 = smul.addr %s488, 8
        %s490 = scalar_lea.vmem %s0, %s489
      $region20: #{_encode_stacked.1} parent=15 // pred_fallthru
        _
      // Predicated region
      $region21: #{_encode_stacked.1} parent=15 // pred_check
        %p491 = pneg %p68
      $region22: #{_encode_stacked.1} parent=15 // pred_check_branch
        %493 = sbr.rel (%p491) target = $region24
      $region23: #{_encode_stacked.1} parent=15 // pred_region
        %p494 = scmp.lt.s32.totalorder %s22, 1
        %s495 = scalar_select %p494, %s22, 1
        %s496 = smul.addr %s495, 2
        %s497 = smul.addr %s496, 8
        %s498 = scalar_lea.vmem %s1, %s497
      $region24: #{_encode_stacked.1} parent=15 // pred_fallthru
        _
      // Predicated region
      $region25: #{_encode_stacked.1} parent=15 // pred_check
        %p499 = pneg %p94
      $region26: #{_encode_stacked.1} parent=15 // pred_check_branch
        %501 = sbr.rel (%p499) target = $region28
      $region27: #{_encode_stacked.1} parent=15 // pred_region
        %p502 = scmp.lt.s32.totalorder %s22, 1
        %s503 = scalar_select %p502, %s22, 1
        %s504 = scalar_lea.vmem %s2, %s503
      $region28: #{_encode_stacked.1} parent=15 // pred_fallthru
        _
      // Predicated region
      $region29: #{_encode_stacked.1} parent=15 // pred_check
        %p505 = pneg %p120
      $region30: #{_encode_stacked.1} parent=15 // pred_check_branch
        %507 = sbr.rel (%p505) target = $region32
      $region31: #{_encode_stacked.1} parent=15 // pred_region
        %p508 = scmp.lt.s32.totalorder %s22, 1
        %s509 = scalar_select %p508, %s22, 1
        %s510 = scalar_lea.vmem %s3, %s509
      $region32: #{_encode_stacked.1} parent=15 // pred_fallthru
        _
      // Predicated region
      $region33: #{_encode_stacked.1} parent=15 // pred_check
        %p511 = pneg %p146
      $region34: #{_encode_stacked.1} parent=15 // pred_check_branch
        %513 = sbr.rel (%p511) target = $region36
      $region35: #{_encode_stacked.1} parent=15 // pred_region
        %p514 = scmp.lt.s32.totalorder %s22, 1
        %s515 = scalar_select %p514, %s22, 1
        %s516 = smul.addr %s515, 8
        %s517 = smul.addr %s516, 4
        %s518 = scalar_lea.vmem %s4, %s517
      $region36: #{_encode_stacked.1} parent=15 // pred_fallthru
        _
      // Predicated region
      $region37: #{_encode_stacked.1} parent=15 // pred_check
        %p519 = pneg %p172
      $region38: #{_encode_stacked.1} parent=15 // pred_check_branch
        %521 = sbr.rel (%p519) target = $region40
      $region39: #{_encode_stacked.1} parent=15 // pred_region
        %p522 = scmp.lt.s32.totalorder %s22, 1
        %s523 = scalar_select %p522, %s22, 1
        %s524 = smul.addr %s523, 2
        %s525 = scalar_lea.vmem %s5, %s524
      $region40: #{_encode_stacked.1} parent=15 // pred_fallthru
        _
      // Predicated region
      $region41: #{_encode_stacked.1} parent=15 // pred_check
        %p526 = pneg %p198
      $region42: #{_encode_stacked.1} parent=15 // pred_check_branch
        %528 = sbr.rel (%p526) target = $region44
      $region43: #{_encode_stacked.1} parent=15 // pred_region
        %p529 = scmp.lt.s32.totalorder %s22, 1
        %s530 = scalar_select %p529, %s22, 1
        %s531 = smul.addr %s530, 8
        %s532 = smul.addr %s531, 4
        %s533 = scalar_lea.vmem %s6, %s532
      $region44: #{_encode_stacked.1} parent=15 // pred_fallthru
        _
      // Predicated region
      $region45: #{_encode_stacked.1} parent=15 // pred_check
        %p534 = pneg %p224
      $region46: #{_encode_stacked.1} parent=15 // pred_check_branch
        %536 = sbr.rel (%p534) target = $region48
      $region47: #{_encode_stacked.1} parent=15 // pred_region
        %p537 = scmp.lt.s32.totalorder %s22, 1
        %s538 = scalar_select %p537, %s22, 1
        %s539 = smul.addr %s538, 2
        %s540 = scalar_lea.vmem %s7, %s539
      $region48: #{_encode_stacked.1} parent=15 // pred_fallthru
        _
      // Predicated region
      $region49: #{_encode_stacked.1} parent=15 // pred_check
        %p541 = pneg %p250
      $region50: #{_encode_stacked.1} parent=15 // pred_check_branch
        %543 = sbr.rel (%p541) target = $region52
      $region51: #{_encode_stacked.1} parent=15 // pred_region
        %p544 = scmp.lt.s32.totalorder %s22, 1
        %s545 = scalar_select %p544, %s22, 1
        %s546 = smul.addr %s545, 8
        %s547 = smul.addr %s546, 4
        %s548 = scalar_lea.vmem %s8, %s547
      $region52: #{_encode_stacked.1} parent=15 // pred_fallthru
        _
      // Predicated region
      $region53: #{_encode_stacked.1} parent=15 // pred_check
        %p549 = pneg %p276
      $region54: #{_encode_stacked.1} parent=15 // pred_check_branch
        %551 = sbr.rel (%p549) target = $region56
      $region55: #{_encode_stacked.1} parent=15 // pred_region
        %p552 = scmp.lt.s32.totalorder %s22, 1
        %s553 = scalar_select %p552, %s22, 1
        %s554 = smul.addr %s553, 2
        %s555 = scalar_lea.vmem %s9, %s554
      $region56: #{_encode_stacked.1} parent=15 // pred_fallthru
        _
      // Predicated region
      $region57: #{_encode_stacked.1} parent=15 // pred_check
        %p556 = pneg %p302
      $region58: #{_encode_stacked.1} parent=15 // pred_check_branch
        %558 = sbr.rel (%p556) target = $region60
      $region59: #{_encode_stacked.1} parent=15 // pred_region
        %p559 = scmp.lt.s32.totalorder %s22, 1
        %s560 = scalar_select %p559, %s22, 1
        %s561 = smul.addr %s560, 16
        %s562 = smul.addr %s561, 4
        %s563 = scalar_lea.vmem %s10, %s562
      $region60: #{_encode_stacked.1} parent=15 // pred_fallthru
        _
      // Predicated region
      $region61: #{_encode_stacked.1} parent=15 // pred_check
        %p564 = pneg %p328
      $region62: #{_encode_stacked.1} parent=15 // pred_check_branch
        %566 = sbr.rel (%p564) target = $region64
      $region63: #{_encode_stacked.1} parent=15 // pred_region
        %p567 = scmp.lt.s32.totalorder %s22, 1
        %s568 = scalar_select %p567, %s22, 1
        %s569 = smul.addr %s568, 2
        %s570 = scalar_lea.vmem %s11, %s569
      $region64: #{_encode_stacked.1} parent=15 // pred_fallthru
        _
      // Predicated region
      $region65: #{_encode_stacked.1} parent=15 // pred_check
        %p571 = pneg %p354
      $region66: #{_encode_stacked.1} parent=15 // pred_check_branch
        %573 = sbr.rel (%p571) target = $region68
      $region67: #{_encode_stacked.1} parent=15 // pred_region
        %p574 = scmp.lt.s32.totalorder %s22, 1
        %s575 = scalar_select %p574, %s22, 1
        %s576 = smul.addr %s575, 2
        %s577 = scalar_lea.vmem %s12, %s576
      $region68: #{_encode_stacked.1} parent=15 // pred_fallthru
        _
      // Predicated region
      $region69: #{_encode_stacked.1} parent=15 // pred_check
        %p578 = pneg %p380
      $region70: #{_encode_stacked.1} parent=15 // pred_check_branch
        %580 = sbr.rel (%p578) target = $region72
      $region71: #{_encode_stacked.1} parent=15 // pred_region
        %p581 = scmp.lt.s32.totalorder %s22, 1
        %s582 = scalar_select %p581, %s22, 1
        %s583 = smul.addr %s582, 2
        %s584 = scalar_lea.vmem %s13, %s583
      $region72: #{_encode_stacked.1} parent=15 // pred_fallthru
        _
      // Predicated region
      $region73: #{_encode_stacked.1} parent=15 // pred_check
        %p585 = pneg %p406
      $region74: #{_encode_stacked.1} parent=15 // pred_check_branch
        %587 = sbr.rel (%p585) target = $region76
      $region75: #{_encode_stacked.1} parent=15 // pred_region
        %p588 = scmp.lt.s32.totalorder %s22, 1
        %s589 = scalar_select %p588, %s22, 1
        %s590 = smul.addr %s589, 2
        %s591 = scalar_lea.vmem %s14, %s590
      $region76: #{_encode_stacked.1} parent=15 // pred_fallthru
        _
      // Predicated region
      $region77: #{_encode_stacked.1} parent=15 // pred_check
        %p592 = pneg %p432
      $region78: #{_encode_stacked.1} parent=15 // pred_check_branch
        %594 = sbr.rel (%p592) target = $region80
      $region79: #{_encode_stacked.1} parent=15 // pred_region
        %p595 = scmp.lt.s32.totalorder %s22, 1
        %s596 = scalar_select %p595, %s22, 1
        %s597 = smul.addr %s596, 2
        %s598 = scalar_lea.vmem %s15, %s597
      $region80: #{_encode_stacked.1} parent=15 // pred_fallthru
        _
    $region16: #{_encode_stacked.1} parent=5 // pred_fallthru
      _
    %p599 = scmp.le.s32.totalorder 1, %s22
    %p600 = scmp.lt.s32.totalorder %s22, 3
    %p601 = pnand %p599, %p600
    %p602 = pneg %p601
    // Predicated region
    $region81: #{_encode_stacked.1} parent=5 // pred_check
      _
    $region82: #{_encode_stacked.1} parent=5 // pred_check_branch
      %604 = sbr.rel (%p601) target = $region84
    $region83: #{_encode_stacked.1} parent=5 // pred_region
      %s605 = ssub.s32 %s22, 1
      %p606 = scmp.lt.s32.totalorder %s27, 1
      %s607 = scalar_select %p606, %s27, 1
      %s608 = smul.addr %s607, 2
      %s609 = smul.addr %s608, 8
      %s610 = scalar_lea.vmem %s0, %s609
      %p611 = pneg %p48
      %p612 = pneg %p45
      %p613 = scmp.lt.s32.totalorder %s27, 1
      %s614 = scalar_select %p613, %s27, 1
      %s615 = smul.addr %s614, 2
      %s616 = smul.addr %s615, 8
      %s617 = scalar_lea.vmem %s1, %s616
      %p618 = pneg %p74
      %p619 = pneg %p71
      %p620 = scmp.lt.s32.totalorder %s27, 1
      %s621 = scalar_select %p620, %s27, 1
      %s622 = scalar_lea.vmem %s2, %s621
      %p623 = pneg %p100
      %p624 = pneg %p97
      %p625 = scmp.lt.s32.totalorder %s27, 1
      %s626 = scalar_select %p625, %s27, 1
      %s627 = scalar_lea.vmem %s3, %s626
      %p628 = pneg %p126
      %p629 = pneg %p123
      %p630 = scmp.lt.s32.totalorder %s27, 1
      %s631 = scalar_select %p630, %s27, 1
      %s632 = smul.addr %s631, 8
      %s633 = smul.addr %s632, 4
      %s634 = scalar_lea.vmem %s4, %s633
      %p635 = pneg %p152
      %p636 = pneg %p149
      %p637 = scmp.lt.s32.totalorder %s27, 1
      %s638 = scalar_select %p637, %s27, 1
      %s639 = smul.addr %s638, 2
      %s640 = scalar_lea.vmem %s5, %s639
      %p641 = pneg %p178
      %p642 = pneg %p175
      %p643 = scmp.lt.s32.totalorder %s27, 1
      %s644 = scalar_select %p643, %s27, 1
      %s645 = smul.addr %s644, 8
      %s646 = smul.addr %s645, 4
      %s647 = scalar_lea.vmem %s6, %s646
      %p648 = pneg %p204
      %p649 = pneg %p201
      %p650 = scmp.lt.s32.totalorder %s27, 1
      %s651 = scalar_select %p650, %s27, 1
      %s652 = smul.addr %s651, 2
      %s653 = scalar_lea.vmem %s7, %s652
      %p654 = pneg %p230
      %p655 = pneg %p227
      %p656 = scmp.lt.s32.totalorder %s27, 1
      %s657 = scalar_select %p656, %s27, 1
      %s658 = smul.addr %s657, 8
      %s659 = smul.addr %s658, 4
      %s660 = scalar_lea.vmem %s8, %s659
      %p661 = pneg %p256
      %p662 = pneg %p253
      %p663 = scmp.lt.s32.totalorder %s27, 1
      %s664 = scalar_select %p663, %s27, 1
      %s665 = smul.addr %s664, 2
      %s666 = scalar_lea.vmem %s9, %s665
      %p667 = pneg %p282
      %p668 = pneg %p279
      %p669 = scmp.lt.s32.totalorder %s27, 1
      %s670 = scalar_select %p669, %s27, 1
      %s671 = smul.addr %s670, 16
      %s672 = smul.addr %s671, 4
      %s673 = scalar_lea.vmem %s10, %s672
      %p674 = pneg %p308
      %p675 = pneg %p305
      %p676 = scmp.lt.s32.totalorder %s27, 1
      %s677 = scalar_select %p676, %s27, 1
      %s678 = smul.addr %s677, 2
      %s679 = scalar_lea.vmem %s11, %s678
      %p680 = pneg %p334
      %p681 = pneg %p331
      %p682 = scmp.lt.s32.totalorder %s27, 1
      %s683 = scalar_select %p682, %s27, 1
      %s684 = smul.addr %s683, 2
      %s685 = scalar_lea.vmem %s12, %s684
      %p686 = pneg %p360
      %p687 = pneg %p357
      %p688 = scmp.lt.s32.totalorder %s27, 1
      %s689 = scalar_select %p688, %s27, 1
      %s690 = smul.addr %s689, 2
      %s691 = scalar_lea.vmem %s13, %s690
      %p692 = pneg %p386
      %p693 = pneg %p383
      %p694 = scmp.lt.s32.totalorder %s27, 1
      %s695 = scalar_select %p694, %s27, 1
      %s696 = smul.addr %s695, 2
      %s697 = scalar_lea.vmem %s14, %s696
      %p698 = pneg %p412
      %p699 = pneg %p409
      %p700 = scmp.lt.s32.totalorder %s27, 1
      %s701 = scalar_select %p700, %s27, 1
      %s702 = smul.addr %s701, 2
      %s703 = scalar_lea.vmem %s15, %s702
      %p704 = pneg %p438
      %p705 = pneg %p435
      %p706 = pneg %p464
      %p707 = pneg %p461
      %p708 = scmp.lt.s32.totalorder %s27, 1
      %s709 = scalar_select %p708, %s27, 1
      %s710 = smul.addr %s709, 2
      %s711 = smul.addr %s710, 8
      %s712 = scalar_lea.vmem %s16, %s711
      %p713 = scmp.lt.s32.totalorder %s27, 1
      %s714 = scalar_select %p713, %s27, 1
      %s715 = smul.addr %s714, 2
      %s716 = smul.addr %s715, 8
      %s717 = scalar_lea.vmem %s0, %s716
      %p718 = scmp.lt.s32.totalorder %s27, 1
      %s719 = scalar_select %p718, %s27, 1
      %s720 = smul.addr %s719, 2
      %s721 = smul.addr %s720, 8
      %s722 = scalar_lea.vmem %s1, %s721
      %p723 = scmp.lt.s32.totalorder %s27, 1
      %s724 = scalar_select %p723, %s27, 1
      %s725 = scalar_lea.vmem %s2, %s724
      %p726 = scmp.lt.s32.totalorder %s27, 1
      %s727 = scalar_select %p726, %s27, 1
      %s728 = scalar_lea.vmem %s3, %s727
      %p729 = scmp.lt.s32.totalorder %s27, 1
      %s730 = scalar_select %p729, %s27, 1
      %s731 = smul.addr %s730, 8
      %s732 = smul.addr %s731, 4
      %s733 = scalar_lea.vmem %s4, %s732
      %p734 = scmp.lt.s32.totalorder %s27, 1
      %s735 = scalar_select %p734, %s27, 1
      %s736 = smul.addr %s735, 2
      %s737 = scalar_lea.vmem %s5, %s736
      %p738 = scmp.lt.s32.totalorder %s27, 1
      %s739 = scalar_select %p738, %s27, 1
      %s740 = smul.addr %s739, 8
      %s741 = smul.addr %s740, 4
      %s742 = scalar_lea.vmem %s6, %s741
      %p743 = scmp.lt.s32.totalorder %s27, 1
      %s744 = scalar_select %p743, %s27, 1
      %s745 = smul.addr %s744, 2
      %s746 = scalar_lea.vmem %s7, %s745
      %p747 = scmp.lt.s32.totalorder %s27, 1
      %s748 = scalar_select %p747, %s27, 1
      %s749 = smul.addr %s748, 8
      %s750 = smul.addr %s749, 4
      %s751 = scalar_lea.vmem %s8, %s750
      %p752 = scmp.lt.s32.totalorder %s27, 1
      %s753 = scalar_select %p752, %s27, 1
      %s754 = smul.addr %s753, 2
      %s755 = scalar_lea.vmem %s9, %s754
      %p756 = scmp.lt.s32.totalorder %s27, 1
      %s757 = scalar_select %p756, %s27, 1
      %s758 = smul.addr %s757, 16
      %s759 = smul.addr %s758, 4
      %s760 = scalar_lea.vmem %s10, %s759
      %p761 = scmp.lt.s32.totalorder %s27, 1
      %s762 = scalar_select %p761, %s27, 1
      %s763 = smul.addr %s762, 2
      %s764 = scalar_lea.vmem %s11, %s763
      %p765 = scmp.lt.s32.totalorder %s27, 1
      %s766 = scalar_select %p765, %s27, 1
      %s767 = smul.addr %s766, 2
      %s768 = scalar_lea.vmem %s12, %s767
      %p769 = scmp.lt.s32.totalorder %s27, 1
      %s770 = scalar_select %p769, %s27, 1
      %s771 = smul.addr %s770, 2
      %s772 = scalar_lea.vmem %s13, %s771
      %p773 = scmp.lt.s32.totalorder %s27, 1
      %s774 = scalar_select %p773, %s27, 1
      %s775 = smul.addr %s774, 2
      %s776 = scalar_lea.vmem %s14, %s775
      %p777 = scmp.lt.s32.totalorder %s27, 1
      %s778 = scalar_select %p777, %s27, 1
      %s779 = smul.addr %s778, 2
      %s780 = scalar_lea.vmem %s15, %s779
      %p781 = scmp.lt.s32.totalorder %s27, 1
      %s782 = scalar_select %p781, %s27, 1
      %s783 = smul.addr %s782, 2
      %s784 = smul.addr %s783, 8
      %s785 = scalar_lea.vmem %s16, %s784
      %v787 = vld [vmem:[%s722] sm:$0xff]
      %v788 = vld [vmem:[%s722 + $0x8] sm:$0xff]
      %v789 = vld [vmem:[%s717] sm:$0xff]
      %v790 = vld [vmem:[%s717 + $0x8] sm:$0xff]
      %v791 = vld [vmem:[%s725] sm:$0x1]
      %v792 = vld [vmem:[%s728] sm:$0x1]
      %vm793 = vcmask 261120
      %v794 = vsel %vm793, %v789, 0.0
      %795 = vadd.xlane.f32.xlu0 %v794
      %v796 = vpop.xlane.xlu0 %795
      %v797 = vsel %vm793, %v790, 0.0
      %798 = vadd.xlane.f32.xlu0 %v797
      %v799 = vpop.xlane.xlu0 %798
      %v800 = vrcp.pop 32.0
      %v801 = vmul.f32 %v796, %v800
      %v802 = vmul.f32 %v799, %v800
      %v803 = vsub.f32 %v789, %v801
      %v804 = vsub.f32 %v790, %v802
      %v805 = vmul.f32 %v803, %v803
      %v806 = vmul.f32 %v804, %v804
      %v807 = vsel %vm793, %v805, 0.0
      %808 = vadd.xlane.f32.xlu0 %v807
      %v809 = vpop.xlane.xlu0 %808
      %v810 = vsel %vm793, %v806, 0.0
      %811 = vadd.xlane.f32.xlu0 %v810
      %v812 = vpop.xlane.xlu0 %811
      %v813 = vmul.f32 %v809, %v800
      %v814 = vmul.f32 %v812, %v800
      %v815 = vadd.f32 %v813, 1e-05
      %v816 = vadd.f32 %v814, 1e-05
      %v817 = vrsqrt.pop %v815
      %v818 = vrsqrt.pop %v816
      %v819 = vmul.f32 %v803, %v817
      %v820 = vmul.f32 %v804, %v818
      %v822 = vlaneseq
      %v823 = vshrl.u32 %v822, 7
      %v824 = vsub.s32 0, %v823
      %v825 = vrot.slane %v791, %v824
      %v827 = vmul.f32 %v819, %v825
      %v828 = vmul.f32 %v820, %v825
      %v830 = vlaneseq
      %v831 = vshrl.u32 %v830, 7
      %v832 = vsub.s32 0, %v831
      %v833 = vrot.slane %v792, %v832
      %v835 = vadd.f32 %v827, %v833
      %v836 = vadd.f32 %v828, %v833
      %v837 = vld [vmem:[%s733] sm:$0xf]
      %v838 = vld [vmem:[%s733 + $0x4] sm:$0xf]
      %v839 = vld [vmem:[%s733 + $0x8] sm:$0xf]
      %v840 = vld [vmem:[%s733 + $0xc] sm:$0xf]
      %v841 = vpack.c.bf16 %v836, %v835
      %v842 = vld [vmem:[%s737] sm:$0x1]
      %v844 = vlaneseq
      %v845 = vshrl.u32 %v844, 7
      %v846 = vsub.s32 0, %v845
      %v847 = vrot.slane %v842, %v846
      %v853 = vunpack.c.l.b16 %v837
      %v854 = vunpack.c.l.b16 %v838
      %v855 = vunpack.c.l.b16 %v839
      %v856 = vunpack.c.l.b16 %v840
      %v857 = vpack.c.b16 %v854, %v853
      %v858 = vpack.c.b16 %v856, %v855
      %v862 = vsel %vm793, %v841, 0
      %864 = vmatprep.subr.bf16.mxu0 0
      %865 = vmatpush1.bf16.msra.mxu0 %v857
      %866 = vmatprep.subr.bf16.mxu0 0
      %867 = vmatpush1.bf16.msra.mxu0 %v858
      %868 = vmatprep.subr.bf16.mxu0 0
      %869 = vmatpush1.bf16.msra.mxu0 0
      %870 = vmatprep.subr.bf16.mxu0 0
      %871 = vmatpush1.bf16.msra.mxu0 0
      %872 = vmatprep.subr.bf16.mxu0 0
      %873 = vmatpush1.bf16.msra.mxu0 0
      %874 = vmatprep.subr.bf16.mxu0 0
      %875 = vmatpush1.bf16.msra.mxu0 0
      %876 = vmatprep.subr.bf16.mxu0 0
      %877 = vmatpush1.bf16.msra.mxu0 0
      %878 = vmatprep.subr.bf16.mxu0 0
      %879 = vmatpush1.bf16.msra.mxu0 0
      %880 = vmatprep.subr.bf16.mxu0 0
      %881 = vmatpush1.bf16.msra.mxu0 0
      %882 = vmatprep.subr.bf16.mxu0 0
      %883 = vmatpush1.bf16.msra.mxu0 0
      %884 = vmatprep.subr.bf16.mxu0 0
      %885 = vmatpush1.bf16.msra.mxu0 0
      %886 = vmatprep.subr.bf16.mxu0 0
      %887 = vmatpush1.bf16.msra.mxu0 0
      %888 = vmatprep.subr.bf16.mxu0 0
      %889 = vmatpush1.bf16.msra.mxu0 0
      %890 = vmatprep.subr.bf16.mxu0 0
      %891 = vmatpush1.bf16.msra.mxu0 0
      %892 = vmatprep.subr.bf16.mxu0 0
      %893 = vmatpush1.bf16.msra.mxu0 0
      %894 = vmatprep.subr.bf16.mxu0 0
      %895 = vmatpush1.bf16.msra.mxu0 0
      %896 = vmatprep.mubr.bf16.mxu0 0
      %897 = vmatmul.mubr.bf16.gmra.mrb[0].mxu0 %v862
      %v898 = vpop.f32.mrb[0].mxu0
      %v899 = vadd.f32 %v847, %v898
      %v900 = vpop.f32.mrb[0].mxu0
      %v901 = vpop.f32.mrb[0].mxu0
      %v902 = vadd.f32 %v847, %v901
      %v903 = vpop.f32.mrb[0].mxu0
      %904 = vdwg.mxu0
      %v905 = vld [vmem:[%s742] sm:$0xf]
      %v906 = vld [vmem:[%s742 + $0x4] sm:$0xf]
      %v907 = vld [vmem:[%s742 + $0x8] sm:$0xf]
      %v908 = vld [vmem:[%s742 + $0xc] sm:$0xf]
      %911 = vrot.lane.b32.xlu0 %v899, 96
      %v912 = vpop.permute.xlu0 %911
      %913 = vrot.lane.b32.xlu0 %v902, 96
      %v914 = vpop.permute.xlu0 %913
      %917 = vxpose.xlu0.b32.start [1/16] %v912, 128
      %918 = vxpose.xlu0.b32.cont [2/16] %v914, 128
      %919 = vxpose.xlu0.b32.cont [3/16] 0.0, 128
      %920 = vxpose.xlu0.b32.cont [4/16] 0.0, 128
      %921 = vxpose.xlu0.b32.cont [5/16] 0.0, 128
      %922 = vxpose.xlu0.b32.cont [6/16] 0.0, 128
      %923 = vxpose.xlu0.b32.cont [7/16] 0.0, 128
      %924 = vxpose.xlu0.b32.cont [8/16] 0.0, 128
      %925 = vxpose.xlu0.b32.cont [9/16] 0.0, 128
      %926 = vxpose.xlu0.b32.cont [10/16] 0.0, 128
      %927 = vxpose.xlu0.b32.cont [11/16] 0.0, 128
      %928 = vxpose.xlu0.b32.cont [12/16] 0.0, 128
      %929 = vxpose.xlu0.b32.cont [13/16] 0.0, 128
      %930 = vxpose.xlu0.b32.cont [14/16] 0.0, 128
      %931 = vxpose.xlu0.b32.cont [15/16] 0.0, 128
      %932 = vxpose.xlu0.b32.end [16/16] 0.0, 128
      %v933 = vpop.trf.xlu0
      %v934 = vpop.trf.xlu0
      %v935 = vpop.trf.xlu0
      %v936 = vpop.trf.xlu0
      %v937 = vpop.trf.xlu0
      %v938 = vpop.trf.xlu0
      %v939 = vpop.trf.xlu0
      %v940 = vpop.trf.xlu0
      %v941 = vpop.trf.xlu0
      %v942 = vpop.trf.xlu0
      %v943 = vpop.trf.xlu0
      %v944 = vpop.trf.xlu0
      %v945 = vpop.trf.xlu0
      %v946 = vpop.trf.xlu0
      %v947 = vpop.trf.xlu0
      %v948 = vpop.trf.xlu0
      %v949 = vpack.c.bf16 %v902, %v899
      %v950 = vpack.c.bf16 %v934, %v933
      %vm951 = vcmask 130048
      %v953 = vsel %vm951, %v949, 0
      %955 = vmatprep.subr.bf16.mxu0 0
      %956 = vmatpush1.bf16.msra.mxu0 %v950
      %957 = vmatprep.subr.bf16.mxu0 0
      %958 = vmatpush1.bf16.msra.mxu0 0
      %959 = vmatprep.subr.bf16.mxu0 0
      %960 = vmatpush1.bf16.msra.mxu0 0
      %961 = vmatprep.subr.bf16.mxu0 0
      %962 = vmatpush1.bf16.msra.mxu0 0
      %963 = vmatprep.subr.bf16.mxu0 0
      %964 = vmatpush1.bf16.msra.mxu0 0
      %965 = vmatprep.subr.bf16.mxu0 0
      %966 = vmatpush1.bf16.msra.mxu0 0
      %967 = vmatprep.subr.bf16.mxu0 0
      %968 = vmatpush1.bf16.msra.mxu0 0
      %969 = vmatprep.subr.bf16.mxu0 0
      %970 = vmatpush1.bf16.msra.mxu0 0
      %971 = vmatprep.subr.bf16.mxu0 0
      %972 = vmatpush1.bf16.msra.mxu0 0
      %973 = vmatprep.subr.bf16.mxu0 0
      %974 = vmatpush1.bf16.msra.mxu0 0
      %975 = vmatprep.subr.bf16.mxu0 0
      %976 = vmatpush1.bf16.msra.mxu0 0
      %977 = vmatprep.subr.bf16.mxu0 0
      %978 = vmatpush1.bf16.msra.mxu0 0
      %979 = vmatprep.subr.bf16.mxu0 0
      %980 = vmatpush1.bf16.msra.mxu0 0
      %981 = vmatprep.subr.bf16.mxu0 0
      %982 = vmatpush1.bf16.msra.mxu0 0
      %983 = vmatprep.subr.bf16.mxu0 0
      %984 = vmatpush1.bf16.msra.mxu0 0
      %985 = vmatprep.subr.bf16.mxu0 0
      %986 = vmatpush1.bf16.msra.mxu0 0
      %987 = vmatprep.mubr.bf16.mxu0 0
      %988 = vmatmul.mubr.bf16.gmra.mrb[0].mxu0 %v953
      %v989 = vpop.f32.mrb[0].mxu0
      %v990 = vadd.f32 0.0, %v989
      %v991 = vpop.f32.mrb[0].mxu0
      %v992 = vpop.f32.mrb[0].mxu0
      %v993 = vadd.f32 0.0, %v992
      %v994 = vpop.f32.mrb[0].mxu0
      %995 = vdwg.mxu0
      %v996 = vmul.f32 %v990, 0.25
      %v997 = vmul.f32 %v993, 0.25
      %v998 = vadd.f32 %v996, %v787
      %v999 = vadd.f32 %v997, %v788
      %v1000 = vsel %vm951, %v998, -inf
      %1001 = vmax.xlane.f32.xlu0 %v1000
      %v1002 = vpop.xlane.xlu0 %1001
      %v1003 = vsel %vm951, %v999, -inf
      %1004 = vmax.xlane.f32.xlu0 %v1003
      %v1005 = vpop.xlane.xlu0 %1004
      %v1006 = vsub.f32 %v998, %v1002
      %v1007 = vsub.f32 %v999, %v1005
      %v1008 = vmul.f32 %v1006, 1.442695
      %v1009 = vpow.pop %v1008
      %v1010 = vmul.f32 %v1007, 1.442695
      %v1011 = vpow.pop %v1010
      %v1012 = vsel %vm951, %v1009, 0.0
      %1013 = vadd.xlane.f32.xlu0 %v1012
      %v1014 = vpop.xlane.xlu0 %1013
      %v1015 = vsel %vm951, %v1011, 0.0
      %1016 = vadd.xlane.f32.xlu0 %v1015
      %v1017 = vpop.xlane.xlu0 %1016
      %v1018 = vrcp.pop %v1014
      %v1019 = vrcp.pop %v1017
      %v1020 = vmul.f32 %v1009, %v1018
      %v1021 = vmul.f32 %v1011, %v1019
      %v1022 = vpack.c.bf16 %v1021, %v1020
      %1024 = vrot.lane.b32.xlu0 %v949, 64
      %v1025 = vpop.permute.xlu0 %1024
      %v1028 = vsel %vm951, %v1022, 0
      %1030 = vmatprep.subr.bf16.mxu0 0
      %1031 = vmatpush1.bf16.msra.mxu0 %v1025
      %1032 = vmatprep.subr.bf16.mxu0 0
      %1033 = vmatpush1.bf16.msra.mxu0 0
      %1034 = vmatprep.subr.bf16.mxu0 0
      %1035 = vmatpush1.bf16.msra.mxu0 0
      %1036 = vmatprep.subr.bf16.mxu0 0
      %1037 = vmatpush1.bf16.msra.mxu0 0
      %1038 = vmatprep.subr.bf16.mxu0 0
      %1039 = vmatpush1.bf16.msra.mxu0 0
      %1040 = vmatprep.subr.bf16.mxu0 0
      %1041 = vmatpush1.bf16.msra.mxu0 0
      %1042 = vmatprep.subr.bf16.mxu0 0
      %1043 = vmatpush1.bf16.msra.mxu0 0
      %1044 = vmatprep.subr.bf16.mxu0 0
      %1045 = vmatpush1.bf16.msra.mxu0 0
      %1046 = vmatprep.subr.bf16.mxu0 0
      %1047 = vmatpush1.bf16.msra.mxu0 0
      %1048 = vmatprep.subr.bf16.mxu0 0
      %1049 = vmatpush1.bf16.msra.mxu0 0
      %1050 = vmatprep.subr.bf16.mxu0 0
      %1051 = vmatpush1.bf16.msra.mxu0 0
      %1052 = vmatprep.subr.bf16.mxu0 0
      %1053 = vmatpush1.bf16.msra.mxu0 0
      %1054 = vmatprep.subr.bf16.mxu0 0
      %1055 = vmatpush1.bf16.msra.mxu0 0
      %1056 = vmatprep.subr.bf16.mxu0 0
      %1057 = vmatpush1.bf16.msra.mxu0 0
      %1058 = vmatprep.subr.bf16.mxu0 0
      %1059 = vmatpush1.bf16.msra.mxu0 0
      %1060 = vmatprep.subr.bf16.mxu0 0
      %1061 = vmatpush1.bf16.msra.mxu0 0
      %1062 = vmatprep.mubr.bf16.mxu0 0
      %1063 = vmatmul.mubr.bf16.gmra.mrb[0].mxu0 %v1028
      %v1064 = vpop.f32.mrb[0].mxu0
      %v1065 = vadd.f32 0.0, %v1064
      %v1066 = vpop.f32.mrb[0].mxu0
      %v1067 = vpop.f32.mrb[0].mxu0
      %v1068 = vadd.f32 0.0, %v1067
      %v1069 = vpop.f32.mrb[0].mxu0
      %1070 = vdwg.mxu0
      %v1071 = vpack.c.bf16 %v1068, %v1065
      %1072 = vrot.lane.b32.xlu0 %v899, 80
      %v1073 = vpop.permute.xlu0 %1072
      %1074 = vrot.lane.b32.xlu0 %v902, 80
      %v1075 = vpop.permute.xlu0 %1074
      %1078 = vxpose.xlu0.b32.start [1/16] %v1073, 128
      %1079 = vxpose.xlu0.b32.cont [2/16] %v1075, 128
      %1080 = vxpose.xlu0.b32.cont [3/16] 0.0, 128
      %1081 = vxpose.xlu0.b32.cont [4/16] 0.0, 128
      %1082 = vxpose.xlu0.b32.cont [5/16] 0.0, 128
      %1083 = vxpose.xlu0.b32.cont [6/16] 0.0, 128
      %1084 = vxpose.xlu0.b32.cont [7/16] 0.0, 128
      %1085 = vxpose.xlu0.b32.cont [8/16] 0.0, 128
      %1086 = vxpose.xlu0.b32.cont [9/16] 0.0, 128
      %1087 = vxpose.xlu0.b32.cont [10/16] 0.0, 128
      %1088 = vxpose.xlu0.b32.cont [11/16] 0.0, 128
      %1089 = vxpose.xlu0.b32.cont [12/16] 0.0, 128
      %1090 = vxpose.xlu0.b32.cont [13/16] 0.0, 128
      %1091 = vxpose.xlu0.b32.cont [14/16] 0.0, 128
      %1092 = vxpose.xlu0.b32.cont [15/16] 0.0, 128
      %1093 = vxpose.xlu0.b32.end [16/16] 0.0, 128
      %v1094 = vpop.trf.xlu0
      %v1095 = vpop.trf.xlu0
      %v1096 = vpop.trf.xlu0
      %v1097 = vpop.trf.xlu0
      %v1098 = vpop.trf.xlu0
      %v1099 = vpop.trf.xlu0
      %v1100 = vpop.trf.xlu0
      %v1101 = vpop.trf.xlu0
      %v1102 = vpop.trf.xlu0
      %v1103 = vpop.trf.xlu0
      %v1104 = vpop.trf.xlu0
      %v1105 = vpop.trf.xlu0
      %v1106 = vpop.trf.xlu0
      %v1107 = vpop.trf.xlu0
      %v1108 = vpop.trf.xlu0
      %v1109 = vpop.trf.xlu0
      %v1110 = vpack.c.bf16 %v1095, %v1094
      %1111 = vrot.lane.b32.xlu0 %v949, 112
      %v1112 = vpop.permute.xlu0 %1111
      %v1114 = vsel %vm951, %v1112, 0
      %1116 = vmatprep.subr.bf16.mxu0 0
      %1117 = vmatpush1.bf16.msra.mxu0 %v1110
      %1118 = vmatprep.subr.bf16.mxu0 0
      %1119 = vmatpush1.bf16.msra.mxu0 0
      %1120 = vmatprep.subr.bf16.mxu0 0
      %1121 = vmatpush1.bf16.msra.mxu0 0
      %1122 = vmatprep.subr.bf16.mxu0 0
      %1123 = vmatpush1.bf16.msra.mxu0 0
      %1124 = vmatprep.subr.bf16.mxu0 0
      %1125 = vmatpush1.bf16.msra.mxu0 0
      %1126 = vmatprep.subr.bf16.mxu0 0
      %1127 = vmatpush1.bf16.msra.mxu0 0
      %1128 = vmatprep.subr.bf16.mxu0 0
      %1129 = vmatpush1.bf16.msra.mxu0 0
      %1130 = vmatprep.subr.bf16.mxu0 0
      %1131 = vmatpush1.bf16.msra.mxu0 0
      %1132 = vmatprep.subr.bf16.mxu0 0
      %1133 = vmatpush1.bf16.msra.mxu0 0
      %1134 = vmatprep.subr.bf16.mxu0 0
      %1135 = vmatpush1.bf16.msra.mxu0 0
      %1136 = vmatprep.subr.bf16.mxu0 0
      %1137 = vmatpush1.bf16.msra.mxu0 0
      %1138 = vmatprep.subr.bf16.mxu0 0
      %1139 = vmatpush1.bf16.msra.mxu0 0
      %1140 = vmatprep.subr.bf16.mxu0 0
      %1141 = vmatpush1.bf16.msra.mxu0 0
      %1142 = vmatprep.subr.bf16.mxu0 0
      %1143 = vmatpush1.bf16.msra.mxu0 0
      %1144 = vmatprep.subr.bf16.mxu0 0
      %1145 = vmatpush1.bf16.msra.mxu0 0
      %1146 = vmatprep.subr.bf16.mxu0 0
      %1147 = vmatpush1.bf16.msra.mxu0 0
      %1148 = vmatprep.mubr.bf16.mxu0 0
      %1149 = vmatmul.mubr.bf16.gmra.mrb[0].mxu0 %v1114
      %v1150 = vpop.f32.mrb[0].mxu0
      %v1151 = vadd.f32 0.0, %v1150
      %v1152 = vpop.f32.mrb[0].mxu0
      %v1153 = vpop.f32.mrb[0].mxu0
      %v1154 = vadd.f32 0.0, %v1153
      %v1155 = vpop.f32.mrb[0].mxu0
      %1156 = vdwg.mxu0
      %v1157 = vmul.f32 %v1151, 0.25
      %v1158 = vmul.f32 %v1154, 0.25
      %v1159 = vadd.f32 %v1157, %v787
      %v1160 = vadd.f32 %v1158, %v788
      %v1161 = vsel %vm951, %v1159, -inf
      %1162 = vmax.xlane.f32.xlu0 %v1161
      %v1163 = vpop.xlane.xlu0 %1162
      %v1164 = vsel %vm951, %v1160, -inf
      %1165 = vmax.xlane.f32.xlu0 %v1164
      %v1166 = vpop.xlane.xlu0 %1165
      %v1167 = vsub.f32 %v1159, %v1163
      %v1168 = vsub.f32 %v1160, %v1166
      %v1169 = vmul.f32 %v1167, 1.442695
      %v1170 = vpow.pop %v1169
      %v1171 = vmul.f32 %v1168, 1.442695
      %v1172 = vpow.pop %v1171
      %v1173 = vsel %vm951, %v1170, 0.0
      %1174 = vadd.xlane.f32.xlu0 %v1173
      %v1175 = vpop.xlane.xlu0 %1174
      %v1176 = vsel %vm951, %v1172, 0.0
      %1177 = vadd.xlane.f32.xlu0 %v1176
      %v1178 = vpop.xlane.xlu0 %1177
      %v1179 = vrcp.pop %v1175
      %v1180 = vrcp.pop %v1178
      %v1181 = vmul.f32 %v1170, %v1179
      %v1182 = vmul.f32 %v1172, %v1180
      %v1183 = vpack.c.bf16 %v1182, %v1181
      %1184 = vrot.lane.b32.xlu0 %v949, 48
      %v1185 = vpop.permute.xlu0 %1184
      %v1188 = vsel %vm951, %v1183, 0
      %1190 = vmatprep.subr.bf16.mxu0 0
      %1191 = vmatpush1.bf16.msra.mxu0 %v1185
      %1192 = vmatprep.subr.bf16.mxu0 0
      %1193 = vmatpush1.bf16.msra.mxu0 0
      %1194 = vmatprep.subr.bf16.mxu0 0
      %1195 = vmatpush1.bf16.msra.mxu0 0
      %1196 = vmatprep.subr.bf16.mxu0 0
      %1197 = vmatpush1.bf16.msra.mxu0 0
      %1198 = vmatprep.subr.bf16.mxu0 0
      %1199 = vmatpush1.bf16.msra.mxu0 0
      %1200 = vmatprep.subr.bf16.mxu0 0
      %1201 = vmatpush1.bf16.msra.mxu0 0
      %1202 = vmatprep.subr.bf16.mxu0 0
      %1203 = vmatpush1.bf16.msra.mxu0 0
      %1204 = vmatprep.subr.bf16.mxu0 0
      %1205 = vmatpush1.bf16.msra.mxu0 0
      %1206 = vmatprep.subr.bf16.mxu0 0
      %1207 = vmatpush1.bf16.msra.mxu0 0
      %1208 = vmatprep.subr.bf16.mxu0 0
      %1209 = vmatpush1.bf16.msra.mxu0 0
      %1210 = vmatprep.subr.bf16.mxu0 0
      %1211 = vmatpush1.bf16.msra.mxu0 0
      %1212 = vmatprep.subr.bf16.mxu0 0
      %1213 = vmatpush1.bf16.msra.mxu0 0
      %1214 = vmatprep.subr.bf16.mxu0 0
      %1215 = vmatpush1.bf16.msra.mxu0 0
      %1216 = vmatprep.subr.bf16.mxu0 0
      %1217 = vmatpush1.bf16.msra.mxu0 0
      %1218 = vmatprep.subr.bf16.mxu0 0
      %1219 = vmatpush1.bf16.msra.mxu0 0
      %1220 = vmatprep.subr.bf16.mxu0 0
      %1221 = vmatpush1.bf16.msra.mxu0 0
      %1222 = vmatprep.mubr.bf16.mxu0 0
      %1223 = vmatmul.mubr.bf16.gmra.mrb[0].mxu0 %v1188
      %v1224 = vpop.f32.mrb[0].mxu0
      %v1225 = vadd.f32 0.0, %v1224
      %v1226 = vpop.f32.mrb[0].mxu0
      %v1227 = vpop.f32.mrb[0].mxu0
      %v1228 = vadd.f32 0.0, %v1227
      %v1229 = vpop.f32.mrb[0].mxu0
      %1230 = vdwg.mxu0
      %v1231 = vpack.c.bf16 %v1228, %v1225
      %v1234 = vunpack.c.l.b16 %v907
      %v1235 = vunpack.c.l.b16 %v908
      %v1236 = vpack.c.b16 %v1235, %v1234
      %v1239 = vsel %vm951, %v1231, 0
      %1241 = vmatprep.subr.bf16.mxu0 0
      %1242 = vmatpush1.bf16.msra.mxu0 %v1236
      %1243 = vmatprep.subr.bf16.mxu0 0
      %1244 = vmatpush1.bf16.msra.mxu0 0
      %1245 = vmatprep.subr.bf16.mxu0 0
      %1246 = vmatpush1.bf16.msra.mxu0 0
      %1247 = vmatprep.subr.bf16.mxu0 0
      %1248 = vmatpush1.bf16.msra.mxu0 0
      %1249 = vmatprep.subr.bf16.mxu0 0
      %1250 = vmatpush1.bf16.msra.mxu0 0
      %1251 = vmatprep.subr.bf16.mxu0 0
      %1252 = vmatpush1.bf16.msra.mxu0 0
      %1253 = vmatprep.subr.bf16.mxu0 0
      %1254 = vmatpush1.bf16.msra.mxu0 0
      %1255 = vmatprep.subr.bf16.mxu0 0
      %1256 = vmatpush1.bf16.msra.mxu0 0
      %1257 = vmatprep.subr.bf16.mxu0 0
      %1258 = vmatpush1.bf16.msra.mxu0 0
      %1259 = vmatprep.subr.bf16.mxu0 0
      %1260 = vmatpush1.bf16.msra.mxu0 0
      %1261 = vmatprep.subr.bf16.mxu0 0
      %1262 = vmatpush1.bf16.msra.mxu0 0
      %1263 = vmatprep.subr.bf16.mxu0 0
      %1264 = vmatpush1.bf16.msra.mxu0 0
      %1265 = vmatprep.subr.bf16.mxu0 0
      %1266 = vmatpush1.bf16.msra.mxu0 0
      %1267 = vmatprep.subr.bf16.mxu0 0
      %1268 = vmatpush1.bf16.msra.mxu0 0
      %1269 = vmatprep.subr.bf16.mxu0 0
      %1270 = vmatpush1.bf16.msra.mxu0 0
      %1271 = vmatprep.subr.bf16.mxu0 0
      %1272 = vmatpush1.bf16.msra.mxu0 0
      %1273 = vmatprep.mubr.bf16.mxu0 0
      %1274 = vmatmul.mubr.bf16.gmra.mrb[0].mxu0 %v1239
      %v1275 = vpop.f32.mrb[0].mxu0
      %v1276 = vadd.f32 0.0, %v1275
      %v1277 = vpop.f32.mrb[0].mxu0
      %v1278 = vpop.f32.mrb[0].mxu0
      %v1279 = vadd.f32 0.0, %v1278
      %v1280 = vpop.f32.mrb[0].mxu0
      %1281 = vdwg.mxu0
      %v1284 = vunpack.c.l.b16 %v905
      %v1285 = vunpack.c.l.b16 %v906
      %v1286 = vpack.c.b16 %v1285, %v1284
      %v1289 = vsel %vm951, %v1071, 0
      %1291 = vmatprep.subr.bf16.mxu0 0
      %1292 = vmatpush1.bf16.msra.mxu0 %v1286
      %1293 = vmatprep.subr.bf16.mxu0 0
      %1294 = vmatpush1.bf16.msra.mxu0 0
      %1295 = vmatprep.subr.bf16.mxu0 0
      %1296 = vmatpush1.bf16.msra.mxu0 0
      %1297 = vmatprep.subr.bf16.mxu0 0
      %1298 = vmatpush1.bf16.msra.mxu0 0
      %1299 = vmatprep.subr.bf16.mxu0 0
      %1300 = vmatpush1.bf16.msra.mxu0 0
      %1301 = vmatprep.subr.bf16.mxu0 0
      %1302 = vmatpush1.bf16.msra.mxu0 0
      %1303 = vmatprep.subr.bf16.mxu0 0
      %1304 = vmatpush1.bf16.msra.mxu0 0
      %1305 = vmatprep.subr.bf16.mxu0 0
      %1306 = vmatpush1.bf16.msra.mxu0 0
      %1307 = vmatprep.subr.bf16.mxu0 0
      %1308 = vmatpush1.bf16.msra.mxu0 0
      %1309 = vmatprep.subr.bf16.mxu0 0
      %1310 = vmatpush1.bf16.msra.mxu0 0
      %1311 = vmatprep.subr.bf16.mxu0 0
      %1312 = vmatpush1.bf16.msra.mxu0 0
      %1313 = vmatprep.subr.bf16.mxu0 0
      %1314 = vmatpush1.bf16.msra.mxu0 0
      %1315 = vmatprep.subr.bf16.mxu0 0
      %1316 = vmatpush1.bf16.msra.mxu0 0
      %1317 = vmatprep.subr.bf16.mxu0 0
      %1318 = vmatpush1.bf16.msra.mxu0 0
      %1319 = vmatprep.subr.bf16.mxu0 0
      %1320 = vmatpush1.bf16.msra.mxu0 0
      %1321 = vmatprep.subr.bf16.mxu0 0
      %1322 = vmatpush1.bf16.msra.mxu0 0
      %1323 = vmatprep.mubr.bf16.mxu0 0
      %1324 = vmatmul.mubr.bf16.gmra.mrb[0].mxu0 %v1289
      %v1325 = vpop.f32.mrb[0].mxu0
      %v1326 = vadd.f32 %v1276, %v1325
      %v1327 = vpop.f32.mrb[0].mxu0
      %v1328 = vpop.f32.mrb[0].mxu0
      %v1329 = vadd.f32 %v1279, %v1328
      %v1330 = vpop.f32.mrb[0].mxu0
      %1331 = vdwg.mxu0
      %v1332 = vld [vmem:[%s746] sm:$0x1]
      %v1334 = vlaneseq
      %v1335 = vshrl.u32 %v1334, 7
      %v1336 = vsub.s32 0, %v1335
      %v1337 = vrot.slane %v1332, %v1336
      %v1339 = vadd.f32 %v1326, %v1337
      %v1340 = vadd.f32 %v1329, %v1337
      %v1341 = vadd.f32 %v1339, %v835
      %v1342 = vadd.f32 %v1340, %v836
      %v1343 = vld [vmem:[%s768] sm:$0x1]
      %v1344 = vld [vmem:[%s772] sm:$0x1]
      %v1345 = vsel %vm793, %v1341, 0.0
      %1346 = vadd.xlane.f32.xlu0 %v1345
      %v1347 = vpop.xlane.xlu0 %1346
      %v1348 = vsel %vm793, %v1342, 0.0
      %1349 = vadd.xlane.f32.xlu0 %v1348
      %v1350 = vpop.xlane.xlu0 %1349
      %v1351 = vmul.f32 %v1347, %v800
      %v1352 = vmul.f32 %v1350, %v800
      %v1353 = vsub.f32 %v1341, %v1351
      %v1354 = vsub.f32 %v1342, %v1352
      %v1355 = vmul.f32 %v1353, %v1353
      %v1356 = vmul.f32 %v1354, %v1354
      %v1357 = vsel %vm793, %v1355, 0.0
      %1358 = vadd.xlane.f32.xlu0 %v1357
      %v1359 = vpop.xlane.xlu0 %1358
      %v1360 = vsel %vm793, %v1356, 0.0
      %1361 = vadd.xlane.f32.xlu0 %v1360
      %v1362 = vpop.xlane.xlu0 %1361
      %v1363 = vmul.f32 %v1359, %v800
      %v1364 = vmul.f32 %v1362, %v800
      %v1365 = vadd.f32 %v1363, 1e-05
      %v1366 = vadd.f32 %v1364, 1e-05
      %v1367 = vrsqrt.pop %v1365
      %v1368 = vrsqrt.pop %v1366
      %v1369 = vmul.f32 %v1353, %v1367
      %v1370 = vmul.f32 %v1354, %v1368
      %v1372 = vlaneseq
      %v1373 = vshrl.u32 %v1372, 7
      %v1374 = vsub.s32 0, %v1373
      %v1375 = vrot.slane %v1343, %v1374
      %v1377 = vmul.f32 %v1369, %v1375
      %v1378 = vmul.f32 %v1370, %v1375
      %v1380 = vlaneseq
      %v1381 = vshrl.u32 %v1380, 7
      %v1382 = vsub.s32 0, %v1381
      %v1383 = vrot.slane %v1344, %v1382
      %v1385 = vadd.f32 %v1377, %v1383
      %v1386 = vadd.f32 %v1378, %v1383
      %v1387 = vld [vmem:[%s751] sm:$0xf]
      %v1388 = vld [vmem:[%s751 + $0x4] sm:$0xf]
      %v1389 = vld [vmem:[%s751 + $0x8] sm:$0xf]
      %v1390 = vld [vmem:[%s751 + $0xc] sm:$0xf]
      %v1391 = vpack.c.bf16 %v1386, %v1385
      %v1392 = vld [vmem:[%s755] sm:$0x1]
      %v1394 = vlaneseq
      %v1395 = vshrl.u32 %v1394, 7
      %v1396 = vsub.s32 0, %v1395
      %v1397 = vrot.slane %v1392, %v1396
      %v1403 = vunpack.c.l.b16 %v1387
      %v1404 = vunpack.c.l.b16 %v1388
      %v1405 = vunpack.c.l.b16 %v1389
      %v1406 = vunpack.c.l.b16 %v1390
      %v1407 = vpack.c.b16 %v1404, %v1403
      %v1408 = vpack.c.b16 %v1406, %v1405
      %v1412 = vsel %vm793, %v1391, 0
      %1414 = vmatprep.subr.bf16.mxu0 0
      %1415 = vmatpush1.bf16.msra.mxu0 %v1407
      %1416 = vmatprep.subr.bf16.mxu0 0
      %1417 = vmatpush1.bf16.msra.mxu0 %v1408
      %1418 = vmatprep.subr.bf16.mxu0 0
      %1419 = vmatpush1.bf16.msra.mxu0 0
      %1420 = vmatprep.subr.bf16.mxu0 0
      %1421 = vmatpush1.bf16.msra.mxu0 0
      %1422 = vmatprep.subr.bf16.mxu0 0
      %1423 = vmatpush1.bf16.msra.mxu0 0
      %1424 = vmatprep.subr.bf16.mxu0 0
      %1425 = vmatpush1.bf16.msra.mxu0 0
      %1426 = vmatprep.subr.bf16.mxu0 0
      %1427 = vmatpush1.bf16.msra.mxu0 0
      %1428 = vmatprep.subr.bf16.mxu0 0
      %1429 = vmatpush1.bf16.msra.mxu0 0
      %1430 = vmatprep.subr.bf16.mxu0 0
      %1431 = vmatpush1.bf16.msra.mxu0 0
      %1432 = vmatprep.subr.bf16.mxu0 0
      %1433 = vmatpush1.bf16.msra.mxu0 0
      %1434 = vmatprep.subr.bf16.mxu0 0
      %1435 = vmatpush1.bf16.msra.mxu0 0
      %1436 = vmatprep.subr.bf16.mxu0 0
      %1437 = vmatpush1.bf16.msra.mxu0 0
      %1438 = vmatprep.subr.bf16.mxu0 0
      %1439 = vmatpush1.bf16.msra.mxu0 0
      %1440 = vmatprep.subr.bf16.mxu0 0
      %1441 = vmatpush1.bf16.msra.mxu0 0
      %1442 = vmatprep.subr.bf16.mxu0 0
      %1443 = vmatpush1.bf16.msra.mxu0 0
      %1444 = vmatprep.subr.bf16.mxu0 0
      %1445 = vmatpush1.bf16.msra.mxu0 0
      %1446 = vmatprep.mubr.bf16.mxu0 0
      %1447 = vmatmul.mubr.bf16.gmra.mrb[0].mxu0 %v1412
      %v1448 = vpop.f32.mrb[0].mxu0
      %v1449 = vadd.f32 %v1397, %v1448
      %v1450 = vpop.f32.mrb[0].mxu0
      %v1451 = vpop.f32.mrb[0].mxu0
      %v1452 = vadd.f32 %v1397, %v1451
      %v1453 = vpop.f32.mrb[0].mxu0
      %1454 = vdwg.mxu0
      %v1455 = vmul.f32 %v1449, %v1449
      %v1456 = vmul.f32 %v1452, %v1452
      %v1457 = vmul.f32 %v1449, %v1455
      %v1458 = vmul.f32 %v1452, %v1456
      %v1459 = vmul.f32 %v1457, 0.044715
      %v1460 = vmul.f32 %v1458, 0.044715
      %v1461 = vadd.f32 %v1449, %v1459
      %v1462 = vadd.f32 %v1452, %v1460
      %v1463 = vmul.f32 %v1461, 0.7978846
      %v1464 = vmul.f32 %v1462, 0.7978846
      %v1465 = vtanh.pop %v1463
      %v1466 = vtanh.pop %v1464
      %v1467 = vadd.f32 %v1465, 1.0
      %v1468 = vadd.f32 %v1466, 1.0
      %v1469 = vmul.f32 %v1467, 0.5
      %v1470 = vmul.f32 %v1468, 0.5
      %v1471 = vmul.f32 %v1449, %v1469
      %v1472 = vmul.f32 %v1452, %v1470
      %v1473 = vld [vmem:[%s760] sm:$0xf]
      %v1474 = vld [vmem:[%s760 + $0x4] sm:$0xf]
      %v1475 = vld [vmem:[%s760 + $0x8] sm:$0xf]
      %v1476 = vld [vmem:[%s760 + $0xc] sm:$0xf]
      %v1477 = vld [vmem:[%s760 + $0x10] sm:$0xf]
      %v1478 = vld [vmem:[%s760 + $0x14] sm:$0xf]
      %v1479 = vld [vmem:[%s760 + $0x18] sm:$0xf]
      %v1480 = vld [vmem:[%s760 + $0x1c] sm:$0xf]
      %v1481 = vpack.c.bf16 %v1472, %v1471
      %v1482 = vld [vmem:[%s764] sm:$0x1]
      %v1484 = vlaneseq
      %v1485 = vshrl.u32 %v1484, 7
      %v1486 = vsub.s32 0, %v1485
      %v1487 = vrot.slane %v1482, %v1486
      %v1497 = vunpack.c.l.b16 %v1473
      %v1498 = vunpack.c.l.b16 %v1474
      %v1499 = vunpack.c.l.b16 %v1475
      %v1500 = vunpack.c.l.b16 %v1476
      %v1501 = vunpack.c.l.b16 %v1477
      %v1502 = vunpack.c.l.b16 %v1478
      %v1503 = vunpack.c.l.b16 %v1479
      %v1504 = vunpack.c.l.b16 %v1480
      %v1505 = vpack.c.b16 %v1498, %v1497
      %v1506 = vpack.c.b16 %v1500, %v1499
      %v1507 = vpack.c.b16 %v1502, %v1501
      %v1508 = vpack.c.b16 %v1504, %v1503
      %vm1513 = vcmask 523264
      %v1515 = vsel %vm1513, %v1481, 0
      %1517 = vmatprep.subr.bf16.mxu0 0
      %1518 = vmatpush1.bf16.msra.mxu0 %v1505
      %1519 = vmatprep.subr.bf16.mxu0 0
      %1520 = vmatpush1.bf16.msra.mxu0 %v1506
      %1521 = vmatprep.subr.bf16.mxu0 0
      %1522 = vmatpush1.bf16.msra.mxu0 %v1507
      %1523 = vmatprep.subr.bf16.mxu0 0
      %1524 = vmatpush1.bf16.msra.mxu0 %v1508
      %1525 = vmatprep.subr.bf16.mxu0 0
      %1526 = vmatpush1.bf16.msra.mxu0 0
      %1527 = vmatprep.subr.bf16.mxu0 0
      %1528 = vmatpush1.bf16.msra.mxu0 0
      %1529 = vmatprep.subr.bf16.mxu0 0
      %1530 = vmatpush1.bf16.msra.mxu0 0
      %1531 = vmatprep.subr.bf16.mxu0 0
      %1532 = vmatpush1.bf16.msra.mxu0 0
      %1533 = vmatprep.subr.bf16.mxu0 0
      %1534 = vmatpush1.bf16.msra.mxu0 0
      %1535 = vmatprep.subr.bf16.mxu0 0
      %1536 = vmatpush1.bf16.msra.mxu0 0
      %1537 = vmatprep.subr.bf16.mxu0 0
      %1538 = vmatpush1.bf16.msra.mxu0 0
      %1539 = vmatprep.subr.bf16.mxu0 0
      %1540 = vmatpush1.bf16.msra.mxu0 0
      %1541 = vmatprep.subr.bf16.mxu0 0
      %1542 = vmatpush1.bf16.msra.mxu0 0
      %1543 = vmatprep.subr.bf16.mxu0 0
      %1544 = vmatpush1.bf16.msra.mxu0 0
      %1545 = vmatprep.subr.bf16.mxu0 0
      %1546 = vmatpush1.bf16.msra.mxu0 0
      %1547 = vmatprep.subr.bf16.mxu0 0
      %1548 = vmatpush1.bf16.msra.mxu0 0
      %1549 = vmatprep.mubr.bf16.mxu0 0
      %1550 = vmatmul.mubr.bf16.gmra.mrb[0].mxu0 %v1515
      %v1551 = vpop.f32.mrb[0].mxu0
      %v1552 = vadd.f32 %v1487, %v1551
      %v1553 = vpop.f32.mrb[0].mxu0
      %v1554 = vpop.f32.mrb[0].mxu0
      %v1555 = vadd.f32 %v1487, %v1554
      %v1556 = vpop.f32.mrb[0].mxu0
      %1557 = vdwg.mxu0
      %v1558 = vadd.f32 %v1552, %v1385
      %v1559 = vadd.f32 %v1555, %v1386
      %v1560 = vld [vmem:[%s776] sm:$0x1]
      %v1561 = vld [vmem:[%s780] sm:$0x1]
      %v1562 = vsel %vm793, %v1558, 0.0
      %1563 = vadd.xlane.f32.xlu0 %v1562
      %v1564 = vpop.xlane.xlu0 %1563
      %v1565 = vsel %vm793, %v1559, 0.0
      %1566 = vadd.xlane.f32.xlu0 %v1565
      %v1567 = vpop.xlane.xlu0 %1566
      %v1568 = vmul.f32 %v1564, %v800
      %v1569 = vmul.f32 %v1567, %v800
      %v1570 = vsub.f32 %v1558, %v1568
      %v1571 = vsub.f32 %v1559, %v1569
      %v1572 = vmul.f32 %v1570, %v1570
      %v1573 = vmul.f32 %v1571, %v1571
      %v1574 = vsel %vm793, %v1572, 0.0
      %1575 = vadd.xlane.f32.xlu0 %v1574
      %v1576 = vpop.xlane.xlu0 %1575
      %v1577 = vsel %vm793, %v1573, 0.0
      %1578 = vadd.xlane.f32.xlu0 %v1577
      %v1579 = vpop.xlane.xlu0 %1578
      %v1580 = vmul.f32 %v1576, %v800
      %v1581 = vmul.f32 %v1579, %v800
      %v1582 = vadd.f32 %v1580, 1e-05
      %v1583 = vadd.f32 %v1581, 1e-05
      %v1584 = vrsqrt.pop %v1582
      %v1585 = vrsqrt.pop %v1583
      %v1586 = vmul.f32 %v1570, %v1584
      %v1587 = vmul.f32 %v1571, %v1585
      %v1589 = vlaneseq
      %v1590 = vshrl.u32 %v1589, 7
      %v1591 = vsub.s32 0, %v1590
      %v1592 = vrot.slane %v1560, %v1591
      %v1594 = vmul.f32 %v1586, %v1592
      %v1595 = vmul.f32 %v1587, %v1592
      %v1597 = vlaneseq
      %v1598 = vshrl.u32 %v1597, 7
      %v1599 = vsub.s32 0, %v1598
      %v1600 = vrot.slane %v1561, %v1599
      %v1602 = vadd.f32 %v1594, %v1600
      %v1603 = vadd.f32 %v1595, %v1600
      %s1604 = scalar_lea.vmem %s733, 16
      %v1605 = vld [vmem:[%s1604] sm:$0xf]
      %v1606 = vld [vmem:[%s1604 + $0x4] sm:$0xf]
      %v1607 = vld [vmem:[%s1604 + $0x8] sm:$0xf]
      %v1608 = vld [vmem:[%s1604 + $0xc] sm:$0xf]
      %v1609 = vpack.c.bf16 %v1603, %v1602
      %s1610 = scalar_lea.vmem %s737, 1
      %v1611 = vld [vmem:[%s1610] sm:$0x1]
      %v1613 = vlaneseq
      %v1614 = vshrl.u32 %v1613, 7
      %v1615 = vsub.s32 0, %v1614
      %v1616 = vrot.slane %v1611, %v1615
      %v1622 = vunpack.c.l.b16 %v1605
      %v1623 = vunpack.c.l.b16 %v1606
      %v1624 = vunpack.c.l.b16 %v1607
      %v1625 = vunpack.c.l.b16 %v1608
      %v1626 = vpack.c.b16 %v1623, %v1622
      %v1627 = vpack.c.b16 %v1625, %v1624
      %v1631 = vsel %vm793, %v1609, 0
      %1633 = vmatprep.subr.bf16.mxu0 0
      %1634 = vmatpush1.bf16.msra.mxu0 %v1626
      %1635 = vmatprep.subr.bf16.mxu0 0
      %1636 = vmatpush1.bf16.msra.mxu0 %v1627
      %1637 = vmatprep.subr.bf16.mxu0 0
      %1638 = vmatpush1.bf16.msra.mxu0 0
      %1639 = vmatprep.subr.bf16.mxu0 0
      %1640 = vmatpush1.bf16.msra.mxu0 0
      %1641 = vmatprep.subr.bf16.mxu0 0
      %1642 = vmatpush1.bf16.msra.mxu0 0
      %1643 = vmatprep.subr.bf16.mxu0 0
      %1644 = vmatpush1.bf16.msra.mxu0 0
      %1645 = vmatprep.subr.bf16.mxu0 0
      %1646 = vmatpush1.bf16.msra.mxu0 0
      %1647 = vmatprep.subr.bf16.mxu0 0
      %1648 = vmatpush1.bf16.msra.mxu0 0
      %1649 = vmatprep.subr.bf16.mxu0 0
      %1650 = vmatpush1.bf16.msra.mxu0 0
      %1651 = vmatprep.subr.bf16.mxu0 0
      %1652 = vmatpush1.bf16.msra.mxu0 0
      %1653 = vmatprep.subr.bf16.mxu0 0
      %1654 = vmatpush1.bf16.msra.mxu0 0
      %1655 = vmatprep.subr.bf16.mxu0 0
      %1656 = vmatpush1.bf16.msra.mxu0 0
      %1657 = vmatprep.subr.bf16.mxu0 0
      %1658 = vmatpush1.bf16.msra.mxu0 0
      %1659 = vmatprep.subr.bf16.mxu0 0
      %1660 = vmatpush1.bf16.msra.mxu0 0
      %1661 = vmatprep.subr.bf16.mxu0 0
      %1662 = vmatpush1.bf16.msra.mxu0 0
      %1663 = vmatprep.subr.bf16.mxu0 0
      %1664 = vmatpush1.bf16.msra.mxu0 0
      %1665 = vmatprep.mubr.bf16.mxu0 0
      %1666 = vmatmul.mubr.bf16.gmra.mrb[0].mxu0 %v1631
      %v1667 = vpop.f32.mrb[0].mxu0
      %v1668 = vadd.f32 %v1616, %v1667
      %v1669 = vpop.f32.mrb[0].mxu0
      %v1670 = vpop.f32.mrb[0].mxu0
      %v1671 = vadd.f32 %v1616, %v1670
      %v1672 = vpop.f32.mrb[0].mxu0
      %1673 = vdwg.mxu0
      %s1674 = scalar_lea.vmem %s742, 16
      %v1675 = vld [vmem:[%s1674] sm:$0xf]
      %v1676 = vld [vmem:[%s1674 + $0x4] sm:$0xf]
      %v1677 = vld [vmem:[%s1674 + $0x8] sm:$0xf]
      %v1678 = vld [vmem:[%s1674 + $0xc] sm:$0xf]
      %1681 = vrot.lane.b32.xlu0 %v1668, 96
      %v1682 = vpop.permute.xlu0 %1681
      %1683 = vrot.lane.b32.xlu0 %v1671, 96
      %v1684 = vpop.permute.xlu0 %1683
      %1687 = vxpose.xlu0.b32.start [1/16] %v1682, 128
      %1688 = vxpose.xlu0.b32.cont [2/16] %v1684, 128
      %1689 = vxpose.xlu0.b32.cont [3/16] 0.0, 128
      %1690 = vxpose.xlu0.b32.cont [4/16] 0.0, 128
      %1691 = vxpose.xlu0.b32.cont [5/16] 0.0, 128
      %1692 = vxpose.xlu0.b32.cont [6/16] 0.0, 128
      %1693 = vxpose.xlu0.b32.cont [7/16] 0.0, 128
      %1694 = vxpose.xlu0.b32.cont [8/16] 0.0, 128
      %1695 = vxpose.xlu0.b32.cont [9/16] 0.0, 128
      %1696 = vxpose.xlu0.b32.cont [10/16] 0.0, 128
      %1697 = vxpose.xlu0.b32.cont [11/16] 0.0, 128
      %1698 = vxpose.xlu0.b32.cont [12/16] 0.0, 128
      %1699 = vxpose.xlu0.b32.cont [13/16] 0.0, 128
      %1700 = vxpose.xlu0.b32.cont [14/16] 0.0, 128
      %1701 = vxpose.xlu0.b32.cont [15/16] 0.0, 128
      %1702 = vxpose.xlu0.b32.end [16/16] 0.0, 128
      %v1703 = vpop.trf.xlu0
      %v1704 = vpop.trf.xlu0
      %v1705 = vpop.trf.xlu0
      %v1706 = vpop.trf.xlu0
      %v1707 = vpop.trf.xlu0
      %v1708 = vpop.trf.xlu0
      %v1709 = vpop.trf.xlu0
      %v1710 = vpop.trf.xlu0
      %v1711 = vpop.trf.xlu0
      %v1712 = vpop.trf.xlu0
      %v1713 = vpop.trf.xlu0
      %v1714 = vpop.trf.xlu0
      %v1715 = vpop.trf.xlu0
      %v1716 = vpop.trf.xlu0
      %v1717 = vpop.trf.xlu0
      %v1718 = vpop.trf.xlu0
      %v1719 = vpack.c.bf16 %v1671, %v1668
      %v1720 = vpack.c.bf16 %v1704, %v1703
      %v1722 = vsel %vm951, %v1719, 0
      %1724 = vmatprep.subr.bf16.mxu0 0
      %1725 = vmatpush1.bf16.msra.mxu0 %v1720
      %1726 = vmatprep.subr.bf16.mxu0 0
      %1727 = vmatpush1.bf16.msra.mxu0 0
      %1728 = vmatprep.subr.bf16.mxu0 0
      %1729 = vmatpush1.bf16.msra.mxu0 0
      %1730 = vmatprep.subr.bf16.mxu0 0
      %1731 = vmatpush1.bf16.msra.mxu0 0
      %1732 = vmatprep.subr.bf16.mxu0 0
      %1733 = vmatpush1.bf16.msra.mxu0 0
      %1734 = vmatprep.subr.bf16.mxu0 0
      %1735 = vmatpush1.bf16.msra.mxu0 0
      %1736 = vmatprep.subr.bf16.mxu0 0
      %1737 = vmatpush1.bf16.msra.mxu0 0
      %1738 = vmatprep.subr.bf16.mxu0 0
      %1739 = vmatpush1.bf16.msra.mxu0 0
      %1740 = vmatprep.subr.bf16.mxu0 0
      %1741 = vmatpush1.bf16.msra.mxu0 0
      %1742 = vmatprep.subr.bf16.mxu0 0
      %1743 = vmatpush1.bf16.msra.mxu0 0
      %1744 = vmatprep.subr.bf16.mxu0 0
      %1745 = vmatpush1.bf16.msra.mxu0 0
      %1746 = vmatprep.subr.bf16.mxu0 0
      %1747 = vmatpush1.bf16.msra.mxu0 0
      %1748 = vmatprep.subr.bf16.mxu0 0
      %1749 = vmatpush1.bf16.msra.mxu0 0
      %1750 = vmatprep.subr.bf16.mxu0 0
      %1751 = vmatpush1.bf16.msra.mxu0 0
      %1752 = vmatprep.subr.bf16.mxu0 0
      %1753 = vmatpush1.bf16.msra.mxu0 0
      %1754 = vmatprep.subr.bf16.mxu0 0
      %1755 = vmatpush1.bf16.msra.mxu0 0
      %1756 = vmatprep.mubr.bf16.mxu0 0
      %1757 = vmatmul.mubr.bf16.gmra.mrb[0].mxu0 %v1722
      %v1758 = vpop.f32.mrb[0].mxu0
      %v1759 = vadd.f32 0.0, %v1758
      %v1760 = vpop.f32.mrb[0].mxu0
      %v1761 = vpop.f32.mrb[0].mxu0
      %v1762 = vadd.f32 0.0, %v1761
      %v1763 = vpop.f32.mrb[0].mxu0
      %1764 = vdwg.mxu0
      %v1765 = vmul.f32 %v1759, 0.25
      %v1766 = vmul.f32 %v1762, 0.25
      %v1767 = vadd.f32 %v1765, %v787
      %v1768 = vadd.f32 %v1766, %v788
      %v1769 = vsel %vm951, %v1767, -inf
      %1770 = vmax.xlane.f32.xlu0 %v1769
      %v1771 = vpop.xlane.xlu0 %1770
      %v1772 = vsel %vm951, %v1768, -inf
      %1773 = vmax.xlane.f32.xlu0 %v1772
      %v1774 = vpop.xlane.xlu0 %1773
      %v1775 = vsub.f32 %v1767, %v1771
      %v1776 = vsub.f32 %v1768, %v1774
      %v1777 = vmul.f32 %v1775, 1.442695
      %v1778 = vpow.pop %v1777
      %v1779 = vmul.f32 %v1776, 1.442695
      %v1780 = vpow.pop %v1779
      %v1781 = vsel %vm951, %v1778, 0.0
      %1782 = vadd.xlane.f32.xlu0 %v1781
      %v1783 = vpop.xlane.xlu0 %1782
      %v1784 = vsel %vm951, %v1780, 0.0
      %1785 = vadd.xlane.f32.xlu0 %v1784
      %v1786 = vpop.xlane.xlu0 %1785
      %v1787 = vrcp.pop %v1783
      %v1788 = vrcp.pop %v1786
      %v1789 = vmul.f32 %v1778, %v1787
      %v1790 = vmul.f32 %v1780, %v1788
      %v1791 = vpack.c.bf16 %v1790, %v1789
      %1793 = vrot.lane.b32.xlu0 %v1719, 64
      %v1794 = vpop.permute.xlu0 %1793
      %v1797 = vsel %vm951, %v1791, 0
      %1799 = vmatprep.subr.bf16.mxu0 0
      %1800 = vmatpush1.bf16.msra.mxu0 %v1794
      %1801 = vmatprep.subr.bf16.mxu0 0
      %1802 = vmatpush1.bf16.msra.mxu0 0
      %1803 = vmatprep.subr.bf16.mxu0 0
      %1804 = vmatpush1.bf16.msra.mxu0 0
      %1805 = vmatprep.subr.bf16.mxu0 0
      %1806 = vmatpush1.bf16.msra.mxu0 0
      %1807 = vmatprep.subr.bf16.mxu0 0
      %1808 = vmatpush1.bf16.msra.mxu0 0
      %1809 = vmatprep.subr.bf16.mxu0 0
      %1810 = vmatpush1.bf16.msra.mxu0 0
      %1811 = vmatprep.subr.bf16.mxu0 0
      %1812 = vmatpush1.bf16.msra.mxu0 0
      %1813 = vmatprep.subr.bf16.mxu0 0
      %1814 = vmatpush1.bf16.msra.mxu0 0
      %1815 = vmatprep.subr.bf16.mxu0 0
      %1816 = vmatpush1.bf16.msra.mxu0 0
      %1817 = vmatprep.subr.bf16.mxu0 0
      %1818 = vmatpush1.bf16.msra.mxu0 0
      %1819 = vmatprep.subr.bf16.mxu0 0
      %1820 = vmatpush1.bf16.msra.mxu0 0
      %1821 = vmatprep.subr.bf16.mxu0 0
      %1822 = vmatpush1.bf16.msra.mxu0 0
      %1823 = vmatprep.subr.bf16.mxu0 0
      %1824 = vmatpush1.bf16.msra.mxu0 0
      %1825 = vmatprep.subr.bf16.mxu0 0
      %1826 = vmatpush1.bf16.msra.mxu0 0
      %1827 = vmatprep.subr.bf16.mxu0 0
      %1828 = vmatpush1.bf16.msra.mxu0 0
      %1829 = vmatprep.subr.bf16.mxu0 0
      %1830 = vmatpush1.bf16.msra.mxu0 0
      %1831 = vmatprep.mubr.bf16.mxu0 0
      %1832 = vmatmul.mubr.bf16.gmra.mrb[0].mxu0 %v1797
      %v1833 = vpop.f32.mrb[0].mxu0
      %v1834 = vadd.f32 0.0, %v1833
      %v1835 = vpop.f32.mrb[0].mxu0
      %v1836 = vpop.f32.mrb[0].mxu0
      %v1837 = vadd.f32 0.0, %v1836
      %v1838 = vpop.f32.mrb[0].mxu0
      %1839 = vdwg.mxu0
      %v1840 = vpack.c.bf16 %v1837, %v1834
      %1841 = vrot.lane.b32.xlu0 %v1668, 80
      %v1842 = vpop.permute.xlu0 %1841
      %1843 = vrot.lane.b32.xlu0 %v1671, 80
      %v1844 = vpop.permute.xlu0 %1843
      %1847 = vxpose.xlu0.b32.start [1/16] %v1842, 128
      %1848 = vxpose.xlu0.b32.cont [2/16] %v1844, 128
      %1849 = vxpose.xlu0.b32.cont [3/16] 0.0, 128
      %1850 = vxpose.xlu0.b32.cont [4/16] 0.0, 128
      %1851 = vxpose.xlu0.b32.cont [5/16] 0.0, 128
      %1852 = vxpose.xlu0.b32.cont [6/16] 0.0, 128
      %1853 = vxpose.xlu0.b32.cont [7/16] 0.0, 128
      %1854 = vxpose.xlu0.b32.cont [8/16] 0.0, 128
      %1855 = vxpose.xlu0.b32.cont [9/16] 0.0, 128
      %1856 = vxpose.xlu0.b32.cont [10/16] 0.0, 128
      %1857 = vxpose.xlu0.b32.cont [11/16] 0.0, 128
      %1858 = vxpose.xlu0.b32.cont [12/16] 0.0, 128
      %1859 = vxpose.xlu0.b32.cont [13/16] 0.0, 128
      %1860 = vxpose.xlu0.b32.cont [14/16] 0.0, 128
      %1861 = vxpose.xlu0.b32.cont [15/16] 0.0, 128
      %1862 = vxpose.xlu0.b32.end [16/16] 0.0, 128
      %v1863 = vpop.trf.xlu0
      %v1864 = vpop.trf.xlu0
      %v1865 = vpop.trf.xlu0
      %v1866 = vpop.trf.xlu0
      %v1867 = vpop.trf.xlu0
      %v1868 = vpop.trf.xlu0
      %v1869 = vpop.trf.xlu0
      %v1870 = vpop.trf.xlu0
      %v1871 = vpop.trf.xlu0
      %v1872 = vpop.trf.xlu0
      %v1873 = vpop.trf.xlu0
      %v1874 = vpop.trf.xlu0
      %v1875 = vpop.trf.xlu0
      %v1876 = vpop.trf.xlu0
      %v1877 = vpop.trf.xlu0
      %v1878 = vpop.trf.xlu0
      %v1879 = vpack.c.bf16 %v1864, %v1863
      %1880 = vrot.lane.b32.xlu0 %v1719, 112
      %v1881 = vpop.permute.xlu0 %1880
      %v1883 = vsel %vm951, %v1881, 0
      %1885 = vmatprep.subr.bf16.mxu0 0
      %1886 = vmatpush1.bf16.msra.mxu0 %v1879
      %1887 = vmatprep.subr.bf16.mxu0 0
      %1888 = vmatpush1.bf16.msra.mxu0 0
      %1889 = vmatprep.subr.bf16.mxu0 0
      %1890 = vmatpush1.bf16.msra.mxu0 0
      %1891 = vmatprep.subr.bf16.mxu0 0
      %1892 = vmatpush1.bf16.msra.mxu0 0
      %1893 = vmatprep.subr.bf16.mxu0 0
      %1894 = vmatpush1.bf16.msra.mxu0 0
      %1895 = vmatprep.subr.bf16.mxu0 0
      %1896 = vmatpush1.bf16.msra.mxu0 0
      %1897 = vmatprep.subr.bf16.mxu0 0
      %1898 = vmatpush1.bf16.msra.mxu0 0
      %1899 = vmatprep.subr.bf16.mxu0 0
      %1900 = vmatpush1.bf16.msra.mxu0 0
      %1901 = vmatprep.subr.bf16.mxu0 0
      %1902 = vmatpush1.bf16.msra.mxu0 0
      %1903 = vmatprep.subr.bf16.mxu0 0
      %1904 = vmatpush1.bf16.msra.mxu0 0
      %1905 = vmatprep.subr.bf16.mxu0 0
      %1906 = vmatpush1.bf16.msra.mxu0 0
      %1907 = vmatprep.subr.bf16.mxu0 0
      %1908 = vmatpush1.bf16.msra.mxu0 0
      %1909 = vmatprep.subr.bf16.mxu0 0
      %1910 = vmatpush1.bf16.msra.mxu0 0
      %1911 = vmatprep.subr.bf16.mxu0 0
      %1912 = vmatpush1.bf16.msra.mxu0 0
      %1913 = vmatprep.subr.bf16.mxu0 0
      %1914 = vmatpush1.bf16.msra.mxu0 0
      %1915 = vmatprep.subr.bf16.mxu0 0
      %1916 = vmatpush1.bf16.msra.mxu0 0
      %1917 = vmatprep.mubr.bf16.mxu0 0
      %1918 = vmatmul.mubr.bf16.gmra.mrb[0].mxu0 %v1883
      %v1919 = vpop.f32.mrb[0].mxu0
      %v1920 = vadd.f32 0.0, %v1919
      %v1921 = vpop.f32.mrb[0].mxu0
      %v1922 = vpop.f32.mrb[0].mxu0
      %v1923 = vadd.f32 0.0, %v1922
      %v1924 = vpop.f32.mrb[0].mxu0
      %1925 = vdwg.mxu0
      %v1926 = vmul.f32 %v1920, 0.25
      %v1927 = vmul.f32 %v1923, 0.25
      %v1928 = vadd.f32 %v1926, %v787
      %v1929 = vadd.f32 %v1927, %v788
      %v1930 = vsel %vm951, %v1928, -inf
      %1931 = vmax.xlane.f32.xlu0 %v1930
      %v1932 = vpop.xlane.xlu0 %1931
      %v1933 = vsel %vm951, %v1929, -inf
      %1934 = vmax.xlane.f32.xlu0 %v1933
      %v1935 = vpop.xlane.xlu0 %1934
      %v1936 = vsub.f32 %v1928, %v1932
      %v1937 = vsub.f32 %v1929, %v1935
      %v1938 = vmul.f32 %v1936, 1.442695
      %v1939 = vpow.pop %v1938
      %v1940 = vmul.f32 %v1937, 1.442695
      %v1941 = vpow.pop %v1940
      %v1942 = vsel %vm951, %v1939, 0.0
      %1943 = vadd.xlane.f32.xlu0 %v1942
      %v1944 = vpop.xlane.xlu0 %1943
      %v1945 = vsel %vm951, %v1941, 0.0
      %1946 = vadd.xlane.f32.xlu0 %v1945
      %v1947 = vpop.xlane.xlu0 %1946
      %v1948 = vrcp.pop %v1944
      %v1949 = vrcp.pop %v1947
      %v1950 = vmul.f32 %v1939, %v1948
      %v1951 = vmul.f32 %v1941, %v1949
      %v1952 = vpack.c.bf16 %v1951, %v1950
      %1953 = vrot.lane.b32.xlu0 %v1719, 48
      %v1954 = vpop.permute.xlu0 %1953
      %v1957 = vsel %vm951, %v1952, 0
      %1959 = vmatprep.subr.bf16.mxu0 0
      %1960 = vmatpush1.bf16.msra.mxu0 %v1954
      %1961 = vmatprep.subr.bf16.mxu0 0
      %1962 = vmatpush1.bf16.msra.mxu0 0
      %1963 = vmatprep.subr.bf16.mxu0 0
      %1964 = vmatpush1.bf16.msra.mxu0 0
      %1965 = vmatprep.subr.bf16.mxu0 0
      %1966 = vmatpush1.bf16.msra.mxu0 0
      %1967 = vmatprep.subr.bf16.mxu0 0
      %1968 = vmatpush1.bf16.msra.mxu0 0
      %1969 = vmatprep.subr.bf16.mxu0 0
      %1970 = vmatpush1.bf16.msra.mxu0 0
      %1971 = vmatprep.subr.bf16.mxu0 0
      %1972 = vmatpush1.bf16.msra.mxu0 0
      %1973 = vmatprep.subr.bf16.mxu0 0
      %1974 = vmatpush1.bf16.msra.mxu0 0
      %1975 = vmatprep.subr.bf16.mxu0 0
      %1976 = vmatpush1.bf16.msra.mxu0 0
      %1977 = vmatprep.subr.bf16.mxu0 0
      %1978 = vmatpush1.bf16.msra.mxu0 0
      %1979 = vmatprep.subr.bf16.mxu0 0
      %1980 = vmatpush1.bf16.msra.mxu0 0
      %1981 = vmatprep.subr.bf16.mxu0 0
      %1982 = vmatpush1.bf16.msra.mxu0 0
      %1983 = vmatprep.subr.bf16.mxu0 0
      %1984 = vmatpush1.bf16.msra.mxu0 0
      %1985 = vmatprep.subr.bf16.mxu0 0
      %1986 = vmatpush1.bf16.msra.mxu0 0
      %1987 = vmatprep.subr.bf16.mxu0 0
      %1988 = vmatpush1.bf16.msra.mxu0 0
      %1989 = vmatprep.subr.bf16.mxu0 0
      %1990 = vmatpush1.bf16.msra.mxu0 0
      %1991 = vmatprep.mubr.bf16.mxu0 0
      %1992 = vmatmul.mubr.bf16.gmra.mrb[0].mxu0 %v1957
      %v1993 = vpop.f32.mrb[0].mxu0
      %v1994 = vadd.f32 0.0, %v1993
      %v1995 = vpop.f32.mrb[0].mxu0
      %v1996 = vpop.f32.mrb[0].mxu0
      %v1997 = vadd.f32 0.0, %v1996
      %v1998 = vpop.f32.mrb[0].mxu0
      %1999 = vdwg.mxu0
      %v2000 = vpack.c.bf16 %v1997, %v1994
      %v2003 = vunpack.c.l.b16 %v1677
      %v2004 = vunpack.c.l.b16 %v1678
      %v2005 = vpack.c.b16 %v2004, %v2003
      %v2008 = vsel %vm951, %v2000, 0
      %2010 = vmatprep.subr.bf16.mxu0 0
      %2011 = vmatpush1.bf16.msra.mxu0 %v2005
      %2012 = vmatprep.subr.bf16.mxu0 0
      %2013 = vmatpush1.bf16.msra.mxu0 0
      %2014 = vmatprep.subr.bf16.mxu0 0
      %2015 = vmatpush1.bf16.msra.mxu0 0
      %2016 = vmatprep.subr.bf16.mxu0 0
      %2017 = vmatpush1.bf16.msra.mxu0 0
      %2018 = vmatprep.subr.bf16.mxu0 0
      %2019 = vmatpush1.bf16.msra.mxu0 0
      %2020 = vmatprep.subr.bf16.mxu0 0
      %2021 = vmatpush1.bf16.msra.mxu0 0
      %2022 = vmatprep.subr.bf16.mxu0 0
      %2023 = vmatpush1.bf16.msra.mxu0 0
      %2024 = vmatprep.subr.bf16.mxu0 0
      %2025 = vmatpush1.bf16.msra.mxu0 0
      %2026 = vmatprep.subr.bf16.mxu0 0
      %2027 = vmatpush1.bf16.msra.mxu0 0
      %2028 = vmatprep.subr.bf16.mxu0 0
      %2029 = vmatpush1.bf16.msra.mxu0 0
      %2030 = vmatprep.subr.bf16.mxu0 0
      %2031 = vmatpush1.bf16.msra.mxu0 0
      %2032 = vmatprep.subr.bf16.mxu0 0
      %2033 = vmatpush1.bf16.msra.mxu0 0
      %2034 = vmatprep.subr.bf16.mxu0 0
      %2035 = vmatpush1.bf16.msra.mxu0 0
      %2036 = vmatprep.subr.bf16.mxu0 0
      %2037 = vmatpush1.bf16.msra.mxu0 0
      %2038 = vmatprep.subr.bf16.mxu0 0
      %2039 = vmatpush1.bf16.msra.mxu0 0
      %2040 = vmatprep.subr.bf16.mxu0 0
      %2041 = vmatpush1.bf16.msra.mxu0 0
      %2042 = vmatprep.mubr.bf16.mxu0 0
      %2043 = vmatmul.mubr.bf16.gmra.mrb[0].mxu0 %v2008
      %v2044 = vpop.f32.mrb[0].mxu0
      %v2045 = vadd.f32 0.0, %v2044
      %v2046 = vpop.f32.mrb[0].mxu0
      %v2047 = vpop.f32.mrb[0].mxu0
      %v2048 = vadd.f32 0.0, %v2047
      %v2049 = vpop.f32.mrb[0].mxu0
      %2050 = vdwg.mxu0
      %v2053 = vunpack.c.l.b16 %v1675
      %v2054 = vunpack.c.l.b16 %v1676
      %v2055 = vpack.c.b16 %v2054, %v2053
      %v2058 = vsel %vm951, %v1840, 0
      %2060 = vmatprep.subr.bf16.mxu0 0
      %2061 = vmatpush1.bf16.msra.mxu0 %v2055
      %2062 = vmatprep.subr.bf16.mxu0 0
      %2063 = vmatpush1.bf16.msra.mxu0 0
      %2064 = vmatprep.subr.bf16.mxu0 0
      %2065 = vmatpush1.bf16.msra.mxu0 0
      %2066 = vmatprep.subr.bf16.mxu0 0
      %2067 = vmatpush1.bf16.msra.mxu0 0
      %2068 = vmatprep.subr.bf16.mxu0 0
      %2069 = vmatpush1.bf16.msra.mxu0 0
      %2070 = vmatprep.subr.bf16.mxu0 0
      %2071 = vmatpush1.bf16.msra.mxu0 0
      %2072 = vmatprep.subr.bf16.mxu0 0
      %2073 = vmatpush1.bf16.msra.mxu0 0
      %2074 = vmatprep.subr.bf16.mxu0 0
      %2075 = vmatpush1.bf16.msra.mxu0 0
      %2076 = vmatprep.subr.bf16.mxu0 0
      %2077 = vmatpush1.bf16.msra.mxu0 0
      %2078 = vmatprep.subr.bf16.mxu0 0
      %2079 = vmatpush1.bf16.msra.mxu0 0
      %2080 = vmatprep.subr.bf16.mxu0 0
      %2081 = vmatpush1.bf16.msra.mxu0 0
      %2082 = vmatprep.subr.bf16.mxu0 0
      %2083 = vmatpush1.bf16.msra.mxu0 0
      %2084 = vmatprep.subr.bf16.mxu0 0
      %2085 = vmatpush1.bf16.msra.mxu0 0
      %2086 = vmatprep.subr.bf16.mxu0 0
      %2087 = vmatpush1.bf16.msra.mxu0 0
      %2088 = vmatprep.subr.bf16.mxu0 0
      %2089 = vmatpush1.bf16.msra.mxu0 0
      %2090 = vmatprep.subr.bf16.mxu0 0
      %2091 = vmatpush1.bf16.msra.mxu0 0
      %2092 = vmatprep.mubr.bf16.mxu0 0
      %2093 = vmatmul.mubr.bf16.gmra.mrb[0].mxu0 %v2058
      %v2094 = vpop.f32.mrb[0].mxu0
      %v2095 = vadd.f32 %v2045, %v2094
      %v2096 = vpop.f32.mrb[0].mxu0
      %v2097 = vpop.f32.mrb[0].mxu0
      %v2098 = vadd.f32 %v2048, %v2097
      %v2099 = vpop.f32.mrb[0].mxu0
      %2100 = vdwg.mxu0
      %s2101 = scalar_lea.vmem %s746, 1
      %v2102 = vld [vmem:[%s2101] sm:$0x1]
      %v2104 = vlaneseq
      %v2105 = vshrl.u32 %v2104, 7
      %v2106 = vsub.s32 0, %v2105
      %v2107 = vrot.slane %v2102, %v2106
      %v2109 = vadd.f32 %v2095, %v2107
      %v2110 = vadd.f32 %v2098, %v2107
      %v2111 = vadd.f32 %v2109, %v1602
      %v2112 = vadd.f32 %v2110, %v1603
      %s2113 = scalar_lea.vmem %s768, 1
      %v2114 = vld [vmem:[%s2113] sm:$0x1]
      %s2115 = scalar_lea.vmem %s772, 1
      %v2116 = vld [vmem:[%s2115] sm:$0x1]
      %v2117 = vsel %vm793, %v2111, 0.0
      %2118 = vadd.xlane.f32.xlu0 %v2117
      %v2119 = vpop.xlane.xlu0 %2118
      %v2120 = vsel %vm793, %v2112, 0.0
      %2121 = vadd.xlane.f32.xlu0 %v2120
      %v2122 = vpop.xlane.xlu0 %2121
      %v2123 = vmul.f32 %v2119, %v800
      %v2124 = vmul.f32 %v2122, %v800
      %v2125 = vsub.f32 %v2111, %v2123
      %v2126 = vsub.f32 %v2112, %v2124
      %v2127 = vmul.f32 %v2125, %v2125
      %v2128 = vmul.f32 %v2126, %v2126
      %v2129 = vsel %vm793, %v2127, 0.0
      %2130 = vadd.xlane.f32.xlu0 %v2129
      %v2131 = vpop.xlane.xlu0 %2130
      %v2132 = vsel %vm793, %v2128, 0.0
      %2133 = vadd.xlane.f32.xlu0 %v2132
      %v2134 = vpop.xlane.xlu0 %2133
      %v2135 = vmul.f32 %v2131, %v800
      %v2136 = vmul.f32 %v2134, %v800
      %v2137 = vadd.f32 %v2135, 1e-05
      %v2138 = vadd.f32 %v2136, 1e-05
      %v2139 = vrsqrt.pop %v2137
      %v2140 = vrsqrt.pop %v2138
      %v2141 = vmul.f32 %v2125, %v2139
      %v2142 = vmul.f32 %v2126, %v2140
      %v2144 = vlaneseq
      %v2145 = vshrl.u32 %v2144, 7
      %v2146 = vsub.s32 0, %v2145
      %v2147 = vrot.slane %v2114, %v2146
      %v2149 = vmul.f32 %v2141, %v2147
      %v2150 = vmul.f32 %v2142, %v2147
      %v2152 = vlaneseq
      %v2153 = vshrl.u32 %v2152, 7
      %v2154 = vsub.s32 0, %v2153
      %v2155 = vrot.slane %v2116, %v2154
      %v2157 = vadd.f32 %v2149, %v2155
      %v2158 = vadd.f32 %v2150, %v2155
      %s2159 = scalar_lea.vmem %s751, 16
      %v2160 = vld [vmem:[%s2159] sm:$0xf]
      %v2161 = vld [vmem:[%s2159 + $0x4] sm:$0xf]
      %v2162 = vld [vmem:[%s2159 + $0x8] sm:$0xf]
      %v2163 = vld [vmem:[%s2159 + $0xc] sm:$0xf]
      %v2164 = vpack.c.bf16 %v2158, %v2157
      %s2165 = scalar_lea.vmem %s755, 1
      %v2166 = vld [vmem:[%s2165] sm:$0x1]
      %v2168 = vlaneseq
      %v2169 = vshrl.u32 %v2168, 7
      %v2170 = vsub.s32 0, %v2169
      %v2171 = vrot.slane %v2166, %v2170
      %v2177 = vunpack.c.l.b16 %v2160
      %v2178 = vunpack.c.l.b16 %v2161
      %v2179 = vunpack.c.l.b16 %v2162
      %v2180 = vunpack.c.l.b16 %v2163
      %v2181 = vpack.c.b16 %v2178, %v2177
      %v2182 = vpack.c.b16 %v2180, %v2179
      %v2186 = vsel %vm793, %v2164, 0
      %2188 = vmatprep.subr.bf16.mxu0 0
      %2189 = vmatpush1.bf16.msra.mxu0 %v2181
      %2190 = vmatprep.subr.bf16.mxu0 0
      %2191 = vmatpush1.bf16.msra.mxu0 %v2182
      %2192 = vmatprep.subr.bf16.mxu0 0
      %2193 = vmatpush1.bf16.msra.mxu0 0
      %2194 = vmatprep.subr.bf16.mxu0 0
      %2195 = vmatpush1.bf16.msra.mxu0 0
      %2196 = vmatprep.subr.bf16.mxu0 0
      %2197 = vmatpush1.bf16.msra.mxu0 0
      %2198 = vmatprep.subr.bf16.mxu0 0
      %2199 = vmatpush1.bf16.msra.mxu0 0
      %2200 = vmatprep.subr.bf16.mxu0 0
      %2201 = vmatpush1.bf16.msra.mxu0 0
      %2202 = vmatprep.subr.bf16.mxu0 0
      %2203 = vmatpush1.bf16.msra.mxu0 0
      %2204 = vmatprep.subr.bf16.mxu0 0
      %2205 = vmatpush1.bf16.msra.mxu0 0
      %2206 = vmatprep.subr.bf16.mxu0 0
      %2207 = vmatpush1.bf16.msra.mxu0 0
      %2208 = vmatprep.subr.bf16.mxu0 0
      %2209 = vmatpush1.bf16.msra.mxu0 0
      %2210 = vmatprep.subr.bf16.mxu0 0
      %2211 = vmatpush1.bf16.msra.mxu0 0
      %2212 = vmatprep.subr.bf16.mxu0 0
      %2213 = vmatpush1.bf16.msra.mxu0 0
      %2214 = vmatprep.subr.bf16.mxu0 0
      %2215 = vmatpush1.bf16.msra.mxu0 0
      %2216 = vmatprep.subr.bf16.mxu0 0
      %2217 = vmatpush1.bf16.msra.mxu0 0
      %2218 = vmatprep.subr.bf16.mxu0 0
      %2219 = vmatpush1.bf16.msra.mxu0 0
      %2220 = vmatprep.mubr.bf16.mxu0 0
      %2221 = vmatmul.mubr.bf16.gmra.mrb[0].mxu0 %v2186
      %v2222 = vpop.f32.mrb[0].mxu0
      %v2223 = vadd.f32 %v2171, %v2222
      %v2224 = vpop.f32.mrb[0].mxu0
      %v2225 = vpop.f32.mrb[0].mxu0
      %v2226 = vadd.f32 %v2171, %v2225
      %v2227 = vpop.f32.mrb[0].mxu0
      %2228 = vdwg.mxu0
      %v2229 = vmul.f32 %v2223, %v2223
      %v2230 = vmul.f32 %v2226, %v2226
      %v2231 = vmul.f32 %v2223, %v2229
      %v2232 = vmul.f32 %v2226, %v2230
      %v2233 = vmul.f32 %v2231, 0.044715
      %v2234 = vmul.f32 %v2232, 0.044715
      %v2235 = vadd.f32 %v2223, %v2233
      %v2236 = vadd.f32 %v2226, %v2234
      %v2237 = vmul.f32 %v2235, 0.7978846
      %v2238 = vmul.f32 %v2236, 0.7978846
      %v2239 = vtanh.pop %v2237
      %v2240 = vtanh.pop %v2238
      %v2241 = vadd.f32 %v2239, 1.0
      %v2242 = vadd.f32 %v2240, 1.0
      %v2243 = vmul.f32 %v2241, 0.5
      %v2244 = vmul.f32 %v2242, 0.5
      %v2245 = vmul.f32 %v2223, %v2243
      %v2246 = vmul.f32 %v2226, %v2244
      %s2247 = scalar_lea.vmem %s760, 32
      %v2248 = vld [vmem:[%s2247] sm:$0xf]
      %v2249 = vld [vmem:[%s2247 + $0x4] sm:$0xf]
      %v2250 = vld [vmem:[%s2247 + $0x8] sm:$0xf]
      %v2251 = vld [vmem:[%s2247 + $0xc] sm:$0xf]
      %v2252 = vld [vmem:[%s2247 + $0x10] sm:$0xf]
      %v2253 = vld [vmem:[%s2247 + $0x14] sm:$0xf]
      %v2254 = vld [vmem:[%s2247 + $0x18] sm:$0xf]
      %v2255 = vld [vmem:[%s2247 + $0x1c] sm:$0xf]
      %v2256 = vpack.c.bf16 %v2246, %v2245
      %s2257 = scalar_lea.vmem %s764, 1
      %v2258 = vld [vmem:[%s2257] sm:$0x1]
      %v2260 = vlaneseq
      %v2261 = vshrl.u32 %v2260, 7
      %v2262 = vsub.s32 0, %v2261
      %v2263 = vrot.slane %v2258, %v2262
      %v2273 = vunpack.c.l.b16 %v2248
      %v2274 = vunpack.c.l.b16 %v2249
      %v2275 = vunpack.c.l.b16 %v2250
      %v2276 = vunpack.c.l.b16 %v2251
      %v2277 = vunpack.c.l.b16 %v2252
      %v2278 = vunpack.c.l.b16 %v2253
      %v2279 = vunpack.c.l.b16 %v2254
      %v2280 = vunpack.c.l.b16 %v2255
      %v2281 = vpack.c.b16 %v2274, %v2273
      %v2282 = vpack.c.b16 %v2276, %v2275
      %v2283 = vpack.c.b16 %v2278, %v2277
      %v2284 = vpack.c.b16 %v2280, %v2279
      %v2290 = vsel %vm1513, %v2256, 0
      %2292 = vmatprep.subr.bf16.mxu0 0
      %2293 = vmatpush1.bf16.msra.mxu0 %v2281
      %2294 = vmatprep.subr.bf16.mxu0 0
      %2295 = vmatpush1.bf16.msra.mxu0 %v2282
      %2296 = vmatprep.subr.bf16.mxu0 0
      %2297 = vmatpush1.bf16.msra.mxu0 %v2283
      %2298 = vmatprep.subr.bf16.mxu0 0
      %2299 = vmatpush1.bf16.msra.mxu0 %v2284
      %2300 = vmatprep.subr.bf16.mxu0 0
      %2301 = vmatpush1.bf16.msra.mxu0 0
      %2302 = vmatprep.subr.bf16.mxu0 0
      %2303 = vmatpush1.bf16.msra.mxu0 0
      %2304 = vmatprep.subr.bf16.mxu0 0
      %2305 = vmatpush1.bf16.msra.mxu0 0
      %2306 = vmatprep.subr.bf16.mxu0 0
      %2307 = vmatpush1.bf16.msra.mxu0 0
      %2308 = vmatprep.subr.bf16.mxu0 0
      %2309 = vmatpush1.bf16.msra.mxu0 0
      %2310 = vmatprep.subr.bf16.mxu0 0
      %2311 = vmatpush1.bf16.msra.mxu0 0
      %2312 = vmatprep.subr.bf16.mxu0 0
      %2313 = vmatpush1.bf16.msra.mxu0 0
      %2314 = vmatprep.subr.bf16.mxu0 0
      %2315 = vmatpush1.bf16.msra.mxu0 0
      %2316 = vmatprep.subr.bf16.mxu0 0
      %2317 = vmatpush1.bf16.msra.mxu0 0
      %2318 = vmatprep.subr.bf16.mxu0 0
      %2319 = vmatpush1.bf16.msra.mxu0 0
      %2320 = vmatprep.subr.bf16.mxu0 0
      %2321 = vmatpush1.bf16.msra.mxu0 0
      %2322 = vmatprep.subr.bf16.mxu0 0
      %2323 = vmatpush1.bf16.msra.mxu0 0
      %2324 = vmatprep.mubr.bf16.mxu0 0
      %2325 = vmatmul.mubr.bf16.gmra.mrb[0].mxu0 %v2290
      %v2326 = vpop.f32.mrb[0].mxu0
      %v2327 = vadd.f32 %v2263, %v2326
      %v2328 = vpop.f32.mrb[0].mxu0
      %v2329 = vpop.f32.mrb[0].mxu0
      %v2330 = vadd.f32 %v2263, %v2329
      %v2331 = vpop.f32.mrb[0].mxu0
      %2332 = vdwg.mxu0
      %v2333 = vadd.f32 %v2327, %v2157
      %v2334 = vadd.f32 %v2330, %v2158
      %s2335 = scalar_lea.vmem %s776, 1
      %v2336 = vld [vmem:[%s2335] sm:$0x1]
      %s2337 = scalar_lea.vmem %s780, 1
      %v2338 = vld [vmem:[%s2337] sm:$0x1]
      %v2339 = vsel %vm793, %v2333, 0.0
      %2340 = vadd.xlane.f32.xlu0 %v2339
      %v2341 = vpop.xlane.xlu0 %2340
      %v2342 = vsel %vm793, %v2334, 0.0
      %2343 = vadd.xlane.f32.xlu0 %v2342
      %v2344 = vpop.xlane.xlu0 %2343
      %v2345 = vmul.f32 %v2341, %v800
      %v2346 = vmul.f32 %v2344, %v800
      %v2347 = vsub.f32 %v2333, %v2345
      %v2348 = vsub.f32 %v2334, %v2346
      %v2349 = vmul.f32 %v2347, %v2347
      %v2350 = vmul.f32 %v2348, %v2348
      %v2351 = vsel %vm793, %v2349, 0.0
      %2352 = vadd.xlane.f32.xlu0 %v2351
      %v2353 = vpop.xlane.xlu0 %2352
      %v2354 = vsel %vm793, %v2350, 0.0
      %2355 = vadd.xlane.f32.xlu0 %v2354
      %v2356 = vpop.xlane.xlu0 %2355
      %v2357 = vmul.f32 %v2353, %v800
      %v2358 = vmul.f32 %v2356, %v800
      %v2359 = vadd.f32 %v2357, 1e-05
      %v2360 = vadd.f32 %v2358, 1e-05
      %v2361 = vrsqrt.pop %v2359
      %v2362 = vrsqrt.pop %v2360
      %v2363 = vmul.f32 %v2347, %v2361
      %v2364 = vmul.f32 %v2348, %v2362
      %v2366 = vlaneseq
      %v2367 = vshrl.u32 %v2366, 7
      %v2368 = vsub.s32 0, %v2367
      %v2369 = vrot.slane %v2336, %v2368
      %v2371 = vmul.f32 %v2363, %v2369
      %v2372 = vmul.f32 %v2364, %v2369
      %v2374 = vlaneseq
      %v2375 = vshrl.u32 %v2374, 7
      %v2376 = vsub.s32 0, %v2375
      %v2377 = vrot.slane %v2338, %v2376
      %v2379 = vadd.f32 %v2371, %v2377
      %v2380 = vadd.f32 %v2372, %v2377
      %2381 = vst.msk [vmem:[%s785] sm:$0xff] %vm793, %v2379
      %2382 = vst.msk [vmem:[%s785 + $0x8] sm:$0xff] %vm793, %v2380
      %p2383 = scmp.lt.s32.totalorder %s27, 1
      %s2384 = scalar_select %p2383, %s27, 1
      %s2385 = smul.addr %s2384, 2
      %s2386 = smul.addr %s2385, 8
      %s2387 = scalar_lea.vmem %s16, %s2386
      // Predicated region
      $region85: #{_encode_stacked.1} parent=83 // pred_check
        %p2388 = pneg %p461
      $region86: #{_encode_stacked.1} parent=83 // pred_check_branch
        %2390 = sbr.rel (%p2388) target = $region88
      $region87: #{_encode_stacked.1} parent=83 // pred_region
        _
      $region88: #{_encode_stacked.1} parent=83 // pred_fallthru
        _
    $region84: #{_encode_stacked.1} parent=5 // pred_fallthru
      _
    %p2391 = scmp.le.s32.totalorder 2, %s22
    // Predicated region
    $region89: #{_encode_stacked.1} parent=5 // pred_check
      %p2392 = pneg %p2391
    $region90: #{_encode_stacked.1} parent=5 // pred_check_branch
      %2394 = sbr.rel (%p2392) target = $region92
    $region91: #{_encode_stacked.1} parent=5 // pred_region
      %s2395 = ssub.s32 %s22, 2
      // Predicated region
      $region93: #{_encode_stacked.1} parent=91 // pred_check
        %p2396 = pneg %p467
      $region94: #{_encode_stacked.1} parent=91 // pred_check_branch
        %2398 = sbr.rel (%p2396) target = $region96
      $region95: #{_encode_stacked.1} parent=91 // pred_region
        %p2399 = scmp.lt.s32.totalorder %s28, 1
        %s2400 = scalar_select %p2399, %s28, 1
        %s2401 = smul.addr %s2400, 2
        %s2402 = smul.addr %s2401, 8
        %s2403 = scalar_lea.vmem %s16, %s2402
      $region96: #{_encode_stacked.1} parent=91 // pred_fallthru
        _
    $region92: #{_encode_stacked.1} parent=5 // pred_fallthru
      _
  $region6: #{_encode_stacked.1} parent=0 // loop_footer
    %s26 = sadd.s32 1, %s22
  $region7: #{_encode_stacked.1} parent=0 // loop_footer_branch
    %21 = sbr.rel target = $region3
  $region8: #{_encode_stacked.1} parent=0 // loop_exit
    _

</llo_original>
